<compile_context>
chip_gen: v7x
topology: tpu7x:2x2x1
jax: 0.10.0
libtpu: 0.0.40
codegen_flags: <defaults>
</compile_context>

<pallas_src>
import math
import numpy as np
import jax
import jax.numpy as jnp
from jax.experimental import pallas as pl
from jax.experimental.pallas import tpu as pltpu

# N_layers is an undefined module-level global in the reference; fixed here.
N_LAYERS = 2
N_QUBITS = 4
DIM = 1 << N_QUBITS  # 16
PAIRS = [(0, 1), (1, 2), (2, 3), (3, 0)]

TB_MAX = 2048  # max lanes per grid step (multiple of 128); a few hundred KiB of VMEM

_HI = jax.lax.Precision.HIGHEST


# ----------------------------- Pallas kernel ------------------------------- #
def _nqe_kernel(x_ref, w1_ref, b1_ref, w2_ref, b2_ref, w3_ref, b3_ref,
                w3p_ref, b3p_ref, h16_ref, st_ref, zzt_ref, out_ref):
    # x_ref: (4, 2*TB) -- feature(sublane), batch(lane); lanes pre-interleaved
    # as [branch1 | branch2] on the host, so no in-kernel concat is needed.
    a_in = x_ref[...]
    pi = jnp.float32(math.pi)

    # ---- shared MLP on (feature-sublane, batch-lane) layout ----
    h = jnp.dot(w1_ref[...], a_in, preferred_element_type=jnp.float32, precision=_HI) + b1_ref[...]
    h = jnp.maximum(h, 0.0)
    h = jnp.dot(w2_ref[...], h, preferred_element_type=jnp.float32, precision=_HI) + b2_ref[...]
    h = jnp.maximum(h, 0.0)
    y = jnp.dot(w3_ref[...], h, preferred_element_type=jnp.float32, precision=_HI) + b3_ref[...]      # (4, L)
    # Cyclic successor y[(i+1)%4] via a host-permuted copy of the last layer
    # (extra tiny K=8 dot on the idle MXU instead of a sublane roll/concat).
    yn = jnp.dot(w3p_ref[...], h, preferred_element_type=jnp.float32, precision=_HI) + b3p_ref[...]   # (4, L)

    # ---- diagonal phases Phi(y) for the ZZ feature map ----
    c = (pi - y) * (pi - yn)                                                    # (4, L)
    phi = (jnp.dot(st_ref[...], y, preferred_element_type=jnp.float32, precision=_HI)
           + jnp.dot(zzt_ref[...], c, preferred_element_type=jnp.float32, precision=_HI))  # (16, L)
    cr = jnp.cos(phi)
    ci = jnp.sin(phi)

    # ---- layer 1 peeled: H^{x4}|0000> has all amplitudes = 1/4 (real) ----
    re = 0.25 * cr
    im = 0.25 * ci

    # ---- remaining layers: H^{x4} (two dots, no concat/slice), then phase rotation ----
    h16 = h16_ref[...]
    for _ in range(N_LAYERS - 1):
        reh = jnp.dot(h16, re, preferred_element_type=jnp.float32, precision=_HI)
        imh = jnp.dot(h16, im, preferred_element_type=jnp.float32, precision=_HI)
        re = reh * cr - imh * ci
        im = reh * ci + imh * cr

    # ---- fidelity |<psi2|psi1>|^2, reduction over the sublane (statevector) axis ----
    tb = out_ref.shape[-1]
    re1, re2 = re[:, :tb], re[:, tb:]        # lane slices at a 128-aligned boundary
    im1, im2 = im[:, :tb], im[:, tb:]
    real = jnp.sum(re2 * re1 + im2 * im1, axis=0, keepdims=True)   # (1, TB)
    imag = jnp.sum(re2 * im1 - im2 * re1, axis=0, keepdims=True)   # (1, TB)
    out_ref[...] = real * real + imag * imag                       # lane-dense store


# ------------------------------ host wrapper -------------------------------- #
def _choose_tile(B):
    """Pick lanes-per-step (multiple of 128, <= TB_MAX); keep >=2 grid steps
    when the batch allows so v7x dual TensorCores both get work."""
    b128 = ((B + 127) // 128) * 128
    if b128 <= 128:
        tb = 128
    else:
        tb = min(TB_MAX, 128 * (b128 // 256))
        tb = max(tb, 128)
    bp = ((b128 + tb - 1) // tb) * tb
    return tb, bp


def nqe_forward(x1, x2, params, consts):
    B = x1.shape[0]
    tb, Bp = _choose_tile(B)
    nsteps = Bp // tb

    def prep(x):
        x = jnp.asarray(x, jnp.float32)
        x = jnp.pad(x, ((0, Bp - B), (0, 0)))            # (Bp, 4)
        x = x.reshape(nsteps, tb, 4)
        return jnp.transpose(x, (0, 2, 1))               # (nsteps, 4, tb): batch on lanes

    # Pre-interleave the two branches once on the host (single XLA relayout),
    # so each grid block is already the (4, 2*tb) slab the kernel wants.
    x_in = jnp.concatenate([prep(x1), prep(x2)], axis=-1)  # (nsteps, 4, 2*tb)

    W1, b1, W2, b2, W3, b3 = params
    w1t, b1c = W1.T, b1.reshape(8, 1)
    w2t, b2c = W2.T, b2.reshape(8, 1)
    w3t, b3c = W3.T, b3.reshape(4, 1)
    # Fold the cyclic-successor permutation (pairs (k, k+1 mod 4)) into the last
    # linear layer on the host: yn = (P @ W3^T) @ h + P @ b3.
    P = np.zeros((4, 4), np.float32)
    for i in range(4):
        P[i, (i + 1) % 4] = 1.0
    P = jnp.asarray(P)
    w3tp, b3cp = P @ w3t, P @ b3c
    h16, st, zzt = consts

    def full(shape):
        n = len(shape)
        return pl.BlockSpec(shape, lambda i, _n=n: (0,) * _n)

    out = pl.pallas_call(
        _nqe_kernel,
        out_shape=jax.ShapeDtypeStruct((1, Bp), jnp.float32),
        grid=(nsteps,),
        in_specs=[
            # batch-step dim squeezed out; kernel sees (4, 2*tb)
            pl.BlockSpec((None, 4, 2 * tb), lambda i: (i, 0, 0)),
            full((8, 4)), full((8, 1)),                   # constant index_maps: weights
            full((8, 8)), full((8, 1)),                   # stay VMEM-resident across steps
            full((4, 8)), full((4, 1)),
            full((4, 8)), full((4, 1)),
            full((16, 16)), full((16, 4)), full((16, 4)),
        ],
        out_specs=pl.BlockSpec((1, tb), lambda i: (0, i)),
        compiler_params=pltpu.CompilerParams(
            dimension_semantics=("parallel",)),
    )(x_in, w1t, b1c, w2t, b2c, w3t, b3c, w3tp, b3cp, h16, st, zzt)
    return out[0, :B]


# -------------------------- params / constants ------------------------------ #
def init_params(key):
    ks = jax.random.split(key, 6)

    def lin(kw, kb, fan_in, fan_out):
        bound = 1.0 / math.sqrt(fan_in)
        W = jax.random.uniform(kw, (fan_in, fan_out), jnp.float32, -bound, bound)
        b = jax.random.uniform(kb, (1, fan_out), jnp.float32, -bound, bound)
        return W, b

    W1, b1 = lin(ks[0], ks[1], 4, 8)
    W2, b2 = lin(ks[2], ks[3], 8, 8)
    W3, b3 = lin(ks[4], ks[5], 8, 4)
    return (W1, b1, W2, b2, W3, b3)


def make_consts():
    H1 = np.array([[1.0, 1.0], [1.0, -1.0]]) / math.sqrt(2.0)
    H16 = H1
    for _ in range(N_QUBITS - 1):
        H16 = np.kron(H16, H1)                               # (16,16), symmetric
    idx = np.arange(DIM)
    bits = np.stack([(idx >> (N_QUBITS - 1 - j)) & 1 for j in range(N_QUBITS)], 0)
    S = (1.0 - 2.0 * bits).astype(np.float64)                # (4,16)  +1 for |0>
    ZZ = np.stack([S[k] * S[l] for (k, l) in PAIRS], 0)      # (4,16)
    return (jnp.asarray(H16, jnp.float32),
            jnp.asarray(S.T, jnp.float32),                   # (16,4)
            jnp.asarray(ZZ.T, jnp.float32))                  # (16,4)


# ----------------------- gate-by-gate numpy reference ----------------------- #
def _ref_forward(x1, x2, params):
    W1, b1, W2, b2, W3, b3 = [np.asarray(p, np.float64) for p in params]

    def mlp(x):
        h = np.maximum(x @ W1 + b1, 0.0)
        h = np.maximum(h @ W2 + b2, 0.0)
        return h @ W3 + b3

    y1 = mlp(np.asarray(x1, np.float64))
    y2 = mlp(np.asarray(x2, np.float64))

    H = np.array([[1, 1], [1, -1]], np.complex128) / math.sqrt(2.0)

    def rz(theta):
        return np.diag([np.exp(-0.5j * theta), np.exp(0.5j * theta)])

    def apply_1q(st, G, w):
        st = st.reshape((2,) * N_QUBITS)
        st = np.tensordot(G, st, axes=[[1], [w]])
        return np.moveaxis(st, 0, w).reshape(DIM)

    def apply_cnot(st, c, t):
        out = st.copy()
        for i in range(DIM):
            b = [(i >> (N_QUBITS - 1 - j)) & 1 for j in range(N_QUBITS)]
            if b[c] == 1:
                bj = b.copy()
                bj[t] ^= 1
                j = sum(v << (N_QUBITS - 1 - w) for w, v in enumerate(bj))
                out[i] = st[j]
        return out

    def build_ops(a):
        ops = []
        for _ in range(N_LAYERS):
            for j in range(N_QUBITS):
                ops.append(("H", j, None))
                ops.append(("RZ", j, -2.0 * a[j]))
            for (k, l) in PAIRS:
                ops.append(("CNOT", (k, l), None))
                ops.append(("RZ", l, -2.0 * (np.pi - a[k]) * (np.pi - a[l])))
                ops.append(("CNOT", (k, l), None))
        return ops

    def run(st, a, adjoint):
        ops = build_ops(a)
        if adjoint:
            ops = ops[::-1]
        for name, w, th in ops:
            if name == "H":
                st = apply_1q(st, H, w)
            elif name == "RZ":
                st = apply_1q(st, rz(-th if adjoint else th), w)
            else:
                st = apply_cnot(st, w[0], w[1])
        return st

    out = np.zeros(y1.shape[0])
    for b in range(y1.shape[0]):
        st = np.zeros(DIM, np.complex128)
        st[0] = 1.0
        st = run(st, y1[b], adjoint=False)
        st = run(st, y2[b], adjoint=True)
        out[b] = np.abs(st[0]) ** 2
    return out


# ----------------------------------- main ----------------------------------- #
if __name__ == "__main__":
    key = jax.random.PRNGKey(0)
    k1, k2, kp = jax.random.split(key, 3)
    B = 8
    x1 = jax.random.normal(k1, (B, 4), jnp.float32)
    x2 = jax.random.normal(k2, (B, 4), jnp.float32)

    params = init_params(kp)
    consts = make_consts()

    out = jax.jit(lambda a, b: nqe_forward(a, b, params, consts))(x1, x2)
    out = jax.block_until_ready(out)

    ref = _ref_forward(np.asarray(x1), np.asarray(x2), params)
    np.testing.assert_allclose(np.asarray(out), ref, rtol=1e-3, atol=1e-3)

    print("KERNEL_OK")

# TODO(synk): the tick='rl' action-sequence circuit branch of NQEModel is not implemented;
# only the tick='zz' ZZ-feature-map path (the one exercised by this forward) is translated.
</pallas_src>

<mosaic_0001>
module attributes {stable_mosaic.version = 11 : i64} {
  func.func @_nqe_kernel(%arg0: i32, %arg1: memref<1x4x256xf32, #tpu.memory_space<vmem>>, %arg2: memref<8x4xf32, #tpu.memory_space<vmem>>, %arg3: memref<8x1xf32, #tpu.memory_space<vmem>>, %arg4: memref<8x8xf32, #tpu.memory_space<vmem>>, %arg5: memref<8x1xf32, #tpu.memory_space<vmem>>, %arg6: memref<4x8xf32, #tpu.memory_space<vmem>>, %arg7: memref<4x1xf32, #tpu.memory_space<vmem>>, %arg8: memref<4x8xf32, #tpu.memory_space<vmem>>, %arg9: memref<4x1xf32, #tpu.memory_space<vmem>>, %arg10: memref<16x16xf32, #tpu.memory_space<vmem>>, %arg11: memref<16x4xf32, #tpu.memory_space<vmem>>, %arg12: memref<16x4xf32, #tpu.memory_space<vmem>>, %arg13: memref<1x128xf32, #tpu.memory_space<vmem>>) attributes {dimension_semantics = [#tpu.dimension_semantics<parallel>], iteration_bounds = array<i64: 1>, scalar_prefetch = 0 : i64, scratch_operands = 0 : i64, tpu.core_type = #tpu.core_type<tc>, window_params = [{transform_indices = @transform_0, window_bounds = array<i64: 1, 4, 256>}, {pipeline_mode = #tpu.pipeline_mode<synchronous>, transform_indices = @transform_1, window_bounds = array<i64: 8, 4>}, {pipeline_mode = #tpu.pipeline_mode<synchronous>, transform_indices = @transform_2, window_bounds = array<i64: 8, 1>}, {pipeline_mode = #tpu.pipeline_mode<synchronous>, transform_indices = @transform_3, window_bounds = array<i64: 8, 8>}, {pipeline_mode = #tpu.pipeline_mode<synchronous>, transform_indices = @transform_4, window_bounds = array<i64: 8, 1>}, {pipeline_mode = #tpu.pipeline_mode<synchronous>, transform_indices = @transform_5, window_bounds = array<i64: 4, 8>}, {pipeline_mode = #tpu.pipeline_mode<synchronous>, transform_indices = @transform_6, window_bounds = array<i64: 4, 1>}, {pipeline_mode = #tpu.pipeline_mode<synchronous>, transform_indices = @transform_7, window_bounds = array<i64: 4, 8>}, {pipeline_mode = #tpu.pipeline_mode<synchronous>, transform_indices = @transform_8, window_bounds = array<i64: 4, 1>}, {pipeline_mode = #tpu.pipeline_mode<synchronous>, transform_indices = @transform_9, window_bounds = array<i64: 16, 16>}, {pipeline_mode = #tpu.pipeline_mode<synchronous>, transform_indices = @transform_10, window_bounds = array<i64: 16, 4>}, {pipeline_mode = #tpu.pipeline_mode<synchronous>, transform_indices = @transform_11, window_bounds = array<i64: 16, 4>}, {transform_indices = @transform_12, window_bounds = array<i64: 1, 128>}]} {
    %c0 = arith.constant 0 : index
    %c0_0 = arith.constant 0 : index
    %c0_1 = arith.constant 0 : index
    %0 = vector.load %arg1[%c0, %c0_0, %c0_1] : memref<1x4x256xf32, #tpu.memory_space<vmem>>, vector<1x4x256xf32>
    %1 = vector.shape_cast %0 : vector<1x4x256xf32> to vector<4x256xf32>
    %c0_2 = arith.constant 0 : index
    %c0_3 = arith.constant 0 : index
    %2 = vector.load %arg2[%c0_2, %c0_3] : memref<8x4xf32, #tpu.memory_space<vmem>>, vector<8x4xf32>
    %cst = arith.constant dense<0.000000e+00> : vector<8x256xf32>
    %3 = tpu.matmul %2, %1, %cst {dimension_numbers = #tpu.dot_dimension_numbers<[1], [0], [0], [1], [0, 0, 1, 1], [], []>, precision = #tpu.contract_precision<fp32>} : vector<8x4xf32>, vector<4x256xf32>, vector<8x256xf32> -> vector<8x256xf32>
    %c0_4 = arith.constant 0 : index
    %c0_5 = arith.constant 0 : index
    %4 = vector.load %arg3[%c0_4, %c0_5] : memref<8x1xf32, #tpu.memory_space<vmem>>, vector<8x1xf32>
    %5 = vector.broadcast %4 : vector<8x1xf32> to vector<8x256xf32>
    %6 = arith.addf %3, %5 : vector<8x256xf32>
    %cst_6 = arith.constant 0.000000e+00 : f32
    %7 = vector.broadcast %cst_6 : f32 to vector<8x256xf32>
    %8 = arith.maximumf %6, %7 : vector<8x256xf32>
    %c0_7 = arith.constant 0 : index
    %c0_8 = arith.constant 0 : index
    %9 = vector.load %arg4[%c0_7, %c0_8] : memref<8x8xf32, #tpu.memory_space<vmem>>, vector<8x8xf32>
    %cst_9 = arith.constant dense<0.000000e+00> : vector<8x256xf32>
    %10 = tpu.matmul %9, %8, %cst_9 {dimension_numbers = #tpu.dot_dimension_numbers<[1], [0], [0], [1], [0, 0, 1, 1], [], []>, precision = #tpu.contract_precision<fp32>} : vector<8x8xf32>, vector<8x256xf32>, vector<8x256xf32> -> vector<8x256xf32>
    %c0_10 = arith.constant 0 : index
    %c0_11 = arith.constant 0 : index
    %11 = vector.load %arg5[%c0_10, %c0_11] : memref<8x1xf32, #tpu.memory_space<vmem>>, vector<8x1xf32>
    %12 = vector.broadcast %11 : vector<8x1xf32> to vector<8x256xf32>
    %13 = arith.addf %10, %12 : vector<8x256xf32>
    %cst_12 = arith.constant 0.000000e+00 : f32
    %14 = vector.broadcast %cst_12 : f32 to vector<8x256xf32>
    %15 = arith.maximumf %13, %14 : vector<8x256xf32>
    %c0_13 = arith.constant 0 : index
    %c0_14 = arith.constant 0 : index
    %16 = vector.load %arg6[%c0_13, %c0_14] : memref<4x8xf32, #tpu.memory_space<vmem>>, vector<4x8xf32>
    %cst_15 = arith.constant dense<0.000000e+00> : vector<4x256xf32>
    %17 = tpu.matmul %16, %15, %cst_15 {dimension_numbers = #tpu.dot_dimension_numbers<[1], [0], [0], [1], [0, 0, 1, 1], [], []>, precision = #tpu.contract_precision<fp32>} : vector<4x8xf32>, vector<8x256xf32>, vector<4x256xf32> -> vector<4x256xf32>
    %c0_16 = arith.constant 0 : index
    %c0_17 = arith.constant 0 : index
    %18 = vector.load %arg7[%c0_16, %c0_17] : memref<4x1xf32, #tpu.memory_space<vmem>>, vector<4x1xf32>
    %19 = vector.broadcast %18 : vector<4x1xf32> to vector<4x256xf32>
    %20 = arith.addf %17, %19 : vector<4x256xf32>
    %c0_18 = arith.constant 0 : index
    %c0_19 = arith.constant 0 : index
    %21 = vector.load %arg8[%c0_18, %c0_19] : memref<4x8xf32, #tpu.memory_space<vmem>>, vector<4x8xf32>
    %cst_20 = arith.constant dense<0.000000e+00> : vector<4x256xf32>
    %22 = tpu.matmul %21, %15, %cst_20 {dimension_numbers = #tpu.dot_dimension_numbers<[1], [0], [0], [1], [0, 0, 1, 1], [], []>, precision = #tpu.contract_precision<fp32>} : vector<4x8xf32>, vector<8x256xf32>, vector<4x256xf32> -> vector<4x256xf32>
    %c0_21 = arith.constant 0 : index
    %c0_22 = arith.constant 0 : index
    %23 = vector.load %arg9[%c0_21, %c0_22] : memref<4x1xf32, #tpu.memory_space<vmem>>, vector<4x1xf32>
    %24 = vector.broadcast %23 : vector<4x1xf32> to vector<4x256xf32>
    %25 = arith.addf %22, %24 : vector<4x256xf32>
    %cst_23 = arith.constant 3.14159274 : f32
    %26 = vector.broadcast %cst_23 : f32 to vector<4x256xf32>
    %27 = arith.subf %26, %20 : vector<4x256xf32>
    %cst_24 = arith.constant 3.14159274 : f32
    %28 = vector.broadcast %cst_24 : f32 to vector<4x256xf32>
    %29 = arith.subf %28, %25 : vector<4x256xf32>
    %30 = arith.mulf %27, %29 : vector<4x256xf32>
    %c0_25 = arith.constant 0 : index
    %c0_26 = arith.constant 0 : index
    %31 = vector.load %arg11[%c0_25, %c0_26] : memref<16x4xf32, #tpu.memory_space<vmem>>, vector<16x4xf32>
    %cst_27 = arith.constant dense<0.000000e+00> : vector<16x256xf32>
    %32 = tpu.matmul %31, %20, %cst_27 {dimension_numbers = #tpu.dot_dimension_numbers<[1], [0], [0], [1], [0, 0, 1, 1], [], []>, precision = #tpu.contract_precision<fp32>} : vector<16x4xf32>, vector<4x256xf32>, vector<16x256xf32> -> vector<16x256xf32>
    %c0_28 = arith.constant 0 : index
    %c0_29 = arith.constant 0 : index
    %33 = vector.load %arg12[%c0_28, %c0_29] : memref<16x4xf32, #tpu.memory_space<vmem>>, vector<16x4xf32>
    %cst_30 = arith.constant dense<0.000000e+00> : vector<16x256xf32>
    %34 = tpu.matmul %33, %30, %cst_30 {dimension_numbers = #tpu.dot_dimension_numbers<[1], [0], [0], [1], [0, 0, 1, 1], [], []>, precision = #tpu.contract_precision<fp32>} : vector<16x4xf32>, vector<4x256xf32>, vector<16x256xf32> -> vector<16x256xf32>
    %35 = arith.addf %32, %34 : vector<16x256xf32>
    %36 = math.cos %35 : vector<16x256xf32>
    %37 = math.sin %35 : vector<16x256xf32>
    %cst_31 = arith.constant 2.500000e-01 : f32
    %38 = vector.broadcast %cst_31 : f32 to vector<16x256xf32>
    %39 = arith.mulf %38, %36 : vector<16x256xf32>
    %cst_32 = arith.constant 2.500000e-01 : f32
    %40 = vector.broadcast %cst_32 : f32 to vector<16x256xf32>
    %41 = arith.mulf %40, %37 : vector<16x256xf32>
    %c0_33 = arith.constant 0 : index
    %c0_34 = arith.constant 0 : index
    %42 = vector.load %arg10[%c0_33, %c0_34] : memref<16x16xf32, #tpu.memory_space<vmem>>, vector<16x16xf32>
    %cst_35 = arith.constant dense<0.000000e+00> : vector<16x256xf32>
    %43 = tpu.matmul %42, %39, %cst_35 {dimension_numbers = #tpu.dot_dimension_numbers<[1], [0], [0], [1], [0, 0, 1, 1], [], []>, precision = #tpu.contract_precision<fp32>} : vector<16x16xf32>, vector<16x256xf32>, vector<16x256xf32> -> vector<16x256xf32>
    %cst_36 = arith.constant dense<0.000000e+00> : vector<16x256xf32>
    %44 = tpu.matmul %42, %41, %cst_36 {dimension_numbers = #tpu.dot_dimension_numbers<[1], [0], [0], [1], [0, 0, 1, 1], [], []>, precision = #tpu.contract_precision<fp32>} : vector<16x16xf32>, vector<16x256xf32>, vector<16x256xf32> -> vector<16x256xf32>
    %45 = arith.mulf %43, %36 : vector<16x256xf32>
    %46 = arith.mulf %44, %37 : vector<16x256xf32>
    %47 = arith.subf %45, %46 : vector<16x256xf32>
    %48 = arith.mulf %43, %37 : vector<16x256xf32>
    %49 = arith.mulf %44, %36 : vector<16x256xf32>
    %50 = arith.addf %48, %49 : vector<16x256xf32>
    %51 = vector.extract_strided_slice %47 {offsets = [0, 0], sizes = [16, 128], strides = [1, 1]} : vector<16x256xf32> to vector<16x128xf32>
    %52 = vector.extract_strided_slice %47 {offsets = [0, 128], sizes = [16, 128], strides = [1, 1]} : vector<16x256xf32> to vector<16x128xf32>
    %53 = vector.extract_strided_slice %50 {offsets = [0, 0], sizes = [16, 128], strides = [1, 1]} : vector<16x256xf32> to vector<16x128xf32>
    %54 = vector.extract_strided_slice %50 {offsets = [0, 128], sizes = [16, 128], strides = [1, 1]} : vector<16x256xf32> to vector<16x128xf32>
    %55 = arith.mulf %52, %51 : vector<16x128xf32>
    %56 = arith.mulf %54, %53 : vector<16x128xf32>
    %57 = arith.addf %55, %56 : vector<16x128xf32>
    %cst_37 = arith.constant dense<0.000000e+00> : vector<128xf32>
    %58 = vector.multi_reduction <add>, %57, %cst_37 [0] : vector<16x128xf32> to vector<128xf32>
    %59 = vector.shape_cast %58 : vector<128xf32> to vector<1x128xf32>
    %60 = arith.mulf %52, %53 : vector<16x128xf32>
    %61 = arith.mulf %54, %51 : vector<16x128xf32>
    %62 = arith.subf %60, %61 : vector<16x128xf32>
    %cst_38 = arith.constant dense<0.000000e+00> : vector<128xf32>
    %63 = vector.multi_reduction <add>, %62, %cst_38 [0] : vector<16x128xf32> to vector<128xf32>
    %64 = vector.shape_cast %63 : vector<128xf32> to vector<1x128xf32>
    %65 = arith.mulf %59, %59 : vector<1x128xf32>
    %66 = arith.mulf %64, %64 : vector<1x128xf32>
    %67 = arith.addf %65, %66 : vector<1x128xf32>
    %c0_39 = arith.constant 0 : index
    %c0_40 = arith.constant 0 : index
    %68 = vector.load %arg13[%c0_39, %c0_40] : memref<1x128xf32, #tpu.memory_space<vmem>>, vector<1x128xf32>
    tpu.vector_store %arg13[%c0_39, %c0_40], %67 {strides = array<i32>} : memref<1x128xf32, #tpu.memory_space<vmem>>, vector<1x128xf32>,
    return
  }
  func.func @transform_0(%arg0: i32) -> (i32, i32, i32) {
    %c0_i32 = arith.constant 0 : i32
    %c0_i32_0 = arith.constant 0 : i32
    %c0_i32_1 = arith.constant 0 : i32
    return %arg0, %c0_i32, %c0_i32_0 : i32, i32, i32
  }
  func.func @transform_1(%arg0: i32) -> (i32, i32) {
    %c0_i32 = arith.constant 0 : i32
    %c0_i32_0 = arith.constant 0 : i32
    %c0_i32_1 = arith.constant 0 : i32
    return %c0_i32, %c0_i32_0 : i32, i32
  }
  func.func @transform_2(%arg0: i32) -> (i32, i32) {
    %c0_i32 = arith.constant 0 : i32
    %c0_i32_0 = arith.constant 0 : i32
    %c0_i32_1 = arith.constant 0 : i32
    return %c0_i32, %c0_i32_0 : i32, i32
  }
  func.func @transform_3(%arg0: i32) -> (i32, i32) {
    %c0_i32 = arith.constant 0 : i32
    %c0_i32_0 = arith.constant 0 : i32
    %c0_i32_1 = arith.constant 0 : i32
    return %c0_i32, %c0_i32_0 : i32, i32
  }
  func.func @transform_4(%arg0: i32) -> (i32, i32) {
    %c0_i32 = arith.constant 0 : i32
    %c0_i32_0 = arith.constant 0 : i32
    %c0_i32_1 = arith.constant 0 : i32
    return %c0_i32, %c0_i32_0 : i32, i32
  }
  func.func @transform_5(%arg0: i32) -> (i32, i32) {
    %c0_i32 = arith.constant 0 : i32
    %c0_i32_0 = arith.constant 0 : i32
    %c0_i32_1 = arith.constant 0 : i32
    return %c0_i32, %c0_i32_0 : i32, i32
  }
  func.func @transform_6(%arg0: i32) -> (i32, i32) {
    %c0_i32 = arith.constant 0 : i32
    %c0_i32_0 = arith.constant 0 : i32
    %c0_i32_1 = arith.constant 0 : i32
    return %c0_i32, %c0_i32_0 : i32, i32
  }
  func.func @transform_7(%arg0: i32) -> (i32, i32) {
    %c0_i32 = arith.constant 0 : i32
    %c0_i32_0 = arith.constant 0 : i32
    %c0_i32_1 = arith.constant 0 : i32
    return %c0_i32, %c0_i32_0 : i32, i32
  }
  func.func @transform_8(%arg0: i32) -> (i32, i32) {
    %c0_i32 = arith.constant 0 : i32
    %c0_i32_0 = arith.constant 0 : i32
    %c0_i32_1 = arith.constant 0 : i32
    return %c0_i32, %c0_i32_0 : i32, i32
  }
  func.func @transform_9(%arg0: i32) -> (i32, i32) {
    %c0_i32 = arith.constant 0 : i32
    %c0_i32_0 = arith.constant 0 : i32
    %c0_i32_1 = arith.constant 0 : i32
    return %c0_i32, %c0_i32_0 : i32, i32
  }
  func.func @transform_10(%arg0: i32) -> (i32, i32) {
    %c0_i32 = arith.constant 0 : i32
    %c0_i32_0 = arith.constant 0 : i32
    %c0_i32_1 = arith.constant 0 : i32
    return %c0_i32, %c0_i32_0 : i32, i32
  }
  func.func @transform_11(%arg0: i32) -> (i32, i32) {
    %c0_i32 = arith.constant 0 : i32
    %c0_i32_0 = arith.constant 0 : i32
    %c0_i32_1 = arith.constant 0 : i32
    return %c0_i32, %c0_i32_0 : i32, i32
  }
  func.func @transform_12(%arg0: i32) -> (i32, i32) {
    %c0_i32 = arith.constant 0 : i32
    %c0_i32_0 = arith.constant 0 : i32
    return %c0_i32, %arg0 : i32, i32
  }
}

</mosaic_0001>

<llo_original>
// kernel: _lambda_.1
$region0: #{_lambda_.1}
  #allocation0 [shape = 'u32[]', space=smem, size = 0x4, offset = 0x4, fixed_abs, tag = 'smem constant byte address 0x4 - core index']
  #allocation1 [shape = 'u32[144,128]{1,0:T(1,128)}', space=vmem, size = 0x12000, scoped, tag = 'internal scratch']
  %s0 = inlined_call_operand.vmem [shape: f32[1,4,256], index: 0, kind: input, shape index: {}]
  %s1 = inlined_call_operand.vmem [shape: f32[8,4], index: 1, kind: input, shape index: {}]
  %s2 = inlined_call_operand.hbm [shape: f32[8,1], index: 2, kind: input, shape index: {}]
  %s3 = inlined_call_operand.hbm [shape: f32[8,8], index: 3, kind: input, shape index: {}]
  %s4 = inlined_call_operand.hbm [shape: f32[8,1], index: 4, kind: input, shape index: {}]
  %s5 = inlined_call_operand.hbm [shape: f32[4,8], index: 5, kind: input, shape index: {}]
  %s6 = inlined_call_operand.hbm [shape: f32[4,1], index: 6, kind: input, shape index: {}]
  %s7 = inlined_call_operand.vmem [shape: f32[4,8], index: 7, kind: input, shape index: {}]
  %s8 = inlined_call_operand.vmem [shape: f32[4,1], index: 8, kind: input, shape index: {}]
  %s9 = inlined_call_operand.vmem [shape: f32[16,16], index: 9, kind: input, shape index: {}]
  %s10 = inlined_call_operand.vmem [shape: f32[16,4], index: 10, kind: input, shape index: {}]
  %s11 = inlined_call_operand.vmem [shape: f32[16,4], index: 11, kind: input, shape index: {}]
  %s12 = inlined_call_operand.vmem [shape: f32[1,128], index: 12, kind: output, shape index: {}]
  %s13 = sld [smem:[#allocation0]]
  $region78: #{_lambda_.1} parent=0
    _
  %s15 = ssub.s32 1, %s13
  %s16 = scalar_select 0, %s15, %s13
  $region1: #{_lambda_.1} parent=0
    #allocation2 [shape = 'u8[4096]{0}', space=vmem, size = 0x1000, scoped, tag = 'input window, operand 2, single buffered']
    #allocation3 [shape = 's32[1]{0}', space=sflag, size = 0x4, scoped, tag = 'scoped memory for _lambda_.1']
    #allocation4 [shape = 'u8[4096]{0}', space=vmem, size = 0x1000, scoped, tag = 'input window, operand 3, single buffered']
    #allocation5 [shape = 's32[1]{0}', space=sflag, size = 0x4, scoped, tag = 'scoped memory for _lambda_.1']
    #allocation6 [shape = 'u8[4096]{0}', space=vmem, size = 0x1000, scoped, tag = 'input window, operand 4, single buffered']
    #allocation7 [shape = 'u8[2048]{0}', space=vmem, size = 0x800, scoped, tag = 'input window, operand 5, single buffered']
    #allocation8 [shape = 's32[1]{0}', space=sflag, size = 0x4, scoped, tag = 'scoped memory for _lambda_.1']
    #allocation9 [shape = 'u8[2048]{0}', space=vmem, size = 0x800, scoped, tag = 'input window, operand 6, single buffered']
    %17 = vsyncpa [#allocation3], 0
    %18 = vsyncpa [#allocation5], 0
    %19 = vsyncpa [#allocation8], 0
    // Predicated region
    $region2: #{_lambda_.1} parent=1 // pred_check
      _
    $region3: #{_lambda_.1} parent=1 // pred_check_branch
      %21 = sbr.rel (0) target = $region5
    $region4: #{_lambda_.1} parent=1 // pred_region
      _
    $region5: #{_lambda_.1} parent=1 // pred_fallthru
      _
    // Predicated region
    $region6: #{_lambda_.1} parent=1 // pred_check
      _
    $region7: #{_lambda_.1} parent=1 // pred_check_branch
      %23 = sbr.rel (0) target = $region9
    $region8: #{_lambda_.1} parent=1 // pred_region
      _
    $region9: #{_lambda_.1} parent=1 // pred_fallthru
      _
    // Predicated region
    $region10: #{_lambda_.1} parent=1 // pred_check
      _
    $region11: #{_lambda_.1} parent=1 // pred_check_branch
      %25 = sbr.rel (0) target = $region13
    $region12: #{_lambda_.1} parent=1 // pred_region
      %s27 = ssub.s32 128, 128
      %28 = vsyncadd [#allocation3], %s27
      %s30 = sshll.u32 [#allocation2], 4
      %s31 = int_to_ptr.vmem [resolvable:$true] %s30
      %33 = dma.hbm_to_vmem [thread:$0]  %s2, 128, %s31, [#allocation3]
    $region13: #{_lambda_.1} parent=1 // pred_fallthru
      _
    // Predicated region
    $region14: #{_lambda_.1} parent=1 // pred_check
      _
    $region15: #{_lambda_.1} parent=1 // pred_check_branch
      %35 = sbr.rel (0) target = $region17
    $region16: #{_lambda_.1} parent=1 // pred_region
      %s37 = ssub.s32 128, 128
      %38 = vsyncadd [#allocation5], %s37
      %s40 = sshll.u32 [#allocation4], 4
      %s41 = int_to_ptr.vmem [resolvable:$true] %s40
      %43 = dma.hbm_to_vmem [thread:$0]  %s3, 128, %s41, [#allocation5]
    $region17: #{_lambda_.1} parent=1 // pred_fallthru
      _
    // Predicated region
    $region18: #{_lambda_.1} parent=1 // pred_check
      _
    $region19: #{_lambda_.1} parent=1 // pred_check_branch
      %45 = sbr.rel (0) target = $region21
    $region20: #{_lambda_.1} parent=1 // pred_region
      %s47 = ssub.s32 128, 128
      %48 = vsyncadd [#allocation5], %s47
      %s50 = sshll.u32 [#allocation6], 4
      %s51 = int_to_ptr.vmem [resolvable:$true] %s50
      %53 = dma.hbm_to_vmem [thread:$0]  %s4, 128, %s51, [#allocation5]
    $region21: #{_lambda_.1} parent=1 // pred_fallthru
      _
    // Predicated region
    $region22: #{_lambda_.1} parent=1 // pred_check
      _
    $region23: #{_lambda_.1} parent=1 // pred_check_branch
      %55 = sbr.rel (0) target = $region25
    $region24: #{_lambda_.1} parent=1 // pred_region
      %s57 = ssub.s32 64, 64
      %58 = vsyncadd [#allocation8], %s57
      %s60 = sshll.u32 [#allocation7], 4
      %s61 = int_to_ptr.vmem [resolvable:$true] %s60
      %63 = dma.hbm_to_vmem [thread:$0]  %s5, 64, %s61, [#allocation8]
    $region25: #{_lambda_.1} parent=1 // pred_fallthru
      _
    // Predicated region
    $region26: #{_lambda_.1} parent=1 // pred_check
      _
    $region27: #{_lambda_.1} parent=1 // pred_check_branch
      %65 = sbr.rel (0) target = $region29
    $region28: #{_lambda_.1} parent=1 // pred_region
      %s67 = ssub.s32 64, 64
      %68 = vsyncadd [#allocation8], %s67
      %s70 = sshll.u32 [#allocation9], 4
      %s71 = int_to_ptr.vmem [resolvable:$true] %s70
      %73 = dma.hbm_to_vmem [thread:$0]  %s6, 64, %s71, [#allocation8]
    $region29: #{_lambda_.1} parent=1 // pred_fallthru
      _
    // Predicated region
    $region30: #{_lambda_.1} parent=1 // pred_check
      _
    $region31: #{_lambda_.1} parent=1 // pred_check_branch
      %75 = sbr.rel (0) target = $region33
    $region32: #{_lambda_.1} parent=1 // pred_region
      _
    $region33: #{_lambda_.1} parent=1 // pred_fallthru
      _
    // Predicated region
    $region34: #{_lambda_.1} parent=1 // pred_check
      _
    $region35: #{_lambda_.1} parent=1 // pred_check_branch
      %77 = sbr.rel (0) target = $region37
    $region36: #{_lambda_.1} parent=1 // pred_region
      _
    $region37: #{_lambda_.1} parent=1 // pred_fallthru
      _
    // Predicated region
    $region38: #{_lambda_.1} parent=1 // pred_check
      _
    $region39: #{_lambda_.1} parent=1 // pred_check_branch
      %79 = sbr.rel (0) target = $region41
    $region40: #{_lambda_.1} parent=1 // pred_region
      _
    $region41: #{_lambda_.1} parent=1 // pred_fallthru
      _
    // Predicated region
    $region42: #{_lambda_.1} parent=1 // pred_check
      _
    $region43: #{_lambda_.1} parent=1 // pred_check_branch
      %81 = sbr.rel (0) target = $region45
    $region44: #{_lambda_.1} parent=1 // pred_region
      _
    $region45: #{_lambda_.1} parent=1 // pred_fallthru
      _
    // Predicated region
    $region46: #{_lambda_.1} parent=1 // pred_check
      _
    $region47: #{_lambda_.1} parent=1 // pred_check_branch
      %83 = sbr.rel (0) target = $region49
    $region48: #{_lambda_.1} parent=1 // pred_region
      _
    $region49: #{_lambda_.1} parent=1 // pred_fallthru
      _
    // Predicated region
    $region50: #{_lambda_.1} parent=1 // pred_check
      _
    $region51: #{_lambda_.1} parent=1 // pred_check_branch
      %85 = sbr.rel (0) target = $region53
    $region52: #{_lambda_.1} parent=1 // pred_region
      %86 = dma.done [#allocation3], 128
    $region53: #{_lambda_.1} parent=1 // pred_fallthru
      _
    // Predicated region
    $region54: #{_lambda_.1} parent=1 // pred_check
      _
    $region55: #{_lambda_.1} parent=1 // pred_check_branch
      %88 = sbr.rel (0) target = $region57
    $region56: #{_lambda_.1} parent=1 // pred_region
      %89 = dma.done [#allocation5], 128
    $region57: #{_lambda_.1} parent=1 // pred_fallthru
      _
    // Predicated region
    $region58: #{_lambda_.1} parent=1 // pred_check
      _
    $region59: #{_lambda_.1} parent=1 // pred_check_branch
      %91 = sbr.rel (0) target = $region61
    $region60: #{_lambda_.1} parent=1 // pred_region
      %92 = dma.done [#allocation5], 128
    $region61: #{_lambda_.1} parent=1 // pred_fallthru
      _
    // Predicated region
    $region62: #{_lambda_.1} parent=1 // pred_check
      _
    $region63: #{_lambda_.1} parent=1 // pred_check_branch
      %94 = sbr.rel (0) target = $region65
    $region64: #{_lambda_.1} parent=1 // pred_region
      %95 = dma.done [#allocation8], 64
    $region65: #{_lambda_.1} parent=1 // pred_fallthru
      _
    // Predicated region
    $region66: #{_lambda_.1} parent=1 // pred_check
      _
    $region67: #{_lambda_.1} parent=1 // pred_check_branch
      %97 = sbr.rel (0) target = $region69
    $region68: #{_lambda_.1} parent=1 // pred_region
      %98 = dma.done [#allocation8], 64
    $region69: #{_lambda_.1} parent=1 // pred_fallthru
      _
    %v99 = vld [vmem:[%s0] sm:$0xff]
    %v100 = vld [vmem:[%s1] sm:$0xff]
    %v101 = vld [vmem:[#allocation2] sm:$0xff]
    %103 = vset.pattern.permute.xlu0 0
    %104 = vperm.xlu0 %103, %v101
    %v105 = vpop.permute.xlu0 %104
    %v108 = vcombine.high %v99, %v99
    %vm109 = vcmask 31744
    %v111 = vsel %vm109, %v100, 0
    %vm113 = vcmask 1043456
    %v114 = vsel %vm113, %v99, 0
    %v116 = vsel %vm113, %v108, 0
    %v118 = vand.u32 %v116, 4294901760
    %119 = vmatprep.subr.mxu0 %v118
    %v120 = vand.u32 %v114, 4294901760
    %121 = vmatpush1.msra.mxu0 %v120
    %122 = vmatprep.subr.mxu0 0.0
    %123 = vmatpush1.msra.mxu0 0.0
    %124 = vmatprep.subr.mxu0 0.0
    %125 = vmatpush1.msra.mxu0 0.0
    %126 = vmatprep.subr.mxu0 0.0
    %127 = vmatpush1.msra.mxu0 0.0
    %128 = vmatprep.subr.mxu0 0.0
    %129 = vmatpush1.msra.mxu0 0.0
    %130 = vmatprep.subr.mxu0 0.0
    %131 = vmatpush1.msra.mxu0 0.0
    %132 = vmatprep.subr.mxu0 0.0
    %133 = vmatpush1.msra.mxu0 0.0
    %134 = vmatprep.subr.mxu0 0.0
    %135 = vmatpush1.msra.mxu0 0.0
    %136 = vmatprep.subr.mxu0 0.0
    %137 = vmatpush1.msra.mxu0 0.0
    %138 = vmatprep.subr.mxu0 0.0
    %139 = vmatpush1.msra.mxu0 0.0
    %140 = vmatprep.subr.mxu0 0.0
    %141 = vmatpush1.msra.mxu0 0.0
    %142 = vmatprep.subr.mxu0 0.0
    %143 = vmatpush1.msra.mxu0 0.0
    %144 = vmatprep.subr.mxu0 0.0
    %145 = vmatpush1.msra.mxu0 0.0
    %146 = vmatprep.subr.mxu0 0.0
    %147 = vmatpush1.msra.mxu0 0.0
    %148 = vmatprep.subr.mxu0 0.0
    %149 = vmatpush1.msra.mxu0 0.0
    %150 = vmatprep.subr.mxu0 0.0
    %151 = vmatpush1.msra.mxu0 0.0
    %152 = vmatprep.subr.mxu0 0.0
    %153 = vmatpush1.msra.mxu0 0.0
    %154 = vmatprep.subr.mxu0 0.0
    %155 = vmatpush1.msra.mxu0 0.0
    %156 = vmatprep.subr.mxu0 0.0
    %157 = vmatpush1.msra.mxu0 0.0
    %158 = vmatprep.subr.mxu0 0.0
    %159 = vmatpush1.msra.mxu0 0.0
    %160 = vmatprep.subr.mxu0 0.0
    %161 = vmatpush1.msra.mxu0 0.0
    %162 = vmatprep.subr.mxu0 0.0
    %163 = vmatpush1.msra.mxu0 0.0
    %164 = vmatprep.subr.mxu0 0.0
    %165 = vmatpush1.msra.mxu0 0.0
    %166 = vmatprep.subr.mxu0 0.0
    %167 = vmatpush1.msra.mxu0 0.0
    %168 = vmatprep.subr.mxu0 0.0
    %169 = vmatpush1.msra.mxu0 0.0
    %170 = vmatprep.subr.mxu0 0.0
    %171 = vmatpush1.msra.mxu0 0.0
    %172 = vmatprep.subr.mxu0 0.0
    %173 = vmatpush1.msra.mxu0 0.0
    %174 = vmatprep.subr.mxu0 0.0
    %175 = vmatpush1.msra.mxu0 0.0
    %176 = vmatprep.subr.mxu0 0.0
    %177 = vmatpush1.msra.mxu0 0.0
    %178 = vmatprep.subr.mxu0 0.0
    %179 = vmatpush1.msra.mxu0 0.0
    %180 = vmatprep.subr.mxu0 0.0
    %181 = vmatpush1.msra.mxu0 0.0
    %182 = vmatprep.subr.mxu0 0.0
    %183 = vmatpush1.msra.mxu0 0.0
    %184 = vmatprep.mubr.f32.mxu0 0.0
    %v185 = vand.u32 %v111, 4294901760
    %v186 = vsub.f32 %v111, %v185
    %v187 = vand.u32 %v186, 4294901760
    %v188 = vsub.f32 %v186, %v187
    %v189 = vand.u32 %v188, 4294901760
    %190 = vmatmul.mubr.f32.gmra.mrb[0].mxu0 %v189
    %v191 = vpop.f32.mrb[0].mxu0
    %v192 = vadd.f32 %v105, %v191
    %v193 = vpop.f32.mrb[0].mxu0
    %v194 = vadd.f32 %v105, %v193
    %195 = vdwg.mxu0
    %v196 = vand.u32 %v116, 4294901760
    %v197 = vsub.f32 %v116, %v196
    %v198 = vand.u32 %v197, 4294901760
    %v199 = vsub.f32 %v197, %v198
    %v200 = vand.u32 %v199, 4294901760
    %201 = vmatprep.subr.mxu0 %v200
    %v202 = vand.u32 %v114, 4294901760
    %v203 = vsub.f32 %v114, %v202
    %v204 = vand.u32 %v203, 4294901760
    %v205 = vsub.f32 %v203, %v204
    %v206 = vand.u32 %v205, 4294901760
    %207 = vmatpush1.msra.mxu0 %v206
    %208 = vmatprep.subr.mxu0 0.0
    %209 = vmatpush1.msra.mxu0 0.0
    %210 = vmatprep.subr.mxu0 0.0
    %211 = vmatpush1.msra.mxu0 0.0
    %212 = vmatprep.subr.mxu0 0.0
    %213 = vmatpush1.msra.mxu0 0.0
    %214 = vmatprep.subr.mxu0 0.0
    %215 = vmatpush1.msra.mxu0 0.0
    %216 = vmatprep.subr.mxu0 0.0
    %217 = vmatpush1.msra.mxu0 0.0
    %218 = vmatprep.subr.mxu0 0.0
    %219 = vmatpush1.msra.mxu0 0.0
    %220 = vmatprep.subr.mxu0 0.0
    %221 = vmatpush1.msra.mxu0 0.0
    %222 = vmatprep.subr.mxu0 0.0
    %223 = vmatpush1.msra.mxu0 0.0
    %224 = vmatprep.subr.mxu0 0.0
    %225 = vmatpush1.msra.mxu0 0.0
    %226 = vmatprep.subr.mxu0 0.0
    %227 = vmatpush1.msra.mxu0 0.0
    %228 = vmatprep.subr.mxu0 0.0
    %229 = vmatpush1.msra.mxu0 0.0
    %230 = vmatprep.subr.mxu0 0.0
    %231 = vmatpush1.msra.mxu0 0.0
    %232 = vmatprep.subr.mxu0 0.0
    %233 = vmatpush1.msra.mxu0 0.0
    %234 = vmatprep.subr.mxu0 0.0
    %235 = vmatpush1.msra.mxu0 0.0
    %236 = vmatprep.subr.mxu0 0.0
    %237 = vmatpush1.msra.mxu0 0.0
    %238 = vmatprep.subr.mxu0 0.0
    %239 = vmatpush1.msra.mxu0 0.0
    %240 = vmatprep.subr.mxu0 0.0
    %241 = vmatpush1.msra.mxu0 0.0
    %242 = vmatprep.subr.mxu0 0.0
    %243 = vmatpush1.msra.mxu0 0.0
    %244 = vmatprep.subr.mxu0 0.0
    %245 = vmatpush1.msra.mxu0 0.0
    %246 = vmatprep.subr.mxu0 0.0
    %247 = vmatpush1.msra.mxu0 0.0
    %248 = vmatprep.subr.mxu0 0.0
    %249 = vmatpush1.msra.mxu0 0.0
    %250 = vmatprep.subr.mxu0 0.0
    %251 = vmatpush1.msra.mxu0 0.0
    %252 = vmatprep.subr.mxu0 0.0
    %253 = vmatpush1.msra.mxu0 0.0
    %254 = vmatprep.subr.mxu0 0.0
    %255 = vmatpush1.msra.mxu0 0.0
    %256 = vmatprep.subr.mxu0 0.0
    %257 = vmatpush1.msra.mxu0 0.0
    %258 = vmatprep.subr.mxu0 0.0
    %259 = vmatpush1.msra.mxu0 0.0
    %260 = vmatprep.subr.mxu0 0.0
    %261 = vmatpush1.msra.mxu0 0.0
    %262 = vmatprep.subr.mxu0 0.0
    %263 = vmatpush1.msra.mxu0 0.0
    %264 = vmatprep.subr.mxu0 0.0
    %265 = vmatpush1.msra.mxu0 0.0
    %266 = vmatprep.subr.mxu0 0.0
    %267 = vmatpush1.msra.mxu0 0.0
    %268 = vmatprep.subr.mxu0 0.0
    %269 = vmatpush1.msra.mxu0 0.0
    %270 = vmatprep.mubr.f32.mxu0 0.0
    %v271 = vand.u32 %v111, 4294901760
    %272 = vmatmul.mubr.f32.gmra.mrb[0].mxu0 %v271
    %v273 = vpop.f32.mrb[0].mxu0
    %v274 = vadd.f32 %v192, %v273
    %v275 = vpop.f32.mrb[0].mxu0
    %v276 = vadd.f32 %v194, %v275
    %277 = vdwg.mxu0
    %v278 = vand.u32 %v116, 4294901760
    %v279 = vsub.f32 %v116, %v278
    %280 = vmatprep.subr.mxu0 %v279
    %v281 = vand.u32 %v114, 4294901760
    %v282 = vsub.f32 %v114, %v281
    %283 = vmatpush1.msra.mxu0 %v282
    %284 = vmatprep.subr.mxu0 0.0
    %285 = vmatpush1.msra.mxu0 0.0
    %286 = vmatprep.subr.mxu0 0.0
    %287 = vmatpush1.msra.mxu0 0.0
    %288 = vmatprep.subr.mxu0 0.0
    %289 = vmatpush1.msra.mxu0 0.0
    %290 = vmatprep.subr.mxu0 0.0
    %291 = vmatpush1.msra.mxu0 0.0
    %292 = vmatprep.subr.mxu0 0.0
    %293 = vmatpush1.msra.mxu0 0.0
    %294 = vmatprep.subr.mxu0 0.0
    %295 = vmatpush1.msra.mxu0 0.0
    %296 = vmatprep.subr.mxu0 0.0
    %297 = vmatpush1.msra.mxu0 0.0
    %298 = vmatprep.subr.mxu0 0.0
    %299 = vmatpush1.msra.mxu0 0.0
    %300 = vmatprep.subr.mxu0 0.0
    %301 = vmatpush1.msra.mxu0 0.0
    %302 = vmatprep.subr.mxu0 0.0
    %303 = vmatpush1.msra.mxu0 0.0
    %304 = vmatprep.subr.mxu0 0.0
    %305 = vmatpush1.msra.mxu0 0.0
    %306 = vmatprep.subr.mxu0 0.0
    %307 = vmatpush1.msra.mxu0 0.0
    %308 = vmatprep.subr.mxu0 0.0
    %309 = vmatpush1.msra.mxu0 0.0
    %310 = vmatprep.subr.mxu0 0.0
    %311 = vmatpush1.msra.mxu0 0.0
    %312 = vmatprep.subr.mxu0 0.0
    %313 = vmatpush1.msra.mxu0 0.0
    %314 = vmatprep.subr.mxu0 0.0
    %315 = vmatpush1.msra.mxu0 0.0
    %316 = vmatprep.subr.mxu0 0.0
    %317 = vmatpush1.msra.mxu0 0.0
    %318 = vmatprep.subr.mxu0 0.0
    %319 = vmatpush1.msra.mxu0 0.0
    %320 = vmatprep.subr.mxu0 0.0
    %321 = vmatpush1.msra.mxu0 0.0
    %322 = vmatprep.subr.mxu0 0.0
    %323 = vmatpush1.msra.mxu0 0.0
    %324 = vmatprep.subr.mxu0 0.0
    %325 = vmatpush1.msra.mxu0 0.0
    %326 = vmatprep.subr.mxu0 0.0
    %327 = vmatpush1.msra.mxu0 0.0
    %328 = vmatprep.subr.mxu0 0.0
    %329 = vmatpush1.msra.mxu0 0.0
    %330 = vmatprep.subr.mxu0 0.0
    %331 = vmatpush1.msra.mxu0 0.0
    %332 = vmatprep.subr.mxu0 0.0
    %333 = vmatpush1.msra.mxu0 0.0
    %334 = vmatprep.subr.mxu0 0.0
    %335 = vmatpush1.msra.mxu0 0.0
    %336 = vmatprep.subr.mxu0 0.0
    %337 = vmatpush1.msra.mxu0 0.0
    %338 = vmatprep.subr.mxu0 0.0
    %339 = vmatpush1.msra.mxu0 0.0
    %340 = vmatprep.subr.mxu0 0.0
    %341 = vmatpush1.msra.mxu0 0.0
    %342 = vmatprep.subr.mxu0 0.0
    %343 = vmatpush1.msra.mxu0 0.0
    %344 = vmatprep.subr.mxu0 0.0
    %345 = vmatpush1.msra.mxu0 0.0
    %346 = vmatprep.mubr.f32.mxu0 0.0
    %v347 = vand.u32 %v111, 4294901760
    %v348 = vsub.f32 %v111, %v347
    %349 = vmatmul.mubr.f32.gmra.mrb[0].mxu0 %v348
    %v350 = vpop.f32.mrb[0].mxu0
    %v351 = vadd.f32 %v274, %v350
    %v352 = vpop.f32.mrb[0].mxu0
    %v353 = vadd.f32 %v276, %v352
    %354 = vdwg.mxu0
    %v355 = vand.u32 %v116, 4294901760
    %356 = vmatprep.subr.mxu0 %v355
    %v357 = vand.u32 %v114, 4294901760
    %358 = vmatpush1.msra.mxu0 %v357
    %359 = vmatprep.subr.mxu0 0.0
    %360 = vmatpush1.msra.mxu0 0.0
    %361 = vmatprep.subr.mxu0 0.0
    %362 = vmatpush1.msra.mxu0 0.0
    %363 = vmatprep.subr.mxu0 0.0
    %364 = vmatpush1.msra.mxu0 0.0
    %365 = vmatprep.subr.mxu0 0.0
    %366 = vmatpush1.msra.mxu0 0.0
    %367 = vmatprep.subr.mxu0 0.0
    %368 = vmatpush1.msra.mxu0 0.0
    %369 = vmatprep.subr.mxu0 0.0
    %370 = vmatpush1.msra.mxu0 0.0
    %371 = vmatprep.subr.mxu0 0.0
    %372 = vmatpush1.msra.mxu0 0.0
    %373 = vmatprep.subr.mxu0 0.0
    %374 = vmatpush1.msra.mxu0 0.0
    %375 = vmatprep.subr.mxu0 0.0
    %376 = vmatpush1.msra.mxu0 0.0
    %377 = vmatprep.subr.mxu0 0.0
    %378 = vmatpush1.msra.mxu0 0.0
    %379 = vmatprep.subr.mxu0 0.0
    %380 = vmatpush1.msra.mxu0 0.0
    %381 = vmatprep.subr.mxu0 0.0
    %382 = vmatpush1.msra.mxu0 0.0
    %383 = vmatprep.subr.mxu0 0.0
    %384 = vmatpush1.msra.mxu0 0.0
    %385 = vmatprep.subr.mxu0 0.0
    %386 = vmatpush1.msra.mxu0 0.0
    %387 = vmatprep.subr.mxu0 0.0
    %388 = vmatpush1.msra.mxu0 0.0
    %389 = vmatprep.subr.mxu0 0.0
    %390 = vmatpush1.msra.mxu0 0.0
    %391 = vmatprep.subr.mxu0 0.0
    %392 = vmatpush1.msra.mxu0 0.0
    %393 = vmatprep.subr.mxu0 0.0
    %394 = vmatpush1.msra.mxu0 0.0
    %395 = vmatprep.subr.mxu0 0.0
    %396 = vmatpush1.msra.mxu0 0.0
    %397 = vmatprep.subr.mxu0 0.0
    %398 = vmatpush1.msra.mxu0 0.0
    %399 = vmatprep.subr.mxu0 0.0
    %400 = vmatpush1.msra.mxu0 0.0
    %401 = vmatprep.subr.mxu0 0.0
    %402 = vmatpush1.msra.mxu0 0.0
    %403 = vmatprep.subr.mxu0 0.0
    %404 = vmatpush1.msra.mxu0 0.0
    %405 = vmatprep.subr.mxu0 0.0
    %406 = vmatpush1.msra.mxu0 0.0
    %407 = vmatprep.subr.mxu0 0.0
    %408 = vmatpush1.msra.mxu0 0.0
    %409 = vmatprep.subr.mxu0 0.0
    %410 = vmatpush1.msra.mxu0 0.0
    %411 = vmatprep.subr.mxu0 0.0
    %412 = vmatpush1.msra.mxu0 0.0
    %413 = vmatprep.subr.mxu0 0.0
    %414 = vmatpush1.msra.mxu0 0.0
    %415 = vmatprep.subr.mxu0 0.0
    %416 = vmatpush1.msra.mxu0 0.0
    %417 = vmatprep.subr.mxu0 0.0
    %418 = vmatpush1.msra.mxu0 0.0
    %419 = vmatprep.subr.mxu0 0.0
    %420 = vmatpush1.msra.mxu0 0.0
    %421 = vmatprep.mubr.f32.mxu0 0.0
    %v422 = vand.u32 %v111, 4294901760
    %v423 = vsub.f32 %v111, %v422
    %v424 = vand.u32 %v423, 4294901760
    %425 = vmatmul.mubr.f32.gmra.mrb[0].mxu0 %v424
    %v426 = vpop.f32.mrb[0].mxu0
    %v427 = vadd.f32 %v351, %v426
    %v428 = vpop.f32.mrb[0].mxu0
    %v429 = vadd.f32 %v353, %v428
    %430 = vdwg.mxu0
    %v431 = vand.u32 %v116, 4294901760
    %v432 = vsub.f32 %v116, %v431
    %v433 = vand.u32 %v432, 4294901760
    %434 = vmatprep.subr.mxu0 %v433
    %v435 = vand.u32 %v114, 4294901760
    %v436 = vsub.f32 %v114, %v435
    %v437 = vand.u32 %v436, 4294901760
    %438 = vmatpush1.msra.mxu0 %v437
    %439 = vmatprep.subr.mxu0 0.0
    %440 = vmatpush1.msra.mxu0 0.0
    %441 = vmatprep.subr.mxu0 0.0
    %442 = vmatpush1.msra.mxu0 0.0
    %443 = vmatprep.subr.mxu0 0.0
    %444 = vmatpush1.msra.mxu0 0.0
    %445 = vmatprep.subr.mxu0 0.0
    %446 = vmatpush1.msra.mxu0 0.0
    %447 = vmatprep.subr.mxu0 0.0
    %448 = vmatpush1.msra.mxu0 0.0
    %449 = vmatprep.subr.mxu0 0.0
    %450 = vmatpush1.msra.mxu0 0.0
    %451 = vmatprep.subr.mxu0 0.0
    %452 = vmatpush1.msra.mxu0 0.0
    %453 = vmatprep.subr.mxu0 0.0
    %454 = vmatpush1.msra.mxu0 0.0
    %455 = vmatprep.subr.mxu0 0.0
    %456 = vmatpush1.msra.mxu0 0.0
    %457 = vmatprep.subr.mxu0 0.0
    %458 = vmatpush1.msra.mxu0 0.0
    %459 = vmatprep.subr.mxu0 0.0
    %460 = vmatpush1.msra.mxu0 0.0
    %461 = vmatprep.subr.mxu0 0.0
    %462 = vmatpush1.msra.mxu0 0.0
    %463 = vmatprep.subr.mxu0 0.0
    %464 = vmatpush1.msra.mxu0 0.0
    %465 = vmatprep.subr.mxu0 0.0
    %466 = vmatpush1.msra.mxu0 0.0
    %467 = vmatprep.subr.mxu0 0.0
    %468 = vmatpush1.msra.mxu0 0.0
    %469 = vmatprep.subr.mxu0 0.0
    %470 = vmatpush1.msra.mxu0 0.0
    %471 = vmatprep.subr.mxu0 0.0
    %472 = vmatpush1.msra.mxu0 0.0
    %473 = vmatprep.subr.mxu0 0.0
    %474 = vmatpush1.msra.mxu0 0.0
    %475 = vmatprep.subr.mxu0 0.0
    %476 = vmatpush1.msra.mxu0 0.0
    %477 = vmatprep.subr.mxu0 0.0
    %478 = vmatpush1.msra.mxu0 0.0
    %479 = vmatprep.subr.mxu0 0.0
    %480 = vmatpush1.msra.mxu0 0.0
    %481 = vmatprep.subr.mxu0 0.0
    %482 = vmatpush1.msra.mxu0 0.0
    %483 = vmatprep.subr.mxu0 0.0
    %484 = vmatpush1.msra.mxu0 0.0
    %485 = vmatprep.subr.mxu0 0.0
    %486 = vmatpush1.msra.mxu0 0.0
    %487 = vmatprep.subr.mxu0 0.0
    %488 = vmatpush1.msra.mxu0 0.0
    %489 = vmatprep.subr.mxu0 0.0
    %490 = vmatpush1.msra.mxu0 0.0
    %491 = vmatprep.subr.mxu0 0.0
    %492 = vmatpush1.msra.mxu0 0.0
    %493 = vmatprep.subr.mxu0 0.0
    %494 = vmatpush1.msra.mxu0 0.0
    %495 = vmatprep.subr.mxu0 0.0
    %496 = vmatpush1.msra.mxu0 0.0
    %497 = vmatprep.subr.mxu0 0.0
    %498 = vmatpush1.msra.mxu0 0.0
    %499 = vmatprep.subr.mxu0 0.0
    %500 = vmatpush1.msra.mxu0 0.0
    %501 = vmatprep.mubr.f32.mxu0 0.0
    %v502 = vand.u32 %v111, 4294901760
    %503 = vmatmul.mubr.f32.gmra.mrb[0].mxu0 %v502
    %v504 = vpop.f32.mrb[0].mxu0
    %v505 = vadd.f32 %v427, %v504
    %v506 = vpop.f32.mrb[0].mxu0
    %v507 = vadd.f32 %v429, %v506
    %508 = vdwg.mxu0
    %v509 = vand.u32 %v116, 4294901760
    %510 = vmatprep.subr.mxu0 %v509
    %v511 = vand.u32 %v114, 4294901760
    %512 = vmatpush1.msra.mxu0 %v511
    %513 = vmatprep.subr.mxu0 0.0
    %514 = vmatpush1.msra.mxu0 0.0
    %515 = vmatprep.subr.mxu0 0.0
    %516 = vmatpush1.msra.mxu0 0.0
    %517 = vmatprep.subr.mxu0 0.0
    %518 = vmatpush1.msra.mxu0 0.0
    %519 = vmatprep.subr.mxu0 0.0
    %520 = vmatpush1.msra.mxu0 0.0
    %521 = vmatprep.subr.mxu0 0.0
    %522 = vmatpush1.msra.mxu0 0.0
    %523 = vmatprep.subr.mxu0 0.0
    %524 = vmatpush1.msra.mxu0 0.0
    %525 = vmatprep.subr.mxu0 0.0
    %526 = vmatpush1.msra.mxu0 0.0
    %527 = vmatprep.subr.mxu0 0.0
    %528 = vmatpush1.msra.mxu0 0.0
    %529 = vmatprep.subr.mxu0 0.0
    %530 = vmatpush1.msra.mxu0 0.0
    %531 = vmatprep.subr.mxu0 0.0
    %532 = vmatpush1.msra.mxu0 0.0
    %533 = vmatprep.subr.mxu0 0.0
    %534 = vmatpush1.msra.mxu0 0.0
    %535 = vmatprep.subr.mxu0 0.0
    %536 = vmatpush1.msra.mxu0 0.0
    %537 = vmatprep.subr.mxu0 0.0
    %538 = vmatpush1.msra.mxu0 0.0
    %539 = vmatprep.subr.mxu0 0.0
    %540 = vmatpush1.msra.mxu0 0.0
    %541 = vmatprep.subr.mxu0 0.0
    %542 = vmatpush1.msra.mxu0 0.0
    %543 = vmatprep.subr.mxu0 0.0
    %544 = vmatpush1.msra.mxu0 0.0
    %545 = vmatprep.subr.mxu0 0.0
    %546 = vmatpush1.msra.mxu0 0.0
    %547 = vmatprep.subr.mxu0 0.0
    %548 = vmatpush1.msra.mxu0 0.0
    %549 = vmatprep.subr.mxu0 0.0
    %550 = vmatpush1.msra.mxu0 0.0
    %551 = vmatprep.subr.mxu0 0.0
    %552 = vmatpush1.msra.mxu0 0.0
    %553 = vmatprep.subr.mxu0 0.0
    %554 = vmatpush1.msra.mxu0 0.0
    %555 = vmatprep.subr.mxu0 0.0
    %556 = vmatpush1.msra.mxu0 0.0
    %557 = vmatprep.subr.mxu0 0.0
    %558 = vmatpush1.msra.mxu0 0.0
    %559 = vmatprep.subr.mxu0 0.0
    %560 = vmatpush1.msra.mxu0 0.0
    %561 = vmatprep.subr.mxu0 0.0
    %562 = vmatpush1.msra.mxu0 0.0
    %563 = vmatprep.subr.mxu0 0.0
    %564 = vmatpush1.msra.mxu0 0.0
    %565 = vmatprep.subr.mxu0 0.0
    %566 = vmatpush1.msra.mxu0 0.0
    %567 = vmatprep.subr.mxu0 0.0
    %568 = vmatpush1.msra.mxu0 0.0
    %569 = vmatprep.subr.mxu0 0.0
    %570 = vmatpush1.msra.mxu0 0.0
    %571 = vmatprep.subr.mxu0 0.0
    %572 = vmatpush1.msra.mxu0 0.0
    %573 = vmatprep.subr.mxu0 0.0
    %574 = vmatpush1.msra.mxu0 0.0
    %575 = vmatprep.mubr.f32.mxu0 0.0
    %v576 = vand.u32 %v111, 4294901760
    %577 = vmatmul.mubr.f32.gmra.mrb[0].mxu0 %v576
    %v578 = vpop.f32.mrb[0].mxu0
    %v579 = vadd.f32 %v505, %v578
    %v580 = vpop.f32.mrb[0].mxu0
    %v581 = vadd.f32 %v507, %v580
    %582 = vdwg.mxu0
    %v583 = vmax.f32 %v579, 0.0
    %v584 = vmax.f32 %v581, 0.0
    %v585 = vld [vmem:[#allocation4] sm:$0xff]
    %v586 = vld [vmem:[#allocation6] sm:$0xff]
    %588 = vset.pattern.permute.xlu0 0
    %589 = vperm.xlu0 %588, %v586
    %v590 = vpop.permute.xlu0 %589
    %vm592 = vcmask 64512
    %v594 = vsel %vm592, %v585, 0
    %v596 = vand.u32 %v584, 4294901760
    %597 = vmatprep.subr.mxu0 %v596
    %v598 = vand.u32 %v583, 4294901760
    %599 = vmatpush1.msra.mxu0 %v598
    %600 = vmatprep.subr.mxu0 0.0
    %601 = vmatpush1.msra.mxu0 0.0
    %602 = vmatprep.subr.mxu0 0.0
    %603 = vmatpush1.msra.mxu0 0.0
    %604 = vmatprep.subr.mxu0 0.0
    %605 = vmatpush1.msra.mxu0 0.0
    %606 = vmatprep.subr.mxu0 0.0
    %607 = vmatpush1.msra.mxu0 0.0
    %608 = vmatprep.subr.mxu0 0.0
    %609 = vmatpush1.msra.mxu0 0.0
    %610 = vmatprep.subr.mxu0 0.0
    %611 = vmatpush1.msra.mxu0 0.0
    %612 = vmatprep.subr.mxu0 0.0
    %613 = vmatpush1.msra.mxu0 0.0
    %614 = vmatprep.subr.mxu0 0.0
    %615 = vmatpush1.msra.mxu0 0.0
    %616 = vmatprep.subr.mxu0 0.0
    %617 = vmatpush1.msra.mxu0 0.0
    %618 = vmatprep.subr.mxu0 0.0
    %619 = vmatpush1.msra.mxu0 0.0
    %620 = vmatprep.subr.mxu0 0.0
    %621 = vmatpush1.msra.mxu0 0.0
    %622 = vmatprep.subr.mxu0 0.0
    %623 = vmatpush1.msra.mxu0 0.0
    %624 = vmatprep.subr.mxu0 0.0
    %625 = vmatpush1.msra.mxu0 0.0
    %626 = vmatprep.subr.mxu0 0.0
    %627 = vmatpush1.msra.mxu0 0.0
    %628 = vmatprep.subr.mxu0 0.0
    %629 = vmatpush1.msra.mxu0 0.0
    %630 = vmatprep.subr.mxu0 0.0
    %631 = vmatpush1.msra.mxu0 0.0
    %632 = vmatprep.subr.mxu0 0.0
    %633 = vmatpush1.msra.mxu0 0.0
    %634 = vmatprep.subr.mxu0 0.0
    %635 = vmatpush1.msra.mxu0 0.0
    %636 = vmatprep.subr.mxu0 0.0
    %637 = vmatpush1.msra.mxu0 0.0
    %638 = vmatprep.subr.mxu0 0.0
    %639 = vmatpush1.msra.mxu0 0.0
    %640 = vmatprep.subr.mxu0 0.0
    %641 = vmatpush1.msra.mxu0 0.0
    %642 = vmatprep.subr.mxu0 0.0
    %643 = vmatpush1.msra.mxu0 0.0
    %644 = vmatprep.subr.mxu0 0.0
    %645 = vmatpush1.msra.mxu0 0.0
    %646 = vmatprep.subr.mxu0 0.0
    %647 = vmatpush1.msra.mxu0 0.0
    %648 = vmatprep.subr.mxu0 0.0
    %649 = vmatpush1.msra.mxu0 0.0
    %650 = vmatprep.subr.mxu0 0.0
    %651 = vmatpush1.msra.mxu0 0.0
    %652 = vmatprep.subr.mxu0 0.0
    %653 = vmatpush1.msra.mxu0 0.0
    %654 = vmatprep.subr.mxu0 0.0
    %655 = vmatpush1.msra.mxu0 0.0
    %656 = vmatprep.subr.mxu0 0.0
    %657 = vmatpush1.msra.mxu0 0.0
    %658 = vmatprep.subr.mxu0 0.0
    %659 = vmatpush1.msra.mxu0 0.0
    %660 = vmatprep.subr.mxu0 0.0
    %661 = vmatpush1.msra.mxu0 0.0
    %662 = vmatprep.mubr.f32.mxu0 0.0
    %v663 = vand.u32 %v594, 4294901760
    %v664 = vsub.f32 %v594, %v663
    %v665 = vand.u32 %v664, 4294901760
    %v666 = vsub.f32 %v664, %v665
    %v667 = vand.u32 %v666, 4294901760
    %668 = vmatmul.mubr.f32.gmra.mrb[0].mxu0 %v667
    %v669 = vpop.f32.mrb[0].mxu0
    %v670 = vadd.f32 %v590, %v669
    %v671 = vpop.f32.mrb[0].mxu0
    %v672 = vadd.f32 %v590, %v671
    %673 = vdwg.mxu0
    %v674 = vand.u32 %v584, 4294901760
    %v675 = vsub.f32 %v584, %v674
    %v676 = vand.u32 %v675, 4294901760
    %v677 = vsub.f32 %v675, %v676
    %v678 = vand.u32 %v677, 4294901760
    %679 = vmatprep.subr.mxu0 %v678
    %v680 = vand.u32 %v583, 4294901760
    %v681 = vsub.f32 %v583, %v680
    %v682 = vand.u32 %v681, 4294901760
    %v683 = vsub.f32 %v681, %v682
    %v684 = vand.u32 %v683, 4294901760
    %685 = vmatpush1.msra.mxu0 %v684
    %686 = vmatprep.subr.mxu0 0.0
    %687 = vmatpush1.msra.mxu0 0.0
    %688 = vmatprep.subr.mxu0 0.0
    %689 = vmatpush1.msra.mxu0 0.0
    %690 = vmatprep.subr.mxu0 0.0
    %691 = vmatpush1.msra.mxu0 0.0
    %692 = vmatprep.subr.mxu0 0.0
    %693 = vmatpush1.msra.mxu0 0.0
    %694 = vmatprep.subr.mxu0 0.0
    %695 = vmatpush1.msra.mxu0 0.0
    %696 = vmatprep.subr.mxu0 0.0
    %697 = vmatpush1.msra.mxu0 0.0
    %698 = vmatprep.subr.mxu0 0.0
    %699 = vmatpush1.msra.mxu0 0.0
    %700 = vmatprep.subr.mxu0 0.0
    %701 = vmatpush1.msra.mxu0 0.0
    %702 = vmatprep.subr.mxu0 0.0
    %703 = vmatpush1.msra.mxu0 0.0
    %704 = vmatprep.subr.mxu0 0.0
    %705 = vmatpush1.msra.mxu0 0.0
    %706 = vmatprep.subr.mxu0 0.0
    %707 = vmatpush1.msra.mxu0 0.0
    %708 = vmatprep.subr.mxu0 0.0
    %709 = vmatpush1.msra.mxu0 0.0
    %710 = vmatprep.subr.mxu0 0.0
    %711 = vmatpush1.msra.mxu0 0.0
    %712 = vmatprep.subr.mxu0 0.0
    %713 = vmatpush1.msra.mxu0 0.0
    %714 = vmatprep.subr.mxu0 0.0
    %715 = vmatpush1.msra.mxu0 0.0
    %716 = vmatprep.subr.mxu0 0.0
    %717 = vmatpush1.msra.mxu0 0.0
    %718 = vmatprep.subr.mxu0 0.0
    %719 = vmatpush1.msra.mxu0 0.0
    %720 = vmatprep.subr.mxu0 0.0
    %721 = vmatpush1.msra.mxu0 0.0
    %722 = vmatprep.subr.mxu0 0.0
    %723 = vmatpush1.msra.mxu0 0.0
    %724 = vmatprep.subr.mxu0 0.0
    %725 = vmatpush1.msra.mxu0 0.0
    %726 = vmatprep.subr.mxu0 0.0
    %727 = vmatpush1.msra.mxu0 0.0
    %728 = vmatprep.subr.mxu0 0.0
    %729 = vmatpush1.msra.mxu0 0.0
    %730 = vmatprep.subr.mxu0 0.0
    %731 = vmatpush1.msra.mxu0 0.0
    %732 = vmatprep.subr.mxu0 0.0
    %733 = vmatpush1.msra.mxu0 0.0
    %734 = vmatprep.subr.mxu0 0.0
    %735 = vmatpush1.msra.mxu0 0.0
    %736 = vmatprep.subr.mxu0 0.0
    %737 = vmatpush1.msra.mxu0 0.0
    %738 = vmatprep.subr.mxu0 0.0
    %739 = vmatpush1.msra.mxu0 0.0
    %740 = vmatprep.subr.mxu0 0.0
    %741 = vmatpush1.msra.mxu0 0.0
    %742 = vmatprep.subr.mxu0 0.0
    %743 = vmatpush1.msra.mxu0 0.0
    %744 = vmatprep.subr.mxu0 0.0
    %745 = vmatpush1.msra.mxu0 0.0
    %746 = vmatprep.subr.mxu0 0.0
    %747 = vmatpush1.msra.mxu0 0.0
    %748 = vmatprep.mubr.f32.mxu0 0.0
    %v749 = vand.u32 %v594, 4294901760
    %750 = vmatmul.mubr.f32.gmra.mrb[0].mxu0 %v749
    %v751 = vpop.f32.mrb[0].mxu0
    %v752 = vadd.f32 %v670, %v751
    %v753 = vpop.f32.mrb[0].mxu0
    %v754 = vadd.f32 %v672, %v753
    %755 = vdwg.mxu0
    %v756 = vand.u32 %v584, 4294901760
    %v757 = vsub.f32 %v584, %v756
    %758 = vmatprep.subr.mxu0 %v757
    %v759 = vand.u32 %v583, 4294901760
    %v760 = vsub.f32 %v583, %v759
    %761 = vmatpush1.msra.mxu0 %v760
    %762 = vmatprep.subr.mxu0 0.0
    %763 = vmatpush1.msra.mxu0 0.0
    %764 = vmatprep.subr.mxu0 0.0
    %765 = vmatpush1.msra.mxu0 0.0
    %766 = vmatprep.subr.mxu0 0.0
    %767 = vmatpush1.msra.mxu0 0.0
    %768 = vmatprep.subr.mxu0 0.0
    %769 = vmatpush1.msra.mxu0 0.0
    %770 = vmatprep.subr.mxu0 0.0
    %771 = vmatpush1.msra.mxu0 0.0
    %772 = vmatprep.subr.mxu0 0.0
    %773 = vmatpush1.msra.mxu0 0.0
    %774 = vmatprep.subr.mxu0 0.0
    %775 = vmatpush1.msra.mxu0 0.0
    %776 = vmatprep.subr.mxu0 0.0
    %777 = vmatpush1.msra.mxu0 0.0
    %778 = vmatprep.subr.mxu0 0.0
    %779 = vmatpush1.msra.mxu0 0.0
    %780 = vmatprep.subr.mxu0 0.0
    %781 = vmatpush1.msra.mxu0 0.0
    %782 = vmatprep.subr.mxu0 0.0
    %783 = vmatpush1.msra.mxu0 0.0
    %784 = vmatprep.subr.mxu0 0.0
    %785 = vmatpush1.msra.mxu0 0.0
    %786 = vmatprep.subr.mxu0 0.0
    %787 = vmatpush1.msra.mxu0 0.0
    %788 = vmatprep.subr.mxu0 0.0
    %789 = vmatpush1.msra.mxu0 0.0
    %790 = vmatprep.subr.mxu0 0.0
    %791 = vmatpush1.msra.mxu0 0.0
    %792 = vmatprep.subr.mxu0 0.0
    %793 = vmatpush1.msra.mxu0 0.0
    %794 = vmatprep.subr.mxu0 0.0
    %795 = vmatpush1.msra.mxu0 0.0
    %796 = vmatprep.subr.mxu0 0.0
    %797 = vmatpush1.msra.mxu0 0.0
    %798 = vmatprep.subr.mxu0 0.0
    %799 = vmatpush1.msra.mxu0 0.0
    %800 = vmatprep.subr.mxu0 0.0
    %801 = vmatpush1.msra.mxu0 0.0
    %802 = vmatprep.subr.mxu0 0.0
    %803 = vmatpush1.msra.mxu0 0.0
    %804 = vmatprep.subr.mxu0 0.0
    %805 = vmatpush1.msra.mxu0 0.0
    %806 = vmatprep.subr.mxu0 0.0
    %807 = vmatpush1.msra.mxu0 0.0
    %808 = vmatprep.subr.mxu0 0.0
    %809 = vmatpush1.msra.mxu0 0.0
    %810 = vmatprep.subr.mxu0 0.0
    %811 = vmatpush1.msra.mxu0 0.0
    %812 = vmatprep.subr.mxu0 0.0
    %813 = vmatpush1.msra.mxu0 0.0
    %814 = vmatprep.subr.mxu0 0.0
    %815 = vmatpush1.msra.mxu0 0.0
    %816 = vmatprep.subr.mxu0 0.0
    %817 = vmatpush1.msra.mxu0 0.0
    %818 = vmatprep.subr.mxu0 0.0
    %819 = vmatpush1.msra.mxu0 0.0
    %820 = vmatprep.subr.mxu0 0.0
    %821 = vmatpush1.msra.mxu0 0.0
    %822 = vmatprep.subr.mxu0 0.0
    %823 = vmatpush1.msra.mxu0 0.0
    %824 = vmatprep.mubr.f32.mxu0 0.0
    %v825 = vand.u32 %v594, 4294901760
    %v826 = vsub.f32 %v594, %v825
    %827 = vmatmul.mubr.f32.gmra.mrb[0].mxu0 %v826
    %v828 = vpop.f32.mrb[0].mxu0
    %v829 = vadd.f32 %v752, %v828
    %v830 = vpop.f32.mrb[0].mxu0
    %v831 = vadd.f32 %v754, %v830
    %832 = vdwg.mxu0
    %v833 = vand.u32 %v584, 4294901760
    %834 = vmatprep.subr.mxu0 %v833
    %v835 = vand.u32 %v583, 4294901760
    %836 = vmatpush1.msra.mxu0 %v835
    %837 = vmatprep.subr.mxu0 0.0
    %838 = vmatpush1.msra.mxu0 0.0
    %839 = vmatprep.subr.mxu0 0.0
    %840 = vmatpush1.msra.mxu0 0.0
    %841 = vmatprep.subr.mxu0 0.0
    %842 = vmatpush1.msra.mxu0 0.0
    %843 = vmatprep.subr.mxu0 0.0
    %844 = vmatpush1.msra.mxu0 0.0
    %845 = vmatprep.subr.mxu0 0.0
    %846 = vmatpush1.msra.mxu0 0.0
    %847 = vmatprep.subr.mxu0 0.0
    %848 = vmatpush1.msra.mxu0 0.0
    %849 = vmatprep.subr.mxu0 0.0
    %850 = vmatpush1.msra.mxu0 0.0
    %851 = vmatprep.subr.mxu0 0.0
    %852 = vmatpush1.msra.mxu0 0.0
    %853 = vmatprep.subr.mxu0 0.0
    %854 = vmatpush1.msra.mxu0 0.0
    %855 = vmatprep.subr.mxu0 0.0
    %856 = vmatpush1.msra.mxu0 0.0
    %857 = vmatprep.subr.mxu0 0.0
    %858 = vmatpush1.msra.mxu0 0.0
    %859 = vmatprep.subr.mxu0 0.0
    %860 = vmatpush1.msra.mxu0 0.0
    %861 = vmatprep.subr.mxu0 0.0
    %862 = vmatpush1.msra.mxu0 0.0
    %863 = vmatprep.subr.mxu0 0.0
    %864 = vmatpush1.msra.mxu0 0.0
    %865 = vmatprep.subr.mxu0 0.0
    %866 = vmatpush1.msra.mxu0 0.0
    %867 = vmatprep.subr.mxu0 0.0
    %868 = vmatpush1.msra.mxu0 0.0
    %869 = vmatprep.subr.mxu0 0.0
    %870 = vmatpush1.msra.mxu0 0.0
    %871 = vmatprep.subr.mxu0 0.0
    %872 = vmatpush1.msra.mxu0 0.0
    %873 = vmatprep.subr.mxu0 0.0
    %874 = vmatpush1.msra.mxu0 0.0
    %875 = vmatprep.subr.mxu0 0.0
    %876 = vmatpush1.msra.mxu0 0.0
    %877 = vmatprep.subr.mxu0 0.0
    %878 = vmatpush1.msra.mxu0 0.0
    %879 = vmatprep.subr.mxu0 0.0
    %880 = vmatpush1.msra.mxu0 0.0
    %881 = vmatprep.subr.mxu0 0.0
    %882 = vmatpush1.msra.mxu0 0.0
    %883 = vmatprep.subr.mxu0 0.0
    %884 = vmatpush1.msra.mxu0 0.0
    %885 = vmatprep.subr.mxu0 0.0
    %886 = vmatpush1.msra.mxu0 0.0
    %887 = vmatprep.subr.mxu0 0.0
    %888 = vmatpush1.msra.mxu0 0.0
    %889 = vmatprep.subr.mxu0 0.0
    %890 = vmatpush1.msra.mxu0 0.0
    %891 = vmatprep.subr.mxu0 0.0
    %892 = vmatpush1.msra.mxu0 0.0
    %893 = vmatprep.subr.mxu0 0.0
    %894 = vmatpush1.msra.mxu0 0.0
    %895 = vmatprep.subr.mxu0 0.0
    %896 = vmatpush1.msra.mxu0 0.0
    %897 = vmatprep.subr.mxu0 0.0
    %898 = vmatpush1.msra.mxu0 0.0
    %899 = vmatprep.mubr.f32.mxu0 0.0
    %v900 = vand.u32 %v594, 4294901760
    %v901 = vsub.f32 %v594, %v900
    %v902 = vand.u32 %v901, 4294901760
    %903 = vmatmul.mubr.f32.gmra.mrb[0].mxu0 %v902
    %v904 = vpop.f32.mrb[0].mxu0
    %v905 = vadd.f32 %v829, %v904
    %v906 = vpop.f32.mrb[0].mxu0
    %v907 = vadd.f32 %v831, %v906
    %908 = vdwg.mxu0
    %v909 = vand.u32 %v584, 4294901760
    %v910 = vsub.f32 %v584, %v909
    %v911 = vand.u32 %v910, 4294901760
    %912 = vmatprep.subr.mxu0 %v911
    %v913 = vand.u32 %v583, 4294901760
    %v914 = vsub.f32 %v583, %v913
    %v915 = vand.u32 %v914, 4294901760
    %916 = vmatpush1.msra.mxu0 %v915
    %917 = vmatprep.subr.mxu0 0.0
    %918 = vmatpush1.msra.mxu0 0.0
    %919 = vmatprep.subr.mxu0 0.0
    %920 = vmatpush1.msra.mxu0 0.0
    %921 = vmatprep.subr.mxu0 0.0
    %922 = vmatpush1.msra.mxu0 0.0
    %923 = vmatprep.subr.mxu0 0.0
    %924 = vmatpush1.msra.mxu0 0.0
    %925 = vmatprep.subr.mxu0 0.0
    %926 = vmatpush1.msra.mxu0 0.0
    %927 = vmatprep.subr.mxu0 0.0
    %928 = vmatpush1.msra.mxu0 0.0
    %929 = vmatprep.subr.mxu0 0.0
    %930 = vmatpush1.msra.mxu0 0.0
    %931 = vmatprep.subr.mxu0 0.0
    %932 = vmatpush1.msra.mxu0 0.0
    %933 = vmatprep.subr.mxu0 0.0
    %934 = vmatpush1.msra.mxu0 0.0
    %935 = vmatprep.subr.mxu0 0.0
    %936 = vmatpush1.msra.mxu0 0.0
    %937 = vmatprep.subr.mxu0 0.0
    %938 = vmatpush1.msra.mxu0 0.0
    %939 = vmatprep.subr.mxu0 0.0
    %940 = vmatpush1.msra.mxu0 0.0
    %941 = vmatprep.subr.mxu0 0.0
    %942 = vmatpush1.msra.mxu0 0.0
    %943 = vmatprep.subr.mxu0 0.0
    %944 = vmatpush1.msra.mxu0 0.0
    %945 = vmatprep.subr.mxu0 0.0
    %946 = vmatpush1.msra.mxu0 0.0
    %947 = vmatprep.subr.mxu0 0.0
    %948 = vmatpush1.msra.mxu0 0.0
    %949 = vmatprep.subr.mxu0 0.0
    %950 = vmatpush1.msra.mxu0 0.0
    %951 = vmatprep.subr.mxu0 0.0
    %952 = vmatpush1.msra.mxu0 0.0
    %953 = vmatprep.subr.mxu0 0.0
    %954 = vmatpush1.msra.mxu0 0.0
    %955 = vmatprep.subr.mxu0 0.0
    %956 = vmatpush1.msra.mxu0 0.0
    %957 = vmatprep.subr.mxu0 0.0
    %958 = vmatpush1.msra.mxu0 0.0
    %959 = vmatprep.subr.mxu0 0.0
    %960 = vmatpush1.msra.mxu0 0.0
    %961 = vmatprep.subr.mxu0 0.0
    %962 = vmatpush1.msra.mxu0 0.0
    %963 = vmatprep.subr.mxu0 0.0
    %964 = vmatpush1.msra.mxu0 0.0
    %965 = vmatprep.subr.mxu0 0.0
    %966 = vmatpush1.msra.mxu0 0.0
    %967 = vmatprep.subr.mxu0 0.0
    %968 = vmatpush1.msra.mxu0 0.0
    %969 = vmatprep.subr.mxu0 0.0
    %970 = vmatpush1.msra.mxu0 0.0
    %971 = vmatprep.subr.mxu0 0.0
    %972 = vmatpush1.msra.mxu0 0.0
    %973 = vmatprep.subr.mxu0 0.0
    %974 = vmatpush1.msra.mxu0 0.0
    %975 = vmatprep.subr.mxu0 0.0
    %976 = vmatpush1.msra.mxu0 0.0
    %977 = vmatprep.subr.mxu0 0.0
    %978 = vmatpush1.msra.mxu0 0.0
    %979 = vmatprep.mubr.f32.mxu0 0.0
    %v980 = vand.u32 %v594, 4294901760
    %981 = vmatmul.mubr.f32.gmra.mrb[0].mxu0 %v980
    %v982 = vpop.f32.mrb[0].mxu0
    %v983 = vadd.f32 %v905, %v982
    %v984 = vpop.f32.mrb[0].mxu0
    %v985 = vadd.f32 %v907, %v984
    %986 = vdwg.mxu0
    %v987 = vand.u32 %v584, 4294901760
    %988 = vmatprep.subr.mxu0 %v987
    %v989 = vand.u32 %v583, 4294901760
    %990 = vmatpush1.msra.mxu0 %v989
    %991 = vmatprep.subr.mxu0 0.0
    %992 = vmatpush1.msra.mxu0 0.0
    %993 = vmatprep.subr.mxu0 0.0
    %994 = vmatpush1.msra.mxu0 0.0
    %995 = vmatprep.subr.mxu0 0.0
    %996 = vmatpush1.msra.mxu0 0.0
    %997 = vmatprep.subr.mxu0 0.0
    %998 = vmatpush1.msra.mxu0 0.0
    %999 = vmatprep.subr.mxu0 0.0
    %1000 = vmatpush1.msra.mxu0 0.0
    %1001 = vmatprep.subr.mxu0 0.0
    %1002 = vmatpush1.msra.mxu0 0.0
    %1003 = vmatprep.subr.mxu0 0.0
    %1004 = vmatpush1.msra.mxu0 0.0
    %1005 = vmatprep.subr.mxu0 0.0
    %1006 = vmatpush1.msra.mxu0 0.0
    %1007 = vmatprep.subr.mxu0 0.0
    %1008 = vmatpush1.msra.mxu0 0.0
    %1009 = vmatprep.subr.mxu0 0.0
    %1010 = vmatpush1.msra.mxu0 0.0
    %1011 = vmatprep.subr.mxu0 0.0
    %1012 = vmatpush1.msra.mxu0 0.0
    %1013 = vmatprep.subr.mxu0 0.0
    %1014 = vmatpush1.msra.mxu0 0.0
    %1015 = vmatprep.subr.mxu0 0.0
    %1016 = vmatpush1.msra.mxu0 0.0
    %1017 = vmatprep.subr.mxu0 0.0
    %1018 = vmatpush1.msra.mxu0 0.0
    %1019 = vmatprep.subr.mxu0 0.0
    %1020 = vmatpush1.msra.mxu0 0.0
    %1021 = vmatprep.subr.mxu0 0.0
    %1022 = vmatpush1.msra.mxu0 0.0
    %1023 = vmatprep.subr.mxu0 0.0
    %1024 = vmatpush1.msra.mxu0 0.0
    %1025 = vmatprep.subr.mxu0 0.0
    %1026 = vmatpush1.msra.mxu0 0.0
    %1027 = vmatprep.subr.mxu0 0.0
    %1028 = vmatpush1.msra.mxu0 0.0
    %1029 = vmatprep.subr.mxu0 0.0
    %1030 = vmatpush1.msra.mxu0 0.0
    %1031 = vmatprep.subr.mxu0 0.0
    %1032 = vmatpush1.msra.mxu0 0.0
    %1033 = vmatprep.subr.mxu0 0.0
    %1034 = vmatpush1.msra.mxu0 0.0
    %1035 = vmatprep.subr.mxu0 0.0
    %1036 = vmatpush1.msra.mxu0 0.0
    %1037 = vmatprep.subr.mxu0 0.0
    %1038 = vmatpush1.msra.mxu0 0.0
    %1039 = vmatprep.subr.mxu0 0.0
    %1040 = vmatpush1.msra.mxu0 0.0
    %1041 = vmatprep.subr.mxu0 0.0
    %1042 = vmatpush1.msra.mxu0 0.0
    %1043 = vmatprep.subr.mxu0 0.0
    %1044 = vmatpush1.msra.mxu0 0.0
    %1045 = vmatprep.subr.mxu0 0.0
    %1046 = vmatpush1.msra.mxu0 0.0
    %1047 = vmatprep.subr.mxu0 0.0
    %1048 = vmatpush1.msra.mxu0 0.0
    %1049 = vmatprep.subr.mxu0 0.0
    %1050 = vmatpush1.msra.mxu0 0.0
    %1051 = vmatprep.subr.mxu0 0.0
    %1052 = vmatpush1.msra.mxu0 0.0
    %1053 = vmatprep.mubr.f32.mxu0 0.0
    %v1054 = vand.u32 %v594, 4294901760
    %1055 = vmatmul.mubr.f32.gmra.mrb[0].mxu0 %v1054
    %v1056 = vpop.f32.mrb[0].mxu0
    %v1057 = vadd.f32 %v983, %v1056
    %v1058 = vpop.f32.mrb[0].mxu0
    %v1059 = vadd.f32 %v985, %v1058
    %1060 = vdwg.mxu0
    %v1061 = vmax.f32 %v1057, 0.0
    %v1062 = vmax.f32 %v1059, 0.0
    %v1063 = vld [vmem:[#allocation7] sm:$0xf]
    %v1064 = vld [vmem:[#allocation9] sm:$0xf]
    %1066 = vset.pattern.permute.xlu0 0
    %1067 = vperm.xlu0 %1066, %v1064
    %v1068 = vpop.permute.xlu0 %1067
    %v1071 = vsel %vm592, %v1063, 0
    %v1073 = vand.u32 %v1062, 4294901760
    %1074 = vmatprep.subr.mxu0 %v1073
    %v1075 = vand.u32 %v1061, 4294901760
    %1076 = vmatpush1.msra.mxu0 %v1075
    %1077 = vmatprep.subr.mxu0 0.0
    %1078 = vmatpush1.msra.mxu0 0.0
    %1079 = vmatprep.subr.mxu0 0.0
    %1080 = vmatpush1.msra.mxu0 0.0
    %1081 = vmatprep.subr.mxu0 0.0
    %1082 = vmatpush1.msra.mxu0 0.0
    %1083 = vmatprep.subr.mxu0 0.0
    %1084 = vmatpush1.msra.mxu0 0.0
    %1085 = vmatprep.subr.mxu0 0.0
    %1086 = vmatpush1.msra.mxu0 0.0
    %1087 = vmatprep.subr.mxu0 0.0
    %1088 = vmatpush1.msra.mxu0 0.0
    %1089 = vmatprep.subr.mxu0 0.0
    %1090 = vmatpush1.msra.mxu0 0.0
    %1091 = vmatprep.subr.mxu0 0.0
    %1092 = vmatpush1.msra.mxu0 0.0
    %1093 = vmatprep.subr.mxu0 0.0
    %1094 = vmatpush1.msra.mxu0 0.0
    %1095 = vmatprep.subr.mxu0 0.0
    %1096 = vmatpush1.msra.mxu0 0.0
    %1097 = vmatprep.subr.mxu0 0.0
    %1098 = vmatpush1.msra.mxu0 0.0
    %1099 = vmatprep.subr.mxu0 0.0
    %1100 = vmatpush1.msra.mxu0 0.0
    %1101 = vmatprep.subr.mxu0 0.0
    %1102 = vmatpush1.msra.mxu0 0.0
    %1103 = vmatprep.subr.mxu0 0.0
    %1104 = vmatpush1.msra.mxu0 0.0
    %1105 = vmatprep.subr.mxu0 0.0
    %1106 = vmatpush1.msra.mxu0 0.0
    %1107 = vmatprep.subr.mxu0 0.0
    %1108 = vmatpush1.msra.mxu0 0.0
    %1109 = vmatprep.subr.mxu0 0.0
    %1110 = vmatpush1.msra.mxu0 0.0
    %1111 = vmatprep.subr.mxu0 0.0
    %1112 = vmatpush1.msra.mxu0 0.0
    %1113 = vmatprep.subr.mxu0 0.0
    %1114 = vmatpush1.msra.mxu0 0.0
    %1115 = vmatprep.subr.mxu0 0.0
    %1116 = vmatpush1.msra.mxu0 0.0
    %1117 = vmatprep.subr.mxu0 0.0
    %1118 = vmatpush1.msra.mxu0 0.0
    %1119 = vmatprep.subr.mxu0 0.0
    %1120 = vmatpush1.msra.mxu0 0.0
    %1121 = vmatprep.subr.mxu0 0.0
    %1122 = vmatpush1.msra.mxu0 0.0
    %1123 = vmatprep.subr.mxu0 0.0
    %1124 = vmatpush1.msra.mxu0 0.0
    %1125 = vmatprep.subr.mxu0 0.0
    %1126 = vmatpush1.msra.mxu0 0.0
    %1127 = vmatprep.subr.mxu0 0.0
    %1128 = vmatpush1.msra.mxu0 0.0
    %1129 = vmatprep.subr.mxu0 0.0
    %1130 = vmatpush1.msra.mxu0 0.0
    %1131 = vmatprep.subr.mxu0 0.0
    %1132 = vmatpush1.msra.mxu0 0.0
    %1133 = vmatprep.subr.mxu0 0.0
    %1134 = vmatpush1.msra.mxu0 0.0
    %1135 = vmatprep.subr.mxu0 0.0
    %1136 = vmatpush1.msra.mxu0 0.0
    %1137 = vmatprep.subr.mxu0 0.0
    %1138 = vmatpush1.msra.mxu0 0.0
    %1139 = vmatprep.mubr.f32.mxu0 0.0
    %v1140 = vand.u32 %v1071, 4294901760
    %v1141 = vsub.f32 %v1071, %v1140
    %v1142 = vand.u32 %v1141, 4294901760
    %v1143 = vsub.f32 %v1141, %v1142
    %v1144 = vand.u32 %v1143, 4294901760
    %1145 = vmatmul.mubr.f32.gmra.mrb[0].mxu0 %v1144
    %v1146 = vpop.f32.mrb[0].mxu0
    %v1147 = vadd.f32 %v1068, %v1146
    %v1148 = vpop.f32.mrb[0].mxu0
    %v1149 = vadd.f32 %v1068, %v1148
    %1150 = vdwg.mxu0
    %v1151 = vand.u32 %v1062, 4294901760
    %v1152 = vsub.f32 %v1062, %v1151
    %v1153 = vand.u32 %v1152, 4294901760
    %v1154 = vsub.f32 %v1152, %v1153
    %v1155 = vand.u32 %v1154, 4294901760
    %1156 = vmatprep.subr.mxu0 %v1155
    %v1157 = vand.u32 %v1061, 4294901760
    %v1158 = vsub.f32 %v1061, %v1157
    %v1159 = vand.u32 %v1158, 4294901760
    %v1160 = vsub.f32 %v1158, %v1159
    %v1161 = vand.u32 %v1160, 4294901760
    %1162 = vmatpush1.msra.mxu0 %v1161
    %1163 = vmatprep.subr.mxu0 0.0
    %1164 = vmatpush1.msra.mxu0 0.0
    %1165 = vmatprep.subr.mxu0 0.0
    %1166 = vmatpush1.msra.mxu0 0.0
    %1167 = vmatprep.subr.mxu0 0.0
    %1168 = vmatpush1.msra.mxu0 0.0
    %1169 = vmatprep.subr.mxu0 0.0
    %1170 = vmatpush1.msra.mxu0 0.0
    %1171 = vmatprep.subr.mxu0 0.0
    %1172 = vmatpush1.msra.mxu0 0.0
    %1173 = vmatprep.subr.mxu0 0.0
    %1174 = vmatpush1.msra.mxu0 0.0
    %1175 = vmatprep.subr.mxu0 0.0
    %1176 = vmatpush1.msra.mxu0 0.0
    %1177 = vmatprep.subr.mxu0 0.0
    %1178 = vmatpush1.msra.mxu0 0.0
    %1179 = vmatprep.subr.mxu0 0.0
    %1180 = vmatpush1.msra.mxu0 0.0
    %1181 = vmatprep.subr.mxu0 0.0
    %1182 = vmatpush1.msra.mxu0 0.0
    %1183 = vmatprep.subr.mxu0 0.0
    %1184 = vmatpush1.msra.mxu0 0.0
    %1185 = vmatprep.subr.mxu0 0.0
    %1186 = vmatpush1.msra.mxu0 0.0
    %1187 = vmatprep.subr.mxu0 0.0
    %1188 = vmatpush1.msra.mxu0 0.0
    %1189 = vmatprep.subr.mxu0 0.0
    %1190 = vmatpush1.msra.mxu0 0.0
    %1191 = vmatprep.subr.mxu0 0.0
    %1192 = vmatpush1.msra.mxu0 0.0
    %1193 = vmatprep.subr.mxu0 0.0
    %1194 = vmatpush1.msra.mxu0 0.0
    %1195 = vmatprep.subr.mxu0 0.0
    %1196 = vmatpush1.msra.mxu0 0.0
    %1197 = vmatprep.subr.mxu0 0.0
    %1198 = vmatpush1.msra.mxu0 0.0
    %1199 = vmatprep.subr.mxu0 0.0
    %1200 = vmatpush1.msra.mxu0 0.0
    %1201 = vmatprep.subr.mxu0 0.0
    %1202 = vmatpush1.msra.mxu0 0.0
    %1203 = vmatprep.subr.mxu0 0.0
    %1204 = vmatpush1.msra.mxu0 0.0
    %1205 = vmatprep.subr.mxu0 0.0
    %1206 = vmatpush1.msra.mxu0 0.0
    %1207 = vmatprep.subr.mxu0 0.0
    %1208 = vmatpush1.msra.mxu0 0.0
    %1209 = vmatprep.subr.mxu0 0.0
    %1210 = vmatpush1.msra.mxu0 0.0
    %1211 = vmatprep.subr.mxu0 0.0
    %1212 = vmatpush1.msra.mxu0 0.0
    %1213 = vmatprep.subr.mxu0 0.0
    %1214 = vmatpush1.msra.mxu0 0.0
    %1215 = vmatprep.subr.mxu0 0.0
    %1216 = vmatpush1.msra.mxu0 0.0
    %1217 = vmatprep.subr.mxu0 0.0
    %1218 = vmatpush1.msra.mxu0 0.0
    %1219 = vmatprep.subr.mxu0 0.0
    %1220 = vmatpush1.msra.mxu0 0.0
    %1221 = vmatprep.subr.mxu0 0.0
    %1222 = vmatpush1.msra.mxu0 0.0
    %1223 = vmatprep.subr.mxu0 0.0
    %1224 = vmatpush1.msra.mxu0 0.0
    %1225 = vmatprep.mubr.f32.mxu0 0.0
    %v1226 = vand.u32 %v1071, 4294901760
    %1227 = vmatmul.mubr.f32.gmra.mrb[0].mxu0 %v1226
    %v1228 = vpop.f32.mrb[0].mxu0
    %v1229 = vadd.f32 %v1147, %v1228
    %v1230 = vpop.f32.mrb[0].mxu0
    %v1231 = vadd.f32 %v1149, %v1230
    %1232 = vdwg.mxu0
    %v1233 = vand.u32 %v1062, 4294901760
    %v1234 = vsub.f32 %v1062, %v1233
    %1235 = vmatprep.subr.mxu0 %v1234
    %v1236 = vand.u32 %v1061, 4294901760
    %v1237 = vsub.f32 %v1061, %v1236
    %1238 = vmatpush1.msra.mxu0 %v1237
    %1239 = vmatprep.subr.mxu0 0.0
    %1240 = vmatpush1.msra.mxu0 0.0
    %1241 = vmatprep.subr.mxu0 0.0
    %1242 = vmatpush1.msra.mxu0 0.0
    %1243 = vmatprep.subr.mxu0 0.0
    %1244 = vmatpush1.msra.mxu0 0.0
    %1245 = vmatprep.subr.mxu0 0.0
    %1246 = vmatpush1.msra.mxu0 0.0
    %1247 = vmatprep.subr.mxu0 0.0
    %1248 = vmatpush1.msra.mxu0 0.0
    %1249 = vmatprep.subr.mxu0 0.0
    %1250 = vmatpush1.msra.mxu0 0.0
    %1251 = vmatprep.subr.mxu0 0.0
    %1252 = vmatpush1.msra.mxu0 0.0
    %1253 = vmatprep.subr.mxu0 0.0
    %1254 = vmatpush1.msra.mxu0 0.0
    %1255 = vmatprep.subr.mxu0 0.0
    %1256 = vmatpush1.msra.mxu0 0.0
    %1257 = vmatprep.subr.mxu0 0.0
    %1258 = vmatpush1.msra.mxu0 0.0
    %1259 = vmatprep.subr.mxu0 0.0
    %1260 = vmatpush1.msra.mxu0 0.0
    %1261 = vmatprep.subr.mxu0 0.0
    %1262 = vmatpush1.msra.mxu0 0.0
    %1263 = vmatprep.subr.mxu0 0.0
    %1264 = vmatpush1.msra.mxu0 0.0
    %1265 = vmatprep.subr.mxu0 0.0
    %1266 = vmatpush1.msra.mxu0 0.0
    %1267 = vmatprep.subr.mxu0 0.0
    %1268 = vmatpush1.msra.mxu0 0.0
    %1269 = vmatprep.subr.mxu0 0.0
    %1270 = vmatpush1.msra.mxu0 0.0
    %1271 = vmatprep.subr.mxu0 0.0
    %1272 = vmatpush1.msra.mxu0 0.0
    %1273 = vmatprep.subr.mxu0 0.0
    %1274 = vmatpush1.msra.mxu0 0.0
    %1275 = vmatprep.subr.mxu0 0.0
    %1276 = vmatpush1.msra.mxu0 0.0
    %1277 = vmatprep.subr.mxu0 0.0
    %1278 = vmatpush1.msra.mxu0 0.0
    %1279 = vmatprep.subr.mxu0 0.0
    %1280 = vmatpush1.msra.mxu0 0.0
    %1281 = vmatprep.subr.mxu0 0.0
    %1282 = vmatpush1.msra.mxu0 0.0
    %1283 = vmatprep.subr.mxu0 0.0
    %1284 = vmatpush1.msra.mxu0 0.0
    %1285 = vmatprep.subr.mxu0 0.0
    %1286 = vmatpush1.msra.mxu0 0.0
    %1287 = vmatprep.subr.mxu0 0.0
    %1288 = vmatpush1.msra.mxu0 0.0
    %1289 = vmatprep.subr.mxu0 0.0
    %1290 = vmatpush1.msra.mxu0 0.0
    %1291 = vmatprep.subr.mxu0 0.0
    %1292 = vmatpush1.msra.mxu0 0.0
    %1293 = vmatprep.subr.mxu0 0.0
    %1294 = vmatpush1.msra.mxu0 0.0
    %1295 = vmatprep.subr.mxu0 0.0
    %1296 = vmatpush1.msra.mxu0 0.0
    %1297 = vmatprep.subr.mxu0 0.0
    %1298 = vmatpush1.msra.mxu0 0.0
    %1299 = vmatprep.subr.mxu0 0.0
    %1300 = vmatpush1.msra.mxu0 0.0
    %1301 = vmatprep.mubr.f32.mxu0 0.0
    %v1302 = vand.u32 %v1071, 4294901760
    %v1303 = vsub.f32 %v1071, %v1302
    %1304 = vmatmul.mubr.f32.gmra.mrb[0].mxu0 %v1303
    %v1305 = vpop.f32.mrb[0].mxu0
    %v1306 = vadd.f32 %v1229, %v1305
    %v1307 = vpop.f32.mrb[0].mxu0
    %v1308 = vadd.f32 %v1231, %v1307
    %1309 = vdwg.mxu0
    %v1310 = vand.u32 %v1062, 4294901760
    %1311 = vmatprep.subr.mxu0 %v1310
    %v1312 = vand.u32 %v1061, 4294901760
    %1313 = vmatpush1.msra.mxu0 %v1312
    %1314 = vmatprep.subr.mxu0 0.0
    %1315 = vmatpush1.msra.mxu0 0.0
    %1316 = vmatprep.subr.mxu0 0.0
    %1317 = vmatpush1.msra.mxu0 0.0
    %1318 = vmatprep.subr.mxu0 0.0
    %1319 = vmatpush1.msra.mxu0 0.0
    %1320 = vmatprep.subr.mxu0 0.0
    %1321 = vmatpush1.msra.mxu0 0.0
    %1322 = vmatprep.subr.mxu0 0.0
    %1323 = vmatpush1.msra.mxu0 0.0
    %1324 = vmatprep.subr.mxu0 0.0
    %1325 = vmatpush1.msra.mxu0 0.0
    %1326 = vmatprep.subr.mxu0 0.0
    %1327 = vmatpush1.msra.mxu0 0.0
    %1328 = vmatprep.subr.mxu0 0.0
    %1329 = vmatpush1.msra.mxu0 0.0
    %1330 = vmatprep.subr.mxu0 0.0
    %1331 = vmatpush1.msra.mxu0 0.0
    %1332 = vmatprep.subr.mxu0 0.0
    %1333 = vmatpush1.msra.mxu0 0.0
    %1334 = vmatprep.subr.mxu0 0.0
    %1335 = vmatpush1.msra.mxu0 0.0
    %1336 = vmatprep.subr.mxu0 0.0
    %1337 = vmatpush1.msra.mxu0 0.0
    %1338 = vmatprep.subr.mxu0 0.0
    %1339 = vmatpush1.msra.mxu0 0.0
    %1340 = vmatprep.subr.mxu0 0.0
    %1341 = vmatpush1.msra.mxu0 0.0
    %1342 = vmatprep.subr.mxu0 0.0
    %1343 = vmatpush1.msra.mxu0 0.0
    %1344 = vmatprep.subr.mxu0 0.0
    %1345 = vmatpush1.msra.mxu0 0.0
    %1346 = vmatprep.subr.mxu0 0.0
    %1347 = vmatpush1.msra.mxu0 0.0
    %1348 = vmatprep.subr.mxu0 0.0
    %1349 = vmatpush1.msra.mxu0 0.0
    %1350 = vmatprep.subr.mxu0 0.0
    %1351 = vmatpush1.msra.mxu0 0.0
    %1352 = vmatprep.subr.mxu0 0.0
    %1353 = vmatpush1.msra.mxu0 0.0
    %1354 = vmatprep.subr.mxu0 0.0
    %1355 = vmatpush1.msra.mxu0 0.0
    %1356 = vmatprep.subr.mxu0 0.0
    %1357 = vmatpush1.msra.mxu0 0.0
    %1358 = vmatprep.subr.mxu0 0.0
    %1359 = vmatpush1.msra.mxu0 0.0
    %1360 = vmatprep.subr.mxu0 0.0
    %1361 = vmatpush1.msra.mxu0 0.0
    %1362 = vmatprep.subr.mxu0 0.0
    %1363 = vmatpush1.msra.mxu0 0.0
    %1364 = vmatprep.subr.mxu0 0.0
    %1365 = vmatpush1.msra.mxu0 0.0
    %1366 = vmatprep.subr.mxu0 0.0
    %1367 = vmatpush1.msra.mxu0 0.0
    %1368 = vmatprep.subr.mxu0 0.0
    %1369 = vmatpush1.msra.mxu0 0.0
    %1370 = vmatprep.subr.mxu0 0.0
    %1371 = vmatpush1.msra.mxu0 0.0
    %1372 = vmatprep.subr.mxu0 0.0
    %1373 = vmatpush1.msra.mxu0 0.0
    %1374 = vmatprep.subr.mxu0 0.0
    %1375 = vmatpush1.msra.mxu0 0.0
    %1376 = vmatprep.mubr.f32.mxu0 0.0
    %v1377 = vand.u32 %v1071, 4294901760
    %v1378 = vsub.f32 %v1071, %v1377
    %v1379 = vand.u32 %v1378, 4294901760
    %1380 = vmatmul.mubr.f32.gmra.mrb[0].mxu0 %v1379
    %v1381 = vpop.f32.mrb[0].mxu0
    %v1382 = vadd.f32 %v1306, %v1381
    %v1383 = vpop.f32.mrb[0].mxu0
    %v1384 = vadd.f32 %v1308, %v1383
    %1385 = vdwg.mxu0
    %v1386 = vand.u32 %v1062, 4294901760
    %v1387 = vsub.f32 %v1062, %v1386
    %v1388 = vand.u32 %v1387, 4294901760
    %1389 = vmatprep.subr.mxu0 %v1388
    %v1390 = vand.u32 %v1061, 4294901760
    %v1391 = vsub.f32 %v1061, %v1390
    %v1392 = vand.u32 %v1391, 4294901760
    %1393 = vmatpush1.msra.mxu0 %v1392
    %1394 = vmatprep.subr.mxu0 0.0
    %1395 = vmatpush1.msra.mxu0 0.0
    %1396 = vmatprep.subr.mxu0 0.0
    %1397 = vmatpush1.msra.mxu0 0.0
    %1398 = vmatprep.subr.mxu0 0.0
    %1399 = vmatpush1.msra.mxu0 0.0
    %1400 = vmatprep.subr.mxu0 0.0
    %1401 = vmatpush1.msra.mxu0 0.0
    %1402 = vmatprep.subr.mxu0 0.0
    %1403 = vmatpush1.msra.mxu0 0.0
    %1404 = vmatprep.subr.mxu0 0.0
    %1405 = vmatpush1.msra.mxu0 0.0
    %1406 = vmatprep.subr.mxu0 0.0
    %1407 = vmatpush1.msra.mxu0 0.0
    %1408 = vmatprep.subr.mxu0 0.0
    %1409 = vmatpush1.msra.mxu0 0.0
    %1410 = vmatprep.subr.mxu0 0.0
    %1411 = vmatpush1.msra.mxu0 0.0
    %1412 = vmatprep.subr.mxu0 0.0
    %1413 = vmatpush1.msra.mxu0 0.0
    %1414 = vmatprep.subr.mxu0 0.0
    %1415 = vmatpush1.msra.mxu0 0.0
    %1416 = vmatprep.subr.mxu0 0.0
    %1417 = vmatpush1.msra.mxu0 0.0
    %1418 = vmatprep.subr.mxu0 0.0
    %1419 = vmatpush1.msra.mxu0 0.0
    %1420 = vmatprep.subr.mxu0 0.0
    %1421 = vmatpush1.msra.mxu0 0.0
    %1422 = vmatprep.subr.mxu0 0.0
    %1423 = vmatpush1.msra.mxu0 0.0
    %1424 = vmatprep.subr.mxu0 0.0
    %1425 = vmatpush1.msra.mxu0 0.0
    %1426 = vmatprep.subr.mxu0 0.0
    %1427 = vmatpush1.msra.mxu0 0.0
    %1428 = vmatprep.subr.mxu0 0.0
    %1429 = vmatpush1.msra.mxu0 0.0
    %1430 = vmatprep.subr.mxu0 0.0
    %1431 = vmatpush1.msra.mxu0 0.0
    %1432 = vmatprep.subr.mxu0 0.0
    %1433 = vmatpush1.msra.mxu0 0.0
    %1434 = vmatprep.subr.mxu0 0.0
    %1435 = vmatpush1.msra.mxu0 0.0
    %1436 = vmatprep.subr.mxu0 0.0
    %1437 = vmatpush1.msra.mxu0 0.0
    %1438 = vmatprep.subr.mxu0 0.0
    %1439 = vmatpush1.msra.mxu0 0.0
    %1440 = vmatprep.subr.mxu0 0.0
    %1441 = vmatpush1.msra.mxu0 0.0
    %1442 = vmatprep.subr.mxu0 0.0
    %1443 = vmatpush1.msra.mxu0 0.0
    %1444 = vmatprep.subr.mxu0 0.0
    %1445 = vmatpush1.msra.mxu0 0.0
    %1446 = vmatprep.subr.mxu0 0.0
    %1447 = vmatpush1.msra.mxu0 0.0
    %1448 = vmatprep.subr.mxu0 0.0
    %1449 = vmatpush1.msra.mxu0 0.0
    %1450 = vmatprep.subr.mxu0 0.0
    %1451 = vmatpush1.msra.mxu0 0.0
    %1452 = vmatprep.subr.mxu0 0.0
    %1453 = vmatpush1.msra.mxu0 0.0
    %1454 = vmatprep.subr.mxu0 0.0
    %1455 = vmatpush1.msra.mxu0 0.0
    %1456 = vmatprep.mubr.f32.mxu0 0.0
    %v1457 = vand.u32 %v1071, 4294901760
    %1458 = vmatmul.mubr.f32.gmra.mrb[0].mxu0 %v1457
    %v1459 = vpop.f32.mrb[0].mxu0
    %v1460 = vadd.f32 %v1382, %v1459
    %v1461 = vpop.f32.mrb[0].mxu0
    %v1462 = vadd.f32 %v1384, %v1461
    %1463 = vdwg.mxu0
    %v1464 = vand.u32 %v1062, 4294901760
    %1465 = vmatprep.subr.mxu0 %v1464
    %v1466 = vand.u32 %v1061, 4294901760
    %1467 = vmatpush1.msra.mxu0 %v1466
    %1468 = vmatprep.subr.mxu0 0.0
    %1469 = vmatpush1.msra.mxu0 0.0
    %1470 = vmatprep.subr.mxu0 0.0
    %1471 = vmatpush1.msra.mxu0 0.0
    %1472 = vmatprep.subr.mxu0 0.0
    %1473 = vmatpush1.msra.mxu0 0.0
    %1474 = vmatprep.subr.mxu0 0.0
    %1475 = vmatpush1.msra.mxu0 0.0
    %1476 = vmatprep.subr.mxu0 0.0
    %1477 = vmatpush1.msra.mxu0 0.0
    %1478 = vmatprep.subr.mxu0 0.0
    %1479 = vmatpush1.msra.mxu0 0.0
    %1480 = vmatprep.subr.mxu0 0.0
    %1481 = vmatpush1.msra.mxu0 0.0
    %1482 = vmatprep.subr.mxu0 0.0
    %1483 = vmatpush1.msra.mxu0 0.0
    %1484 = vmatprep.subr.mxu0 0.0
    %1485 = vmatpush1.msra.mxu0 0.0
    %1486 = vmatprep.subr.mxu0 0.0
    %1487 = vmatpush1.msra.mxu0 0.0
    %1488 = vmatprep.subr.mxu0 0.0
    %1489 = vmatpush1.msra.mxu0 0.0
    %1490 = vmatprep.subr.mxu0 0.0
    %1491 = vmatpush1.msra.mxu0 0.0
    %1492 = vmatprep.subr.mxu0 0.0
    %1493 = vmatpush1.msra.mxu0 0.0
    %1494 = vmatprep.subr.mxu0 0.0
    %1495 = vmatpush1.msra.mxu0 0.0
    %1496 = vmatprep.subr.mxu0 0.0
    %1497 = vmatpush1.msra.mxu0 0.0
    %1498 = vmatprep.subr.mxu0 0.0
    %1499 = vmatpush1.msra.mxu0 0.0
    %1500 = vmatprep.subr.mxu0 0.0
    %1501 = vmatpush1.msra.mxu0 0.0
    %1502 = vmatprep.subr.mxu0 0.0
    %1503 = vmatpush1.msra.mxu0 0.0
    %1504 = vmatprep.subr.mxu0 0.0
    %1505 = vmatpush1.msra.mxu0 0.0
    %1506 = vmatprep.subr.mxu0 0.0
    %1507 = vmatpush1.msra.mxu0 0.0
    %1508 = vmatprep.subr.mxu0 0.0
    %1509 = vmatpush1.msra.mxu0 0.0
    %1510 = vmatprep.subr.mxu0 0.0
    %1511 = vmatpush1.msra.mxu0 0.0
    %1512 = vmatprep.subr.mxu0 0.0
    %1513 = vmatpush1.msra.mxu0 0.0
    %1514 = vmatprep.subr.mxu0 0.0
    %1515 = vmatpush1.msra.mxu0 0.0
    %1516 = vmatprep.subr.mxu0 0.0
    %1517 = vmatpush1.msra.mxu0 0.0
    %1518 = vmatprep.subr.mxu0 0.0
    %1519 = vmatpush1.msra.mxu0 0.0
    %1520 = vmatprep.subr.mxu0 0.0
    %1521 = vmatpush1.msra.mxu0 0.0
    %1522 = vmatprep.subr.mxu0 0.0
    %1523 = vmatpush1.msra.mxu0 0.0
    %1524 = vmatprep.subr.mxu0 0.0
    %1525 = vmatpush1.msra.mxu0 0.0
    %1526 = vmatprep.subr.mxu0 0.0
    %1527 = vmatpush1.msra.mxu0 0.0
    %1528 = vmatprep.subr.mxu0 0.0
    %1529 = vmatpush1.msra.mxu0 0.0
    %1530 = vmatprep.mubr.f32.mxu0 0.0
    %v1531 = vand.u32 %v1071, 4294901760
    %1532 = vmatmul.mubr.f32.gmra.mrb[0].mxu0 %v1531
    %v1533 = vpop.f32.mrb[0].mxu0
    %v1534 = vadd.f32 %v1460, %v1533
    %v1535 = vpop.f32.mrb[0].mxu0
    %v1536 = vadd.f32 %v1462, %v1535
    %1537 = vdwg.mxu0
    %v1538 = vld [vmem:[%s7] sm:$0xf]
    %v1539 = vld [vmem:[%s8] sm:$0xf]
    %1541 = vset.pattern.permute.xlu0 0
    %1542 = vperm.xlu0 %1541, %v1539
    %v1543 = vpop.permute.xlu0 %1542
    %v1546 = vsel %vm592, %v1538, 0
    %v1548 = vand.u32 %v1062, 4294901760
    %1549 = vmatprep.subr.mxu0 %v1548
    %v1550 = vand.u32 %v1061, 4294901760
    %1551 = vmatpush1.msra.mxu0 %v1550
    %1552 = vmatprep.subr.mxu0 0.0
    %1553 = vmatpush1.msra.mxu0 0.0
    %1554 = vmatprep.subr.mxu0 0.0
    %1555 = vmatpush1.msra.mxu0 0.0
    %1556 = vmatprep.subr.mxu0 0.0
    %1557 = vmatpush1.msra.mxu0 0.0
    %1558 = vmatprep.subr.mxu0 0.0
    %1559 = vmatpush1.msra.mxu0 0.0
    %1560 = vmatprep.subr.mxu0 0.0
    %1561 = vmatpush1.msra.mxu0 0.0
    %1562 = vmatprep.subr.mxu0 0.0
    %1563 = vmatpush1.msra.mxu0 0.0
    %1564 = vmatprep.subr.mxu0 0.0
    %1565 = vmatpush1.msra.mxu0 0.0
    %1566 = vmatprep.subr.mxu0 0.0
    %1567 = vmatpush1.msra.mxu0 0.0
    %1568 = vmatprep.subr.mxu0 0.0
    %1569 = vmatpush1.msra.mxu0 0.0
    %1570 = vmatprep.subr.mxu0 0.0
    %1571 = vmatpush1.msra.mxu0 0.0
    %1572 = vmatprep.subr.mxu0 0.0
    %1573 = vmatpush1.msra.mxu0 0.0
    %1574 = vmatprep.subr.mxu0 0.0
    %1575 = vmatpush1.msra.mxu0 0.0
    %1576 = vmatprep.subr.mxu0 0.0
    %1577 = vmatpush1.msra.mxu0 0.0
    %1578 = vmatprep.subr.mxu0 0.0
    %1579 = vmatpush1.msra.mxu0 0.0
    %1580 = vmatprep.subr.mxu0 0.0
    %1581 = vmatpush1.msra.mxu0 0.0
    %1582 = vmatprep.subr.mxu0 0.0
    %1583 = vmatpush1.msra.mxu0 0.0
    %1584 = vmatprep.subr.mxu0 0.0
    %1585 = vmatpush1.msra.mxu0 0.0
    %1586 = vmatprep.subr.mxu0 0.0
    %1587 = vmatpush1.msra.mxu0 0.0
    %1588 = vmatprep.subr.mxu0 0.0
    %1589 = vmatpush1.msra.mxu0 0.0
    %1590 = vmatprep.subr.mxu0 0.0
    %1591 = vmatpush1.msra.mxu0 0.0
    %1592 = vmatprep.subr.mxu0 0.0
    %1593 = vmatpush1.msra.mxu0 0.0
    %1594 = vmatprep.subr.mxu0 0.0
    %1595 = vmatpush1.msra.mxu0 0.0
    %1596 = vmatprep.subr.mxu0 0.0
    %1597 = vmatpush1.msra.mxu0 0.0
    %1598 = vmatprep.subr.mxu0 0.0
    %1599 = vmatpush1.msra.mxu0 0.0
    %1600 = vmatprep.subr.mxu0 0.0
    %1601 = vmatpush1.msra.mxu0 0.0
    %1602 = vmatprep.subr.mxu0 0.0
    %1603 = vmatpush1.msra.mxu0 0.0
    %1604 = vmatprep.subr.mxu0 0.0
    %1605 = vmatpush1.msra.mxu0 0.0
    %1606 = vmatprep.subr.mxu0 0.0
    %1607 = vmatpush1.msra.mxu0 0.0
    %1608 = vmatprep.subr.mxu0 0.0
    %1609 = vmatpush1.msra.mxu0 0.0
    %1610 = vmatprep.subr.mxu0 0.0
    %1611 = vmatpush1.msra.mxu0 0.0
    %1612 = vmatprep.subr.mxu0 0.0
    %1613 = vmatpush1.msra.mxu0 0.0
    %1614 = vmatprep.mubr.f32.mxu0 0.0
    %v1615 = vand.u32 %v1546, 4294901760
    %v1616 = vsub.f32 %v1546, %v1615
    %v1617 = vand.u32 %v1616, 4294901760
    %v1618 = vsub.f32 %v1616, %v1617
    %v1619 = vand.u32 %v1618, 4294901760
    %1620 = vmatmul.mubr.f32.gmra.mrb[0].mxu0 %v1619
    %v1621 = vpop.f32.mrb[0].mxu0
    %v1622 = vadd.f32 %v1543, %v1621
    %v1623 = vpop.f32.mrb[0].mxu0
    %v1624 = vadd.f32 %v1543, %v1623
    %1625 = vdwg.mxu0
    %v1626 = vand.u32 %v1062, 4294901760
    %v1627 = vsub.f32 %v1062, %v1626
    %v1628 = vand.u32 %v1627, 4294901760
    %v1629 = vsub.f32 %v1627, %v1628
    %v1630 = vand.u32 %v1629, 4294901760
    %1631 = vmatprep.subr.mxu0 %v1630
    %v1632 = vand.u32 %v1061, 4294901760
    %v1633 = vsub.f32 %v1061, %v1632
    %v1634 = vand.u32 %v1633, 4294901760
    %v1635 = vsub.f32 %v1633, %v1634
    %v1636 = vand.u32 %v1635, 4294901760
    %1637 = vmatpush1.msra.mxu0 %v1636
    %1638 = vmatprep.subr.mxu0 0.0
    %1639 = vmatpush1.msra.mxu0 0.0
    %1640 = vmatprep.subr.mxu0 0.0
    %1641 = vmatpush1.msra.mxu0 0.0
    %1642 = vmatprep.subr.mxu0 0.0
    %1643 = vmatpush1.msra.mxu0 0.0
    %1644 = vmatprep.subr.mxu0 0.0
    %1645 = vmatpush1.msra.mxu0 0.0
    %1646 = vmatprep.subr.mxu0 0.0
    %1647 = vmatpush1.msra.mxu0 0.0
    %1648 = vmatprep.subr.mxu0 0.0
    %1649 = vmatpush1.msra.mxu0 0.0
    %1650 = vmatprep.subr.mxu0 0.0
    %1651 = vmatpush1.msra.mxu0 0.0
    %1652 = vmatprep.subr.mxu0 0.0
    %1653 = vmatpush1.msra.mxu0 0.0
    %1654 = vmatprep.subr.mxu0 0.0
    %1655 = vmatpush1.msra.mxu0 0.0
    %1656 = vmatprep.subr.mxu0 0.0
    %1657 = vmatpush1.msra.mxu0 0.0
    %1658 = vmatprep.subr.mxu0 0.0
    %1659 = vmatpush1.msra.mxu0 0.0
    %1660 = vmatprep.subr.mxu0 0.0
    %1661 = vmatpush1.msra.mxu0 0.0
    %1662 = vmatprep.subr.mxu0 0.0
    %1663 = vmatpush1.msra.mxu0 0.0
    %1664 = vmatprep.subr.mxu0 0.0
    %1665 = vmatpush1.msra.mxu0 0.0
    %1666 = vmatprep.subr.mxu0 0.0
    %1667 = vmatpush1.msra.mxu0 0.0
    %1668 = vmatprep.subr.mxu0 0.0
    %1669 = vmatpush1.msra.mxu0 0.0
    %1670 = vmatprep.subr.mxu0 0.0
    %1671 = vmatpush1.msra.mxu0 0.0
    %1672 = vmatprep.subr.mxu0 0.0
    %1673 = vmatpush1.msra.mxu0 0.0
    %1674 = vmatprep.subr.mxu0 0.0
    %1675 = vmatpush1.msra.mxu0 0.0
    %1676 = vmatprep.subr.mxu0 0.0
    %1677 = vmatpush1.msra.mxu0 0.0
    %1678 = vmatprep.subr.mxu0 0.0
    %1679 = vmatpush1.msra.mxu0 0.0
    %1680 = vmatprep.subr.mxu0 0.0
    %1681 = vmatpush1.msra.mxu0 0.0
    %1682 = vmatprep.subr.mxu0 0.0
    %1683 = vmatpush1.msra.mxu0 0.0
    %1684 = vmatprep.subr.mxu0 0.0
    %1685 = vmatpush1.msra.mxu0 0.0
    %1686 = vmatprep.subr.mxu0 0.0
    %1687 = vmatpush1.msra.mxu0 0.0
    %1688 = vmatprep.subr.mxu0 0.0
    %1689 = vmatpush1.msra.mxu0 0.0
    %1690 = vmatprep.subr.mxu0 0.0
    %1691 = vmatpush1.msra.mxu0 0.0
    %1692 = vmatprep.subr.mxu0 0.0
    %1693 = vmatpush1.msra.mxu0 0.0
    %1694 = vmatprep.subr.mxu0 0.0
    %1695 = vmatpush1.msra.mxu0 0.0
    %1696 = vmatprep.subr.mxu0 0.0
    %1697 = vmatpush1.msra.mxu0 0.0
    %1698 = vmatprep.subr.mxu0 0.0
    %1699 = vmatpush1.msra.mxu0 0.0
    %1700 = vmatprep.mubr.f32.mxu0 0.0
    %v1701 = vand.u32 %v1546, 4294901760
    %1702 = vmatmul.mubr.f32.gmra.mrb[0].mxu0 %v1701
    %v1703 = vpop.f32.mrb[0].mxu0
    %v1704 = vadd.f32 %v1622, %v1703
    %v1705 = vpop.f32.mrb[0].mxu0
    %v1706 = vadd.f32 %v1624, %v1705
    %1707 = vdwg.mxu0
    %v1708 = vand.u32 %v1062, 4294901760
    %v1709 = vsub.f32 %v1062, %v1708
    %1710 = vmatprep.subr.mxu0 %v1709
    %v1711 = vand.u32 %v1061, 4294901760
    %v1712 = vsub.f32 %v1061, %v1711
    %1713 = vmatpush1.msra.mxu0 %v1712
    %1714 = vmatprep.subr.mxu0 0.0
    %1715 = vmatpush1.msra.mxu0 0.0
    %1716 = vmatprep.subr.mxu0 0.0
    %1717 = vmatpush1.msra.mxu0 0.0
    %1718 = vmatprep.subr.mxu0 0.0
    %1719 = vmatpush1.msra.mxu0 0.0
    %1720 = vmatprep.subr.mxu0 0.0
    %1721 = vmatpush1.msra.mxu0 0.0
    %1722 = vmatprep.subr.mxu0 0.0
    %1723 = vmatpush1.msra.mxu0 0.0
    %1724 = vmatprep.subr.mxu0 0.0
    %1725 = vmatpush1.msra.mxu0 0.0
    %1726 = vmatprep.subr.mxu0 0.0
    %1727 = vmatpush1.msra.mxu0 0.0
    %1728 = vmatprep.subr.mxu0 0.0
    %1729 = vmatpush1.msra.mxu0 0.0
    %1730 = vmatprep.subr.mxu0 0.0
    %1731 = vmatpush1.msra.mxu0 0.0
    %1732 = vmatprep.subr.mxu0 0.0
    %1733 = vmatpush1.msra.mxu0 0.0
    %1734 = vmatprep.subr.mxu0 0.0
    %1735 = vmatpush1.msra.mxu0 0.0
    %1736 = vmatprep.subr.mxu0 0.0
    %1737 = vmatpush1.msra.mxu0 0.0
    %1738 = vmatprep.subr.mxu0 0.0
    %1739 = vmatpush1.msra.mxu0 0.0
    %1740 = vmatprep.subr.mxu0 0.0
    %1741 = vmatpush1.msra.mxu0 0.0
    %1742 = vmatprep.subr.mxu0 0.0
    %1743 = vmatpush1.msra.mxu0 0.0
    %1744 = vmatprep.subr.mxu0 0.0
    %1745 = vmatpush1.msra.mxu0 0.0
    %1746 = vmatprep.subr.mxu0 0.0
    %1747 = vmatpush1.msra.mxu0 0.0
    %1748 = vmatprep.subr.mxu0 0.0
    %1749 = vmatpush1.msra.mxu0 0.0
    %1750 = vmatprep.subr.mxu0 0.0
    %1751 = vmatpush1.msra.mxu0 0.0
    %1752 = vmatprep.subr.mxu0 0.0
    %1753 = vmatpush1.msra.mxu0 0.0
    %1754 = vmatprep.subr.mxu0 0.0
    %1755 = vmatpush1.msra.mxu0 0.0
    %1756 = vmatprep.subr.mxu0 0.0
    %1757 = vmatpush1.msra.mxu0 0.0
    %1758 = vmatprep.subr.mxu0 0.0
    %1759 = vmatpush1.msra.mxu0 0.0
    %1760 = vmatprep.subr.mxu0 0.0
    %1761 = vmatpush1.msra.mxu0 0.0
    %1762 = vmatprep.subr.mxu0 0.0
    %1763 = vmatpush1.msra.mxu0 0.0
    %1764 = vmatprep.subr.mxu0 0.0
    %1765 = vmatpush1.msra.mxu0 0.0
    %1766 = vmatprep.subr.mxu0 0.0
    %1767 = vmatpush1.msra.mxu0 0.0
    %1768 = vmatprep.subr.mxu0 0.0
    %1769 = vmatpush1.msra.mxu0 0.0
    %1770 = vmatprep.subr.mxu0 0.0
    %1771 = vmatpush1.msra.mxu0 0.0
    %1772 = vmatprep.subr.mxu0 0.0
    %1773 = vmatpush1.msra.mxu0 0.0
    %1774 = vmatprep.subr.mxu0 0.0
    %1775 = vmatpush1.msra.mxu0 0.0
    %1776 = vmatprep.mubr.f32.mxu0 0.0
    %v1777 = vand.u32 %v1546, 4294901760
    %v1778 = vsub.f32 %v1546, %v1777
    %1779 = vmatmul.mubr.f32.gmra.mrb[0].mxu0 %v1778
    %v1780 = vpop.f32.mrb[0].mxu0
    %v1781 = vadd.f32 %v1704, %v1780
    %v1782 = vpop.f32.mrb[0].mxu0
    %v1783 = vadd.f32 %v1706, %v1782
    %1784 = vdwg.mxu0
    %v1785 = vand.u32 %v1062, 4294901760
    %1786 = vmatprep.subr.mxu0 %v1785
    %v1787 = vand.u32 %v1061, 4294901760
    %1788 = vmatpush1.msra.mxu0 %v1787
    %1789 = vmatprep.subr.mxu0 0.0
    %1790 = vmatpush1.msra.mxu0 0.0
    %1791 = vmatprep.subr.mxu0 0.0
    %1792 = vmatpush1.msra.mxu0 0.0
    %1793 = vmatprep.subr.mxu0 0.0
    %1794 = vmatpush1.msra.mxu0 0.0
    %1795 = vmatprep.subr.mxu0 0.0
    %1796 = vmatpush1.msra.mxu0 0.0
    %1797 = vmatprep.subr.mxu0 0.0
    %1798 = vmatpush1.msra.mxu0 0.0
    %1799 = vmatprep.subr.mxu0 0.0
    %1800 = vmatpush1.msra.mxu0 0.0
    %1801 = vmatprep.subr.mxu0 0.0
    %1802 = vmatpush1.msra.mxu0 0.0
    %1803 = vmatprep.subr.mxu0 0.0
    %1804 = vmatpush1.msra.mxu0 0.0
    %1805 = vmatprep.subr.mxu0 0.0
    %1806 = vmatpush1.msra.mxu0 0.0
    %1807 = vmatprep.subr.mxu0 0.0
    %1808 = vmatpush1.msra.mxu0 0.0
    %1809 = vmatprep.subr.mxu0 0.0
    %1810 = vmatpush1.msra.mxu0 0.0
    %1811 = vmatprep.subr.mxu0 0.0
    %1812 = vmatpush1.msra.mxu0 0.0
    %1813 = vmatprep.subr.mxu0 0.0
    %1814 = vmatpush1.msra.mxu0 0.0
    %1815 = vmatprep.subr.mxu0 0.0
    %1816 = vmatpush1.msra.mxu0 0.0
    %1817 = vmatprep.subr.mxu0 0.0
    %1818 = vmatpush1.msra.mxu0 0.0
    %1819 = vmatprep.subr.mxu0 0.0
    %1820 = vmatpush1.msra.mxu0 0.0
    %1821 = vmatprep.subr.mxu0 0.0
    %1822 = vmatpush1.msra.mxu0 0.0
    %1823 = vmatprep.subr.mxu0 0.0
    %1824 = vmatpush1.msra.mxu0 0.0
    %1825 = vmatprep.subr.mxu0 0.0
    %1826 = vmatpush1.msra.mxu0 0.0
    %1827 = vmatprep.subr.mxu0 0.0
    %1828 = vmatpush1.msra.mxu0 0.0
    %1829 = vmatprep.subr.mxu0 0.0
    %1830 = vmatpush1.msra.mxu0 0.0
    %1831 = vmatprep.subr.mxu0 0.0
    %1832 = vmatpush1.msra.mxu0 0.0
    %1833 = vmatprep.subr.mxu0 0.0
    %1834 = vmatpush1.msra.mxu0 0.0
    %1835 = vmatprep.subr.mxu0 0.0
    %1836 = vmatpush1.msra.mxu0 0.0
    %1837 = vmatprep.subr.mxu0 0.0
    %1838 = vmatpush1.msra.mxu0 0.0
    %1839 = vmatprep.subr.mxu0 0.0
    %1840 = vmatpush1.msra.mxu0 0.0
    %1841 = vmatprep.subr.mxu0 0.0
    %1842 = vmatpush1.msra.mxu0 0.0
    %1843 = vmatprep.subr.mxu0 0.0
    %1844 = vmatpush1.msra.mxu0 0.0
    %1845 = vmatprep.subr.mxu0 0.0
    %1846 = vmatpush1.msra.mxu0 0.0
    %1847 = vmatprep.subr.mxu0 0.0
    %1848 = vmatpush1.msra.mxu0 0.0
    %1849 = vmatprep.subr.mxu0 0.0
    %1850 = vmatpush1.msra.mxu0 0.0
    %1851 = vmatprep.mubr.f32.mxu0 0.0
    %v1852 = vand.u32 %v1546, 4294901760
    %v1853 = vsub.f32 %v1546, %v1852
    %v1854 = vand.u32 %v1853, 4294901760
    %1855 = vmatmul.mubr.f32.gmra.mrb[0].mxu0 %v1854
    %v1856 = vpop.f32.mrb[0].mxu0
    %v1857 = vadd.f32 %v1781, %v1856
    %v1858 = vpop.f32.mrb[0].mxu0
    %v1859 = vadd.f32 %v1783, %v1858
    %1860 = vdwg.mxu0
    %v1861 = vand.u32 %v1062, 4294901760
    %v1862 = vsub.f32 %v1062, %v1861
    %v1863 = vand.u32 %v1862, 4294901760
    %1864 = vmatprep.subr.mxu0 %v1863
    %v1865 = vand.u32 %v1061, 4294901760
    %v1866 = vsub.f32 %v1061, %v1865
    %v1867 = vand.u32 %v1866, 4294901760
    %1868 = vmatpush1.msra.mxu0 %v1867
    %1869 = vmatprep.subr.mxu0 0.0
    %1870 = vmatpush1.msra.mxu0 0.0
    %1871 = vmatprep.subr.mxu0 0.0
    %1872 = vmatpush1.msra.mxu0 0.0
    %1873 = vmatprep.subr.mxu0 0.0
    %1874 = vmatpush1.msra.mxu0 0.0
    %1875 = vmatprep.subr.mxu0 0.0
    %1876 = vmatpush1.msra.mxu0 0.0
    %1877 = vmatprep.subr.mxu0 0.0
    %1878 = vmatpush1.msra.mxu0 0.0
    %1879 = vmatprep.subr.mxu0 0.0
    %1880 = vmatpush1.msra.mxu0 0.0
    %1881 = vmatprep.subr.mxu0 0.0
    %1882 = vmatpush1.msra.mxu0 0.0
    %1883 = vmatprep.subr.mxu0 0.0
    %1884 = vmatpush1.msra.mxu0 0.0
    %1885 = vmatprep.subr.mxu0 0.0
    %1886 = vmatpush1.msra.mxu0 0.0
    %1887 = vmatprep.subr.mxu0 0.0
    %1888 = vmatpush1.msra.mxu0 0.0
    %1889 = vmatprep.subr.mxu0 0.0
    %1890 = vmatpush1.msra.mxu0 0.0
    %1891 = vmatprep.subr.mxu0 0.0
    %1892 = vmatpush1.msra.mxu0 0.0
    %1893 = vmatprep.subr.mxu0 0.0
    %1894 = vmatpush1.msra.mxu0 0.0
    %1895 = vmatprep.subr.mxu0 0.0
    %1896 = vmatpush1.msra.mxu0 0.0
    %1897 = vmatprep.subr.mxu0 0.0
    %1898 = vmatpush1.msra.mxu0 0.0
    %1899 = vmatprep.subr.mxu0 0.0
    %1900 = vmatpush1.msra.mxu0 0.0
    %1901 = vmatprep.subr.mxu0 0.0
    %1902 = vmatpush1.msra.mxu0 0.0
    %1903 = vmatprep.subr.mxu0 0.0
    %1904 = vmatpush1.msra.mxu0 0.0
    %1905 = vmatprep.subr.mxu0 0.0
    %1906 = vmatpush1.msra.mxu0 0.0
    %1907 = vmatprep.subr.mxu0 0.0
    %1908 = vmatpush1.msra.mxu0 0.0
    %1909 = vmatprep.subr.mxu0 0.0
    %1910 = vmatpush1.msra.mxu0 0.0
    %1911 = vmatprep.subr.mxu0 0.0
    %1912 = vmatpush1.msra.mxu0 0.0
    %1913 = vmatprep.subr.mxu0 0.0
    %1914 = vmatpush1.msra.mxu0 0.0
    %1915 = vmatprep.subr.mxu0 0.0
    %1916 = vmatpush1.msra.mxu0 0.0
    %1917 = vmatprep.subr.mxu0 0.0
    %1918 = vmatpush1.msra.mxu0 0.0
    %1919 = vmatprep.subr.mxu0 0.0
    %1920 = vmatpush1.msra.mxu0 0.0
    %1921 = vmatprep.subr.mxu0 0.0
    %1922 = vmatpush1.msra.mxu0 0.0
    %1923 = vmatprep.subr.mxu0 0.0
    %1924 = vmatpush1.msra.mxu0 0.0
    %1925 = vmatprep.subr.mxu0 0.0
    %1926 = vmatpush1.msra.mxu0 0.0
    %1927 = vmatprep.subr.mxu0 0.0
    %1928 = vmatpush1.msra.mxu0 0.0
    %1929 = vmatprep.subr.mxu0 0.0
    %1930 = vmatpush1.msra.mxu0 0.0
    %1931 = vmatprep.mubr.f32.mxu0 0.0
    %v1932 = vand.u32 %v1546, 4294901760
    %1933 = vmatmul.mubr.f32.gmra.mrb[0].mxu0 %v1932
    %v1934 = vpop.f32.mrb[0].mxu0
    %v1935 = vadd.f32 %v1857, %v1934
    %v1936 = vpop.f32.mrb[0].mxu0
    %v1937 = vadd.f32 %v1859, %v1936
    %1938 = vdwg.mxu0
    %v1939 = vand.u32 %v1062, 4294901760
    %1940 = vmatprep.subr.mxu0 %v1939
    %v1941 = vand.u32 %v1061, 4294901760
    %1942 = vmatpush1.msra.mxu0 %v1941
    %1943 = vmatprep.subr.mxu0 0.0
    %1944 = vmatpush1.msra.mxu0 0.0
    %1945 = vmatprep.subr.mxu0 0.0
    %1946 = vmatpush1.msra.mxu0 0.0
    %1947 = vmatprep.subr.mxu0 0.0
    %1948 = vmatpush1.msra.mxu0 0.0
    %1949 = vmatprep.subr.mxu0 0.0
    %1950 = vmatpush1.msra.mxu0 0.0
    %1951 = vmatprep.subr.mxu0 0.0
    %1952 = vmatpush1.msra.mxu0 0.0
    %1953 = vmatprep.subr.mxu0 0.0
    %1954 = vmatpush1.msra.mxu0 0.0
    %1955 = vmatprep.subr.mxu0 0.0
    %1956 = vmatpush1.msra.mxu0 0.0
    %1957 = vmatprep.subr.mxu0 0.0
    %1958 = vmatpush1.msra.mxu0 0.0
    %1959 = vmatprep.subr.mxu0 0.0
    %1960 = vmatpush1.msra.mxu0 0.0
    %1961 = vmatprep.subr.mxu0 0.0
    %1962 = vmatpush1.msra.mxu0 0.0
    %1963 = vmatprep.subr.mxu0 0.0
    %1964 = vmatpush1.msra.mxu0 0.0
    %1965 = vmatprep.subr.mxu0 0.0
    %1966 = vmatpush1.msra.mxu0 0.0
    %1967 = vmatprep.subr.mxu0 0.0
    %1968 = vmatpush1.msra.mxu0 0.0
    %1969 = vmatprep.subr.mxu0 0.0
    %1970 = vmatpush1.msra.mxu0 0.0
    %1971 = vmatprep.subr.mxu0 0.0
    %1972 = vmatpush1.msra.mxu0 0.0
    %1973 = vmatprep.subr.mxu0 0.0
    %1974 = vmatpush1.msra.mxu0 0.0
    %1975 = vmatprep.subr.mxu0 0.0
    %1976 = vmatpush1.msra.mxu0 0.0
    %1977 = vmatprep.subr.mxu0 0.0
    %1978 = vmatpush1.msra.mxu0 0.0
    %1979 = vmatprep.subr.mxu0 0.0
    %1980 = vmatpush1.msra.mxu0 0.0
    %1981 = vmatprep.subr.mxu0 0.0
    %1982 = vmatpush1.msra.mxu0 0.0
    %1983 = vmatprep.subr.mxu0 0.0
    %1984 = vmatpush1.msra.mxu0 0.0
    %1985 = vmatprep.subr.mxu0 0.0
    %1986 = vmatpush1.msra.mxu0 0.0
    %1987 = vmatprep.subr.mxu0 0.0
    %1988 = vmatpush1.msra.mxu0 0.0
    %1989 = vmatprep.subr.mxu0 0.0
    %1990 = vmatpush1.msra.mxu0 0.0
    %1991 = vmatprep.subr.mxu0 0.0
    %1992 = vmatpush1.msra.mxu0 0.0
    %1993 = vmatprep.subr.mxu0 0.0
    %1994 = vmatpush1.msra.mxu0 0.0
    %1995 = vmatprep.subr.mxu0 0.0
    %1996 = vmatpush1.msra.mxu0 0.0
    %1997 = vmatprep.subr.mxu0 0.0
    %1998 = vmatpush1.msra.mxu0 0.0
    %1999 = vmatprep.subr.mxu0 0.0
    %2000 = vmatpush1.msra.mxu0 0.0
    %2001 = vmatprep.subr.mxu0 0.0
    %2002 = vmatpush1.msra.mxu0 0.0
    %2003 = vmatprep.subr.mxu0 0.0
    %2004 = vmatpush1.msra.mxu0 0.0
    %2005 = vmatprep.mubr.f32.mxu0 0.0
    %v2006 = vand.u32 %v1546, 4294901760
    %2007 = vmatmul.mubr.f32.gmra.mrb[0].mxu0 %v2006
    %v2008 = vpop.f32.mrb[0].mxu0
    %v2009 = vadd.f32 %v1935, %v2008
    %v2010 = vpop.f32.mrb[0].mxu0
    %v2011 = vadd.f32 %v1937, %v2010
    %2012 = vdwg.mxu0
    %v2013 = vsub.f32 3.1415927, %v1534
    %v2014 = vsub.f32 3.1415927, %v1536
    %v2015 = vsub.f32 3.1415927, %v2009
    %v2016 = vsub.f32 3.1415927, %v2011
    %v2017 = vmul.f32 %v2013, %v2015
    %v2018 = vmul.f32 %v2014, %v2016
    %v2019 = vld [vmem:[%s10] sm:$0xff]
    %v2020 = vld [vmem:[%s10 + $0x8] sm:$0xff]
    %v2021 = vld [vmem:[%s11] sm:$0xff]
    %v2022 = vld [vmem:[%s11 + $0x8] sm:$0xff]
    %v2024 = vsel %vm109, %v2021, 0
    %v2027 = vsel %vm109, %v2022, 0
    %v2030 = vsel %vm113, %v2017, 0
    %v2033 = vsel %vm113, %v2018, 0
    %v2035 = vand.u32 %v2033, 4294901760
    %2036 = vmatprep.subr.mxu0 %v2035
    %v2037 = vand.u32 %v2030, 4294901760
    %2038 = vmatpush1.msra.mxu0 %v2037
    %2039 = vmatprep.subr.mxu0 0.0
    %2040 = vmatpush1.msra.mxu0 0.0
    %2041 = vmatprep.subr.mxu0 0.0
    %2042 = vmatpush1.msra.mxu0 0.0
    %2043 = vmatprep.subr.mxu0 0.0
    %2044 = vmatpush1.msra.mxu0 0.0
    %2045 = vmatprep.subr.mxu0 0.0
    %2046 = vmatpush1.msra.mxu0 0.0
    %2047 = vmatprep.subr.mxu0 0.0
    %2048 = vmatpush1.msra.mxu0 0.0
    %2049 = vmatprep.subr.mxu0 0.0
    %2050 = vmatpush1.msra.mxu0 0.0
    %2051 = vmatprep.subr.mxu0 0.0
    %2052 = vmatpush1.msra.mxu0 0.0
    %2053 = vmatprep.subr.mxu0 0.0
    %2054 = vmatpush1.msra.mxu0 0.0
    %2055 = vmatprep.subr.mxu0 0.0
    %2056 = vmatpush1.msra.mxu0 0.0
    %2057 = vmatprep.subr.mxu0 0.0
    %2058 = vmatpush1.msra.mxu0 0.0
    %2059 = vmatprep.subr.mxu0 0.0
    %2060 = vmatpush1.msra.mxu0 0.0
    %2061 = vmatprep.subr.mxu0 0.0
    %2062 = vmatpush1.msra.mxu0 0.0
    %2063 = vmatprep.subr.mxu0 0.0
    %2064 = vmatpush1.msra.mxu0 0.0
    %2065 = vmatprep.subr.mxu0 0.0
    %2066 = vmatpush1.msra.mxu0 0.0
    %2067 = vmatprep.subr.mxu0 0.0
    %2068 = vmatpush1.msra.mxu0 0.0
    %2069 = vmatprep.subr.mxu0 0.0
    %2070 = vmatpush1.msra.mxu0 0.0
    %2071 = vmatprep.subr.mxu0 0.0
    %2072 = vmatpush1.msra.mxu0 0.0
    %2073 = vmatprep.subr.mxu0 0.0
    %2074 = vmatpush1.msra.mxu0 0.0
    %2075 = vmatprep.subr.mxu0 0.0
    %2076 = vmatpush1.msra.mxu0 0.0
    %2077 = vmatprep.subr.mxu0 0.0
    %2078 = vmatpush1.msra.mxu0 0.0
    %2079 = vmatprep.subr.mxu0 0.0
    %2080 = vmatpush1.msra.mxu0 0.0
    %2081 = vmatprep.subr.mxu0 0.0
    %2082 = vmatpush1.msra.mxu0 0.0
    %2083 = vmatprep.subr.mxu0 0.0
    %2084 = vmatpush1.msra.mxu0 0.0
    %2085 = vmatprep.subr.mxu0 0.0
    %2086 = vmatpush1.msra.mxu0 0.0
    %2087 = vmatprep.subr.mxu0 0.0
    %2088 = vmatpush1.msra.mxu0 0.0
    %2089 = vmatprep.subr.mxu0 0.0
    %2090 = vmatpush1.msra.mxu0 0.0
    %2091 = vmatprep.subr.mxu0 0.0
    %2092 = vmatpush1.msra.mxu0 0.0
    %2093 = vmatprep.subr.mxu0 0.0
    %2094 = vmatpush1.msra.mxu0 0.0
    %2095 = vmatprep.subr.mxu0 0.0
    %2096 = vmatpush1.msra.mxu0 0.0
    %2097 = vmatprep.subr.mxu0 0.0
    %2098 = vmatpush1.msra.mxu0 0.0
    %2099 = vmatprep.subr.mxu0 0.0
    %2100 = vmatpush1.msra.mxu0 0.0
    %2101 = vmatprep.mubr.f32.mxu0 0.0
    %v2102 = vand.u32 %v2024, 4294901760
    %v2103 = vsub.f32 %v2024, %v2102
    %v2104 = vand.u32 %v2103, 4294901760
    %v2105 = vsub.f32 %v2103, %v2104
    %v2106 = vand.u32 %v2105, 4294901760
    %2107 = vmatmul.mubr.f32.gmra.mrb[0].mxu0 %v2106
    %v2108 = vpop.f32.mrb[0].mxu0
    %v2109 = vadd.f32 0.0, %v2108
    %v2110 = vpop.f32.mrb[0].mxu0
    %v2111 = vadd.f32 0.0, %v2110
    %2112 = vmatprep.mubr.f32.mxu0 0.0
    %v2113 = vand.u32 %v2027, 4294901760
    %v2114 = vsub.f32 %v2027, %v2113
    %v2115 = vand.u32 %v2114, 4294901760
    %v2116 = vsub.f32 %v2114, %v2115
    %v2117 = vand.u32 %v2116, 4294901760
    %2118 = vmatmul.mubr.f32.gmra.mrb[0].mxu0 %v2117
    %v2119 = vpop.f32.mrb[0].mxu0
    %v2120 = vadd.f32 0.0, %v2119
    %v2121 = vpop.f32.mrb[0].mxu0
    %v2122 = vadd.f32 0.0, %v2121
    %2123 = vdwg.mxu0
    %v2124 = vand.u32 %v2033, 4294901760
    %v2125 = vsub.f32 %v2033, %v2124
    %v2126 = vand.u32 %v2125, 4294901760
    %v2127 = vsub.f32 %v2125, %v2126
    %v2128 = vand.u32 %v2127, 4294901760
    %2129 = vmatprep.subr.mxu0 %v2128
    %v2130 = vand.u32 %v2030, 4294901760
    %v2131 = vsub.f32 %v2030, %v2130
    %v2132 = vand.u32 %v2131, 4294901760
    %v2133 = vsub.f32 %v2131, %v2132
    %v2134 = vand.u32 %v2133, 4294901760
    %2135 = vmatpush1.msra.mxu0 %v2134
    %2136 = vmatprep.subr.mxu0 0.0
    %2137 = vmatpush1.msra.mxu0 0.0
    %2138 = vmatprep.subr.mxu0 0.0
    %2139 = vmatpush1.msra.mxu0 0.0
    %2140 = vmatprep.subr.mxu0 0.0
    %2141 = vmatpush1.msra.mxu0 0.0
    %2142 = vmatprep.subr.mxu0 0.0
    %2143 = vmatpush1.msra.mxu0 0.0
    %2144 = vmatprep.subr.mxu0 0.0
    %2145 = vmatpush1.msra.mxu0 0.0
    %2146 = vmatprep.subr.mxu0 0.0
    %2147 = vmatpush1.msra.mxu0 0.0
    %2148 = vmatprep.subr.mxu0 0.0
    %2149 = vmatpush1.msra.mxu0 0.0
    %2150 = vmatprep.subr.mxu0 0.0
    %2151 = vmatpush1.msra.mxu0 0.0
    %2152 = vmatprep.subr.mxu0 0.0
    %2153 = vmatpush1.msra.mxu0 0.0
    %2154 = vmatprep.subr.mxu0 0.0
    %2155 = vmatpush1.msra.mxu0 0.0
    %2156 = vmatprep.subr.mxu0 0.0
    %2157 = vmatpush1.msra.mxu0 0.0
    %2158 = vmatprep.subr.mxu0 0.0
    %2159 = vmatpush1.msra.mxu0 0.0
    %2160 = vmatprep.subr.mxu0 0.0
    %2161 = vmatpush1.msra.mxu0 0.0
    %2162 = vmatprep.subr.mxu0 0.0
    %2163 = vmatpush1.msra.mxu0 0.0
    %2164 = vmatprep.subr.mxu0 0.0
    %2165 = vmatpush1.msra.mxu0 0.0
    %2166 = vmatprep.subr.mxu0 0.0
    %2167 = vmatpush1.msra.mxu0 0.0
    %2168 = vmatprep.subr.mxu0 0.0
    %2169 = vmatpush1.msra.mxu0 0.0
    %2170 = vmatprep.subr.mxu0 0.0
    %2171 = vmatpush1.msra.mxu0 0.0
    %2172 = vmatprep.subr.mxu0 0.0
    %2173 = vmatpush1.msra.mxu0 0.0
    %2174 = vmatprep.subr.mxu0 0.0
    %2175 = vmatpush1.msra.mxu0 0.0
    %2176 = vmatprep.subr.mxu0 0.0
    %2177 = vmatpush1.msra.mxu0 0.0
    %2178 = vmatprep.subr.mxu0 0.0
    %2179 = vmatpush1.msra.mxu0 0.0
    %2180 = vmatprep.subr.mxu0 0.0
    %2181 = vmatpush1.msra.mxu0 0.0
    %2182 = vmatprep.subr.mxu0 0.0
    %2183 = vmatpush1.msra.mxu0 0.0
    %2184 = vmatprep.subr.mxu0 0.0
    %2185 = vmatpush1.msra.mxu0 0.0
    %2186 = vmatprep.subr.mxu0 0.0
    %2187 = vmatpush1.msra.mxu0 0.0
    %2188 = vmatprep.subr.mxu0 0.0
    %2189 = vmatpush1.msra.mxu0 0.0
    %2190 = vmatprep.subr.mxu0 0.0
    %2191 = vmatpush1.msra.mxu0 0.0
    %2192 = vmatprep.subr.mxu0 0.0
    %2193 = vmatpush1.msra.mxu0 0.0
    %2194 = vmatprep.subr.mxu0 0.0
    %2195 = vmatpush1.msra.mxu0 0.0
    %2196 = vmatprep.subr.mxu0 0.0
    %2197 = vmatpush1.msra.mxu0 0.0
    %2198 = vmatprep.mubr.f32.mxu0 0.0
    %v2199 = vand.u32 %v2024, 4294901760
    %2200 = vmatmul.mubr.f32.gmra.mrb[0].mxu0 %v2199
    %v2201 = vpop.f32.mrb[0].mxu0
    %v2202 = vadd.f32 %v2109, %v2201
    %v2203 = vpop.f32.mrb[0].mxu0
    %v2204 = vadd.f32 %v2111, %v2203
    %2205 = vmatprep.mubr.f32.mxu0 0.0
    %v2206 = vand.u32 %v2027, 4294901760
    %2207 = vmatmul.mubr.f32.gmra.mrb[0].mxu0 %v2206
    %v2208 = vpop.f32.mrb[0].mxu0
    %v2209 = vadd.f32 %v2120, %v2208
    %v2210 = vpop.f32.mrb[0].mxu0
    %v2211 = vadd.f32 %v2122, %v2210
    %2212 = vdwg.mxu0
    %v2213 = vand.u32 %v2033, 4294901760
    %v2214 = vsub.f32 %v2033, %v2213
    %2215 = vmatprep.subr.mxu0 %v2214
    %v2216 = vand.u32 %v2030, 4294901760
    %v2217 = vsub.f32 %v2030, %v2216
    %2218 = vmatpush1.msra.mxu0 %v2217
    %2219 = vmatprep.subr.mxu0 0.0
    %2220 = vmatpush1.msra.mxu0 0.0
    %2221 = vmatprep.subr.mxu0 0.0
    %2222 = vmatpush1.msra.mxu0 0.0
    %2223 = vmatprep.subr.mxu0 0.0
    %2224 = vmatpush1.msra.mxu0 0.0
    %2225 = vmatprep.subr.mxu0 0.0
    %2226 = vmatpush1.msra.mxu0 0.0
    %2227 = vmatprep.subr.mxu0 0.0
    %2228 = vmatpush1.msra.mxu0 0.0
    %2229 = vmatprep.subr.mxu0 0.0
    %2230 = vmatpush1.msra.mxu0 0.0
    %2231 = vmatprep.subr.mxu0 0.0
    %2232 = vmatpush1.msra.mxu0 0.0
    %2233 = vmatprep.subr.mxu0 0.0
    %2234 = vmatpush1.msra.mxu0 0.0
    %2235 = vmatprep.subr.mxu0 0.0
    %2236 = vmatpush1.msra.mxu0 0.0
    %2237 = vmatprep.subr.mxu0 0.0
    %2238 = vmatpush1.msra.mxu0 0.0
    %2239 = vmatprep.subr.mxu0 0.0
    %2240 = vmatpush1.msra.mxu0 0.0
    %2241 = vmatprep.subr.mxu0 0.0
    %2242 = vmatpush1.msra.mxu0 0.0
    %2243 = vmatprep.subr.mxu0 0.0
    %2244 = vmatpush1.msra.mxu0 0.0
    %2245 = vmatprep.subr.mxu0 0.0
    %2246 = vmatpush1.msra.mxu0 0.0
    %2247 = vmatprep.subr.mxu0 0.0
    %2248 = vmatpush1.msra.mxu0 0.0
    %2249 = vmatprep.subr.mxu0 0.0
    %2250 = vmatpush1.msra.mxu0 0.0
    %2251 = vmatprep.subr.mxu0 0.0
    %2252 = vmatpush1.msra.mxu0 0.0
    %2253 = vmatprep.subr.mxu0 0.0
    %2254 = vmatpush1.msra.mxu0 0.0
    %2255 = vmatprep.subr.mxu0 0.0
    %2256 = vmatpush1.msra.mxu0 0.0
    %2257 = vmatprep.subr.mxu0 0.0
    %2258 = vmatpush1.msra.mxu0 0.0
    %2259 = vmatprep.subr.mxu0 0.0
    %2260 = vmatpush1.msra.mxu0 0.0
    %2261 = vmatprep.subr.mxu0 0.0
    %2262 = vmatpush1.msra.mxu0 0.0
    %2263 = vmatprep.subr.mxu0 0.0
    %2264 = vmatpush1.msra.mxu0 0.0
    %2265 = vmatprep.subr.mxu0 0.0
    %2266 = vmatpush1.msra.mxu0 0.0
    %2267 = vmatprep.subr.mxu0 0.0
    %2268 = vmatpush1.msra.mxu0 0.0
    %2269 = vmatprep.subr.mxu0 0.0
    %2270 = vmatpush1.msra.mxu0 0.0
    %2271 = vmatprep.subr.mxu0 0.0
    %2272 = vmatpush1.msra.mxu0 0.0
    %2273 = vmatprep.subr.mxu0 0.0
    %2274 = vmatpush1.msra.mxu0 0.0
    %2275 = vmatprep.subr.mxu0 0.0
    %2276 = vmatpush1.msra.mxu0 0.0
    %2277 = vmatprep.subr.mxu0 0.0
    %2278 = vmatpush1.msra.mxu0 0.0
    %2279 = vmatprep.subr.mxu0 0.0
    %2280 = vmatpush1.msra.mxu0 0.0
    %2281 = vmatprep.mubr.f32.mxu0 0.0
    %v2282 = vand.u32 %v2024, 4294901760
    %v2283 = vsub.f32 %v2024, %v2282
    %2284 = vmatmul.mubr.f32.gmra.mrb[0].mxu0 %v2283
    %v2285 = vpop.f32.mrb[0].mxu0
    %v2286 = vadd.f32 %v2202, %v2285
    %v2287 = vpop.f32.mrb[0].mxu0
    %v2288 = vadd.f32 %v2204, %v2287
    %2289 = vmatprep.mubr.f32.mxu0 0.0
    %v2290 = vand.u32 %v2027, 4294901760
    %v2291 = vsub.f32 %v2027, %v2290
    %2292 = vmatmul.mubr.f32.gmra.mrb[0].mxu0 %v2291
    %v2293 = vpop.f32.mrb[0].mxu0
    %v2294 = vadd.f32 %v2209, %v2293
    %v2295 = vpop.f32.mrb[0].mxu0
    %v2296 = vadd.f32 %v2211, %v2295
    %2297 = vdwg.mxu0
    %v2298 = vand.u32 %v2033, 4294901760
    %2299 = vmatprep.subr.mxu0 %v2298
    %v2300 = vand.u32 %v2030, 4294901760
    %2301 = vmatpush1.msra.mxu0 %v2300
    %2302 = vmatprep.subr.mxu0 0.0
    %2303 = vmatpush1.msra.mxu0 0.0
    %2304 = vmatprep.subr.mxu0 0.0
    %2305 = vmatpush1.msra.mxu0 0.0
    %2306 = vmatprep.subr.mxu0 0.0
    %2307 = vmatpush1.msra.mxu0 0.0
    %2308 = vmatprep.subr.mxu0 0.0
    %2309 = vmatpush1.msra.mxu0 0.0
    %2310 = vmatprep.subr.mxu0 0.0
    %2311 = vmatpush1.msra.mxu0 0.0
    %2312 = vmatprep.subr.mxu0 0.0
    %2313 = vmatpush1.msra.mxu0 0.0
    %2314 = vmatprep.subr.mxu0 0.0
    %2315 = vmatpush1.msra.mxu0 0.0
    %2316 = vmatprep.subr.mxu0 0.0
    %2317 = vmatpush1.msra.mxu0 0.0
    %2318 = vmatprep.subr.mxu0 0.0
    %2319 = vmatpush1.msra.mxu0 0.0
    %2320 = vmatprep.subr.mxu0 0.0
    %2321 = vmatpush1.msra.mxu0 0.0
    %2322 = vmatprep.subr.mxu0 0.0
    %2323 = vmatpush1.msra.mxu0 0.0
    %2324 = vmatprep.subr.mxu0 0.0
    %2325 = vmatpush1.msra.mxu0 0.0
    %2326 = vmatprep.subr.mxu0 0.0
    %2327 = vmatpush1.msra.mxu0 0.0
    %2328 = vmatprep.subr.mxu0 0.0
    %2329 = vmatpush1.msra.mxu0 0.0
    %2330 = vmatprep.subr.mxu0 0.0
    %2331 = vmatpush1.msra.mxu0 0.0
    %2332 = vmatprep.subr.mxu0 0.0
    %2333 = vmatpush1.msra.mxu0 0.0
    %2334 = vmatprep.subr.mxu0 0.0
    %2335 = vmatpush1.msra.mxu0 0.0
    %2336 = vmatprep.subr.mxu0 0.0
    %2337 = vmatpush1.msra.mxu0 0.0
    %2338 = vmatprep.subr.mxu0 0.0
    %2339 = vmatpush1.msra.mxu0 0.0
    %2340 = vmatprep.subr.mxu0 0.0
    %2341 = vmatpush1.msra.mxu0 0.0
    %2342 = vmatprep.subr.mxu0 0.0
    %2343 = vmatpush1.msra.mxu0 0.0
    %2344 = vmatprep.subr.mxu0 0.0
    %2345 = vmatpush1.msra.mxu0 0.0
    %2346 = vmatprep.subr.mxu0 0.0
    %2347 = vmatpush1.msra.mxu0 0.0
    %2348 = vmatprep.subr.mxu0 0.0
    %2349 = vmatpush1.msra.mxu0 0.0
    %2350 = vmatprep.subr.mxu0 0.0
    %2351 = vmatpush1.msra.mxu0 0.0
    %2352 = vmatprep.subr.mxu0 0.0
    %2353 = vmatpush1.msra.mxu0 0.0
    %2354 = vmatprep.subr.mxu0 0.0
    %2355 = vmatpush1.msra.mxu0 0.0
    %2356 = vmatprep.subr.mxu0 0.0
    %2357 = vmatpush1.msra.mxu0 0.0
    %2358 = vmatprep.subr.mxu0 0.0
    %2359 = vmatpush1.msra.mxu0 0.0
    %2360 = vmatprep.subr.mxu0 0.0
    %2361 = vmatpush1.msra.mxu0 0.0
    %2362 = vmatprep.subr.mxu0 0.0
    %2363 = vmatpush1.msra.mxu0 0.0
    %2364 = vmatprep.mubr.f32.mxu0 0.0
    %v2365 = vand.u32 %v2024, 4294901760
    %v2366 = vsub.f32 %v2024, %v2365
    %v2367 = vand.u32 %v2366, 4294901760
    %2368 = vmatmul.mubr.f32.gmra.mrb[0].mxu0 %v2367
    %v2369 = vpop.f32.mrb[0].mxu0
    %v2370 = vadd.f32 %v2286, %v2369
    %v2371 = vpop.f32.mrb[0].mxu0
    %v2372 = vadd.f32 %v2288, %v2371
    %2373 = vmatprep.mubr.f32.mxu0 0.0
    %v2374 = vand.u32 %v2027, 4294901760
    %v2375 = vsub.f32 %v2027, %v2374
    %v2376 = vand.u32 %v2375, 4294901760
    %2377 = vmatmul.mubr.f32.gmra.mrb[0].mxu0 %v2376
    %v2378 = vpop.f32.mrb[0].mxu0
    %v2379 = vadd.f32 %v2294, %v2378
    %v2380 = vpop.f32.mrb[0].mxu0
    %v2381 = vadd.f32 %v2296, %v2380
    %2382 = vdwg.mxu0
    %v2383 = vand.u32 %v2033, 4294901760
    %v2384 = vsub.f32 %v2033, %v2383
    %v2385 = vand.u32 %v2384, 4294901760
    %2386 = vmatprep.subr.mxu0 %v2385
    %v2387 = vand.u32 %v2030, 4294901760
    %v2388 = vsub.f32 %v2030, %v2387
    %v2389 = vand.u32 %v2388, 4294901760
    %2390 = vmatpush1.msra.mxu0 %v2389
    %2391 = vmatprep.subr.mxu0 0.0
    %2392 = vmatpush1.msra.mxu0 0.0
    %2393 = vmatprep.subr.mxu0 0.0
    %2394 = vmatpush1.msra.mxu0 0.0
    %2395 = vmatprep.subr.mxu0 0.0
    %2396 = vmatpush1.msra.mxu0 0.0
    %2397 = vmatprep.subr.mxu0 0.0
    %2398 = vmatpush1.msra.mxu0 0.0
    %2399 = vmatprep.subr.mxu0 0.0
    %2400 = vmatpush1.msra.mxu0 0.0
    %2401 = vmatprep.subr.mxu0 0.0
    %2402 = vmatpush1.msra.mxu0 0.0
    %2403 = vmatprep.subr.mxu0 0.0
    %2404 = vmatpush1.msra.mxu0 0.0
    %2405 = vmatprep.subr.mxu0 0.0
    %2406 = vmatpush1.msra.mxu0 0.0
    %2407 = vmatprep.subr.mxu0 0.0
    %2408 = vmatpush1.msra.mxu0 0.0
    %2409 = vmatprep.subr.mxu0 0.0
    %2410 = vmatpush1.msra.mxu0 0.0
    %2411 = vmatprep.subr.mxu0 0.0
    %2412 = vmatpush1.msra.mxu0 0.0
    %2413 = vmatprep.subr.mxu0 0.0
    %2414 = vmatpush1.msra.mxu0 0.0
    %2415 = vmatprep.subr.mxu0 0.0
    %2416 = vmatpush1.msra.mxu0 0.0
    %2417 = vmatprep.subr.mxu0 0.0
    %2418 = vmatpush1.msra.mxu0 0.0
    %2419 = vmatprep.subr.mxu0 0.0
    %2420 = vmatpush1.msra.mxu0 0.0
    %2421 = vmatprep.subr.mxu0 0.0
    %2422 = vmatpush1.msra.mxu0 0.0
    %2423 = vmatprep.subr.mxu0 0.0
    %2424 = vmatpush1.msra.mxu0 0.0
    %2425 = vmatprep.subr.mxu0 0.0
    %2426 = vmatpush1.msra.mxu0 0.0
    %2427 = vmatprep.subr.mxu0 0.0
    %2428 = vmatpush1.msra.mxu0 0.0
    %2429 = vmatprep.subr.mxu0 0.0
    %2430 = vmatpush1.msra.mxu0 0.0
    %2431 = vmatprep.subr.mxu0 0.0
    %2432 = vmatpush1.msra.mxu0 0.0
    %2433 = vmatprep.subr.mxu0 0.0
    %2434 = vmatpush1.msra.mxu0 0.0
    %2435 = vmatprep.subr.mxu0 0.0
    %2436 = vmatpush1.msra.mxu0 0.0
    %2437 = vmatprep.subr.mxu0 0.0
    %2438 = vmatpush1.msra.mxu0 0.0
    %2439 = vmatprep.subr.mxu0 0.0
    %2440 = vmatpush1.msra.mxu0 0.0
    %2441 = vmatprep.subr.mxu0 0.0
    %2442 = vmatpush1.msra.mxu0 0.0
    %2443 = vmatprep.subr.mxu0 0.0
    %2444 = vmatpush1.msra.mxu0 0.0
    %2445 = vmatprep.subr.mxu0 0.0
    %2446 = vmatpush1.msra.mxu0 0.0
    %2447 = vmatprep.subr.mxu0 0.0
    %2448 = vmatpush1.msra.mxu0 0.0
    %2449 = vmatprep.subr.mxu0 0.0
    %2450 = vmatpush1.msra.mxu0 0.0
    %2451 = vmatprep.subr.mxu0 0.0
    %2452 = vmatpush1.msra.mxu0 0.0
    %2453 = vmatprep.mubr.f32.mxu0 0.0
    %v2454 = vand.u32 %v2024, 4294901760
    %2455 = vmatmul.mubr.f32.gmra.mrb[0].mxu0 %v2454
    %v2456 = vpop.f32.mrb[0].mxu0
    %v2457 = vadd.f32 %v2370, %v2456
    %v2458 = vpop.f32.mrb[0].mxu0
    %v2459 = vadd.f32 %v2372, %v2458
    %2460 = vmatprep.mubr.f32.mxu0 0.0
    %v2461 = vand.u32 %v2027, 4294901760
    %2462 = vmatmul.mubr.f32.gmra.mrb[0].mxu0 %v2461
    %v2463 = vpop.f32.mrb[0].mxu0
    %v2464 = vadd.f32 %v2379, %v2463
    %v2465 = vpop.f32.mrb[0].mxu0
    %v2466 = vadd.f32 %v2381, %v2465
    %2467 = vdwg.mxu0
    %v2468 = vand.u32 %v2033, 4294901760
    %2469 = vmatprep.subr.mxu0 %v2468
    %v2470 = vand.u32 %v2030, 4294901760
    %2471 = vmatpush1.msra.mxu0 %v2470
    %2472 = vmatprep.subr.mxu0 0.0
    %2473 = vmatpush1.msra.mxu0 0.0
    %2474 = vmatprep.subr.mxu0 0.0
    %2475 = vmatpush1.msra.mxu0 0.0
    %2476 = vmatprep.subr.mxu0 0.0
    %2477 = vmatpush1.msra.mxu0 0.0
    %2478 = vmatprep.subr.mxu0 0.0
    %2479 = vmatpush1.msra.mxu0 0.0
    %2480 = vmatprep.subr.mxu0 0.0
    %2481 = vmatpush1.msra.mxu0 0.0
    %2482 = vmatprep.subr.mxu0 0.0
    %2483 = vmatpush1.msra.mxu0 0.0
    %2484 = vmatprep.subr.mxu0 0.0
    %2485 = vmatpush1.msra.mxu0 0.0
    %2486 = vmatprep.subr.mxu0 0.0
    %2487 = vmatpush1.msra.mxu0 0.0
    %2488 = vmatprep.subr.mxu0 0.0
    %2489 = vmatpush1.msra.mxu0 0.0
    %2490 = vmatprep.subr.mxu0 0.0
    %2491 = vmatpush1.msra.mxu0 0.0
    %2492 = vmatprep.subr.mxu0 0.0
    %2493 = vmatpush1.msra.mxu0 0.0
    %2494 = vmatprep.subr.mxu0 0.0
    %2495 = vmatpush1.msra.mxu0 0.0
    %2496 = vmatprep.subr.mxu0 0.0
    %2497 = vmatpush1.msra.mxu0 0.0
    %2498 = vmatprep.subr.mxu0 0.0
    %2499 = vmatpush1.msra.mxu0 0.0
    %2500 = vmatprep.subr.mxu0 0.0
    %2501 = vmatpush1.msra.mxu0 0.0
    %2502 = vmatprep.subr.mxu0 0.0
    %2503 = vmatpush1.msra.mxu0 0.0
    %2504 = vmatprep.subr.mxu0 0.0
    %2505 = vmatpush1.msra.mxu0 0.0
    %2506 = vmatprep.subr.mxu0 0.0
    %2507 = vmatpush1.msra.mxu0 0.0
    %2508 = vmatprep.subr.mxu0 0.0
    %2509 = vmatpush1.msra.mxu0 0.0
    %2510 = vmatprep.subr.mxu0 0.0
    %2511 = vmatpush1.msra.mxu0 0.0
    %2512 = vmatprep.subr.mxu0 0.0
    %2513 = vmatpush1.msra.mxu0 0.0
    %2514 = vmatprep.subr.mxu0 0.0
    %2515 = vmatpush1.msra.mxu0 0.0
    %2516 = vmatprep.subr.mxu0 0.0
    %2517 = vmatpush1.msra.mxu0 0.0
    %2518 = vmatprep.subr.mxu0 0.0
    %2519 = vmatpush1.msra.mxu0 0.0
    %2520 = vmatprep.subr.mxu0 0.0
    %2521 = vmatpush1.msra.mxu0 0.0
    %2522 = vmatprep.subr.mxu0 0.0
    %2523 = vmatpush1.msra.mxu0 0.0
    %2524 = vmatprep.subr.mxu0 0.0
    %2525 = vmatpush1.msra.mxu0 0.0
    %2526 = vmatprep.subr.mxu0 0.0
    %2527 = vmatpush1.msra.mxu0 0.0
    %2528 = vmatprep.subr.mxu0 0.0
    %2529 = vmatpush1.msra.mxu0 0.0
    %2530 = vmatprep.subr.mxu0 0.0
    %2531 = vmatpush1.msra.mxu0 0.0
    %2532 = vmatprep.subr.mxu0 0.0
    %2533 = vmatpush1.msra.mxu0 0.0
    %2534 = vmatprep.mubr.f32.mxu0 0.0
    %v2535 = vand.u32 %v2024, 4294901760
    %2536 = vmatmul.mubr.f32.gmra.mrb[0].mxu0 %v2535
    %v2537 = vpop.f32.mrb[0].mxu0
    %v2538 = vadd.f32 %v2457, %v2537
    %v2539 = vpop.f32.mrb[0].mxu0
    %v2540 = vadd.f32 %v2459, %v2539
    %2541 = vmatprep.mubr.f32.mxu0 0.0
    %v2542 = vand.u32 %v2027, 4294901760
    %2543 = vmatmul.mubr.f32.gmra.mrb[0].mxu0 %v2542
    %v2544 = vpop.f32.mrb[0].mxu0
    %v2545 = vadd.f32 %v2464, %v2544
    %v2546 = vpop.f32.mrb[0].mxu0
    %v2547 = vadd.f32 %v2466, %v2546
    %2548 = vdwg.mxu0
    %v2550 = vsel %vm109, %v2019, 0
    %v2553 = vsel %vm109, %v2020, 0
    %v2556 = vsel %vm113, %v1534, 0
    %v2559 = vsel %vm113, %v1536, 0
    %v2561 = vand.u32 %v2559, 4294901760
    %2562 = vmatprep.subr.mxu0 %v2561
    %v2563 = vand.u32 %v2556, 4294901760
    %2564 = vmatpush1.msra.mxu0 %v2563
    %2565 = vmatprep.subr.mxu0 0.0
    %2566 = vmatpush1.msra.mxu0 0.0
    %2567 = vmatprep.subr.mxu0 0.0
    %2568 = vmatpush1.msra.mxu0 0.0
    %2569 = vmatprep.subr.mxu0 0.0
    %2570 = vmatpush1.msra.mxu0 0.0
    %2571 = vmatprep.subr.mxu0 0.0
    %2572 = vmatpush1.msra.mxu0 0.0
    %2573 = vmatprep.subr.mxu0 0.0
    %2574 = vmatpush1.msra.mxu0 0.0
    %2575 = vmatprep.subr.mxu0 0.0
    %2576 = vmatpush1.msra.mxu0 0.0
    %2577 = vmatprep.subr.mxu0 0.0
    %2578 = vmatpush1.msra.mxu0 0.0
    %2579 = vmatprep.subr.mxu0 0.0
    %2580 = vmatpush1.msra.mxu0 0.0
    %2581 = vmatprep.subr.mxu0 0.0
    %2582 = vmatpush1.msra.mxu0 0.0
    %2583 = vmatprep.subr.mxu0 0.0
    %2584 = vmatpush1.msra.mxu0 0.0
    %2585 = vmatprep.subr.mxu0 0.0
    %2586 = vmatpush1.msra.mxu0 0.0
    %2587 = vmatprep.subr.mxu0 0.0
    %2588 = vmatpush1.msra.mxu0 0.0
    %2589 = vmatprep.subr.mxu0 0.0
    %2590 = vmatpush1.msra.mxu0 0.0
    %2591 = vmatprep.subr.mxu0 0.0
    %2592 = vmatpush1.msra.mxu0 0.0
    %2593 = vmatprep.subr.mxu0 0.0
    %2594 = vmatpush1.msra.mxu0 0.0
    %2595 = vmatprep.subr.mxu0 0.0
    %2596 = vmatpush1.msra.mxu0 0.0
    %2597 = vmatprep.subr.mxu0 0.0
    %2598 = vmatpush1.msra.mxu0 0.0
    %2599 = vmatprep.subr.mxu0 0.0
    %2600 = vmatpush1.msra.mxu0 0.0
    %2601 = vmatprep.subr.mxu0 0.0
    %2602 = vmatpush1.msra.mxu0 0.0
    %2603 = vmatprep.subr.mxu0 0.0
    %2604 = vmatpush1.msra.mxu0 0.0
    %2605 = vmatprep.subr.mxu0 0.0
    %2606 = vmatpush1.msra.mxu0 0.0
    %2607 = vmatprep.subr.mxu0 0.0
    %2608 = vmatpush1.msra.mxu0 0.0
    %2609 = vmatprep.subr.mxu0 0.0
    %2610 = vmatpush1.msra.mxu0 0.0
    %2611 = vmatprep.subr.mxu0 0.0
    %2612 = vmatpush1.msra.mxu0 0.0
    %2613 = vmatprep.subr.mxu0 0.0
    %2614 = vmatpush1.msra.mxu0 0.0
    %2615 = vmatprep.subr.mxu0 0.0
    %2616 = vmatpush1.msra.mxu0 0.0
    %2617 = vmatprep.subr.mxu0 0.0
    %2618 = vmatpush1.msra.mxu0 0.0
    %2619 = vmatprep.subr.mxu0 0.0
    %2620 = vmatpush1.msra.mxu0 0.0
    %2621 = vmatprep.subr.mxu0 0.0
    %2622 = vmatpush1.msra.mxu0 0.0
    %2623 = vmatprep.subr.mxu0 0.0
    %2624 = vmatpush1.msra.mxu0 0.0
    %2625 = vmatprep.subr.mxu0 0.0
    %2626 = vmatpush1.msra.mxu0 0.0
    %2627 = vmatprep.mubr.f32.mxu0 0.0
    %v2628 = vand.u32 %v2550, 4294901760
    %v2629 = vsub.f32 %v2550, %v2628
    %v2630 = vand.u32 %v2629, 4294901760
    %v2631 = vsub.f32 %v2629, %v2630
    %v2632 = vand.u32 %v2631, 4294901760
    %2633 = vmatmul.mubr.f32.gmra.mrb[0].mxu0 %v2632
    %v2634 = vpop.f32.mrb[0].mxu0
    %v2635 = vadd.f32 %v2538, %v2634
    %v2636 = vpop.f32.mrb[0].mxu0
    %v2637 = vadd.f32 %v2540, %v2636
    %2638 = vmatprep.mubr.f32.mxu0 0.0
    %v2639 = vand.u32 %v2553, 4294901760
    %v2640 = vsub.f32 %v2553, %v2639
    %v2641 = vand.u32 %v2640, 4294901760
    %v2642 = vsub.f32 %v2640, %v2641
    %v2643 = vand.u32 %v2642, 4294901760
    %2644 = vmatmul.mubr.f32.gmra.mrb[0].mxu0 %v2643
    %v2645 = vpop.f32.mrb[0].mxu0
    %v2646 = vadd.f32 %v2545, %v2645
    %v2647 = vpop.f32.mrb[0].mxu0
    %v2648 = vadd.f32 %v2547, %v2647
    %2649 = vdwg.mxu0
    %v2650 = vand.u32 %v2559, 4294901760
    %v2651 = vsub.f32 %v2559, %v2650
    %v2652 = vand.u32 %v2651, 4294901760
    %v2653 = vsub.f32 %v2651, %v2652
    %v2654 = vand.u32 %v2653, 4294901760
    %2655 = vmatprep.subr.mxu0 %v2654
    %v2656 = vand.u32 %v2556, 4294901760
    %v2657 = vsub.f32 %v2556, %v2656
    %v2658 = vand.u32 %v2657, 4294901760
    %v2659 = vsub.f32 %v2657, %v2658
    %v2660 = vand.u32 %v2659, 4294901760
    %2661 = vmatpush1.msra.mxu0 %v2660
    %2662 = vmatprep.subr.mxu0 0.0
    %2663 = vmatpush1.msra.mxu0 0.0
    %2664 = vmatprep.subr.mxu0 0.0
    %2665 = vmatpush1.msra.mxu0 0.0
    %2666 = vmatprep.subr.mxu0 0.0
    %2667 = vmatpush1.msra.mxu0 0.0
    %2668 = vmatprep.subr.mxu0 0.0
    %2669 = vmatpush1.msra.mxu0 0.0
    %2670 = vmatprep.subr.mxu0 0.0
    %2671 = vmatpush1.msra.mxu0 0.0
    %2672 = vmatprep.subr.mxu0 0.0
    %2673 = vmatpush1.msra.mxu0 0.0
    %2674 = vmatprep.subr.mxu0 0.0
    %2675 = vmatpush1.msra.mxu0 0.0
    %2676 = vmatprep.subr.mxu0 0.0
    %2677 = vmatpush1.msra.mxu0 0.0
    %2678 = vmatprep.subr.mxu0 0.0
    %2679 = vmatpush1.msra.mxu0 0.0
    %2680 = vmatprep.subr.mxu0 0.0
    %2681 = vmatpush1.msra.mxu0 0.0
    %2682 = vmatprep.subr.mxu0 0.0
    %2683 = vmatpush1.msra.mxu0 0.0
    %2684 = vmatprep.subr.mxu0 0.0
    %2685 = vmatpush1.msra.mxu0 0.0
    %2686 = vmatprep.subr.mxu0 0.0
    %2687 = vmatpush1.msra.mxu0 0.0
    %2688 = vmatprep.subr.mxu0 0.0
    %2689 = vmatpush1.msra.mxu0 0.0
    %2690 = vmatprep.subr.mxu0 0.0
    %2691 = vmatpush1.msra.mxu0 0.0
    %2692 = vmatprep.subr.mxu0 0.0
    %2693 = vmatpush1.msra.mxu0 0.0
    %2694 = vmatprep.subr.mxu0 0.0
    %2695 = vmatpush1.msra.mxu0 0.0
    %2696 = vmatprep.subr.mxu0 0.0
    %2697 = vmatpush1.msra.mxu0 0.0
    %2698 = vmatprep.subr.mxu0 0.0
    %2699 = vmatpush1.msra.mxu0 0.0
    %2700 = vmatprep.subr.mxu0 0.0
    %2701 = vmatpush1.msra.mxu0 0.0
    %2702 = vmatprep.subr.mxu0 0.0
    %2703 = vmatpush1.msra.mxu0 0.0
    %2704 = vmatprep.subr.mxu0 0.0
    %2705 = vmatpush1.msra.mxu0 0.0
    %2706 = vmatprep.subr.mxu0 0.0
    %2707 = vmatpush1.msra.mxu0 0.0
    %2708 = vmatprep.subr.mxu0 0.0
    %2709 = vmatpush1.msra.mxu0 0.0
    %2710 = vmatprep.subr.mxu0 0.0
    %2711 = vmatpush1.msra.mxu0 0.0
    %2712 = vmatprep.subr.mxu0 0.0
    %2713 = vmatpush1.msra.mxu0 0.0
    %2714 = vmatprep.subr.mxu0 0.0
    %2715 = vmatpush1.msra.mxu0 0.0
    %2716 = vmatprep.subr.mxu0 0.0
    %2717 = vmatpush1.msra.mxu0 0.0
    %2718 = vmatprep.subr.mxu0 0.0
    %2719 = vmatpush1.msra.mxu0 0.0
    %2720 = vmatprep.subr.mxu0 0.0
    %2721 = vmatpush1.msra.mxu0 0.0
    %2722 = vmatprep.subr.mxu0 0.0
    %2723 = vmatpush1.msra.mxu0 0.0
    %2724 = vmatprep.mubr.f32.mxu0 0.0
    %v2725 = vand.u32 %v2550, 4294901760
    %2726 = vmatmul.mubr.f32.gmra.mrb[0].mxu0 %v2725
    %v2727 = vpop.f32.mrb[0].mxu0
    %v2728 = vadd.f32 %v2635, %v2727
    %v2729 = vpop.f32.mrb[0].mxu0
    %v2730 = vadd.f32 %v2637, %v2729
    %2731 = vmatprep.mubr.f32.mxu0 0.0
    %v2732 = vand.u32 %v2553, 4294901760
    %2733 = vmatmul.mubr.f32.gmra.mrb[0].mxu0 %v2732
    %v2734 = vpop.f32.mrb[0].mxu0
    %v2735 = vadd.f32 %v2646, %v2734
    %v2736 = vpop.f32.mrb[0].mxu0
    %v2737 = vadd.f32 %v2648, %v2736
    %2738 = vdwg.mxu0
    %v2739 = vand.u32 %v2559, 4294901760
    %v2740 = vsub.f32 %v2559, %v2739
    %2741 = vmatprep.subr.mxu0 %v2740
    %v2742 = vand.u32 %v2556, 4294901760
    %v2743 = vsub.f32 %v2556, %v2742
    %2744 = vmatpush1.msra.mxu0 %v2743
    %2745 = vmatprep.subr.mxu0 0.0
    %2746 = vmatpush1.msra.mxu0 0.0
    %2747 = vmatprep.subr.mxu0 0.0
    %2748 = vmatpush1.msra.mxu0 0.0
    %2749 = vmatprep.subr.mxu0 0.0
    %2750 = vmatpush1.msra.mxu0 0.0
    %2751 = vmatprep.subr.mxu0 0.0
    %2752 = vmatpush1.msra.mxu0 0.0
    %2753 = vmatprep.subr.mxu0 0.0
    %2754 = vmatpush1.msra.mxu0 0.0
    %2755 = vmatprep.subr.mxu0 0.0
    %2756 = vmatpush1.msra.mxu0 0.0
    %2757 = vmatprep.subr.mxu0 0.0
    %2758 = vmatpush1.msra.mxu0 0.0
    %2759 = vmatprep.subr.mxu0 0.0
    %2760 = vmatpush1.msra.mxu0 0.0
    %2761 = vmatprep.subr.mxu0 0.0
    %2762 = vmatpush1.msra.mxu0 0.0
    %2763 = vmatprep.subr.mxu0 0.0
    %2764 = vmatpush1.msra.mxu0 0.0
    %2765 = vmatprep.subr.mxu0 0.0
    %2766 = vmatpush1.msra.mxu0 0.0
    %2767 = vmatprep.subr.mxu0 0.0
    %2768 = vmatpush1.msra.mxu0 0.0
    %2769 = vmatprep.subr.mxu0 0.0
    %2770 = vmatpush1.msra.mxu0 0.0
    %2771 = vmatprep.subr.mxu0 0.0
    %2772 = vmatpush1.msra.mxu0 0.0
    %2773 = vmatprep.subr.mxu0 0.0
    %2774 = vmatpush1.msra.mxu0 0.0
    %2775 = vmatprep.subr.mxu0 0.0
    %2776 = vmatpush1.msra.mxu0 0.0
    %2777 = vmatprep.subr.mxu0 0.0
    %2778 = vmatpush1.msra.mxu0 0.0
    %2779 = vmatprep.subr.mxu0 0.0
    %2780 = vmatpush1.msra.mxu0 0.0
    %2781 = vmatprep.subr.mxu0 0.0
    %2782 = vmatpush1.msra.mxu0 0.0
    %2783 = vmatprep.subr.mxu0 0.0
    %2784 = vmatpush1.msra.mxu0 0.0
    %2785 = vmatprep.subr.mxu0 0.0
    %2786 = vmatpush1.msra.mxu0 0.0
    %2787 = vmatprep.subr.mxu0 0.0
    %2788 = vmatpush1.msra.mxu0 0.0
    %2789 = vmatprep.subr.mxu0 0.0
    %2790 = vmatpush1.msra.mxu0 0.0
    %2791 = vmatprep.subr.mxu0 0.0
    %2792 = vmatpush1.msra.mxu0 0.0
    %2793 = vmatprep.subr.mxu0 0.0
    %2794 = vmatpush1.msra.mxu0 0.0
    %2795 = vmatprep.subr.mxu0 0.0
    %2796 = vmatpush1.msra.mxu0 0.0
    %2797 = vmatprep.subr.mxu0 0.0
    %2798 = vmatpush1.msra.mxu0 0.0
    %2799 = vmatprep.subr.mxu0 0.0
    %2800 = vmatpush1.msra.mxu0 0.0
    %2801 = vmatprep.subr.mxu0 0.0
    %2802 = vmatpush1.msra.mxu0 0.0
    %2803 = vmatprep.subr.mxu0 0.0
    %2804 = vmatpush1.msra.mxu0 0.0
    %2805 = vmatprep.subr.mxu0 0.0
    %2806 = vmatpush1.msra.mxu0 0.0
    %2807 = vmatprep.mubr.f32.mxu0 0.0
    %v2808 = vand.u32 %v2550, 4294901760
    %v2809 = vsub.f32 %v2550, %v2808
    %2810 = vmatmul.mubr.f32.gmra.mrb[0].mxu0 %v2809
    %v2811 = vpop.f32.mrb[0].mxu0
    %v2812 = vadd.f32 %v2728, %v2811
    %v2813 = vpop.f32.mrb[0].mxu0
    %v2814 = vadd.f32 %v2730, %v2813
    %2815 = vmatprep.mubr.f32.mxu0 0.0
    %v2816 = vand.u32 %v2553, 4294901760
    %v2817 = vsub.f32 %v2553, %v2816
    %2818 = vmatmul.mubr.f32.gmra.mrb[0].mxu0 %v2817
    %v2819 = vpop.f32.mrb[0].mxu0
    %v2820 = vadd.f32 %v2735, %v2819
    %v2821 = vpop.f32.mrb[0].mxu0
    %v2822 = vadd.f32 %v2737, %v2821
    %2823 = vdwg.mxu0
    %v2824 = vand.u32 %v2559, 4294901760
    %2825 = vmatprep.subr.mxu0 %v2824
    %v2826 = vand.u32 %v2556, 4294901760
    %2827 = vmatpush1.msra.mxu0 %v2826
    %2828 = vmatprep.subr.mxu0 0.0
    %2829 = vmatpush1.msra.mxu0 0.0
    %2830 = vmatprep.subr.mxu0 0.0
    %2831 = vmatpush1.msra.mxu0 0.0
    %2832 = vmatprep.subr.mxu0 0.0
    %2833 = vmatpush1.msra.mxu0 0.0
    %2834 = vmatprep.subr.mxu0 0.0
    %2835 = vmatpush1.msra.mxu0 0.0
    %2836 = vmatprep.subr.mxu0 0.0
    %2837 = vmatpush1.msra.mxu0 0.0
    %2838 = vmatprep.subr.mxu0 0.0
    %2839 = vmatpush1.msra.mxu0 0.0
    %2840 = vmatprep.subr.mxu0 0.0
    %2841 = vmatpush1.msra.mxu0 0.0
    %2842 = vmatprep.subr.mxu0 0.0
    %2843 = vmatpush1.msra.mxu0 0.0
    %2844 = vmatprep.subr.mxu0 0.0
    %2845 = vmatpush1.msra.mxu0 0.0
    %2846 = vmatprep.subr.mxu0 0.0
    %2847 = vmatpush1.msra.mxu0 0.0
    %2848 = vmatprep.subr.mxu0 0.0
    %2849 = vmatpush1.msra.mxu0 0.0
    %2850 = vmatprep.subr.mxu0 0.0
    %2851 = vmatpush1.msra.mxu0 0.0
    %2852 = vmatprep.subr.mxu0 0.0
    %2853 = vmatpush1.msra.mxu0 0.0
    %2854 = vmatprep.subr.mxu0 0.0
    %2855 = vmatpush1.msra.mxu0 0.0
    %2856 = vmatprep.subr.mxu0 0.0
    %2857 = vmatpush1.msra.mxu0 0.0
    %2858 = vmatprep.subr.mxu0 0.0
    %2859 = vmatpush1.msra.mxu0 0.0
    %2860 = vmatprep.subr.mxu0 0.0
    %2861 = vmatpush1.msra.mxu0 0.0
    %2862 = vmatprep.subr.mxu0 0.0
    %2863 = vmatpush1.msra.mxu0 0.0
    %2864 = vmatprep.subr.mxu0 0.0
    %2865 = vmatpush1.msra.mxu0 0.0
    %2866 = vmatprep.subr.mxu0 0.0
    %2867 = vmatpush1.msra.mxu0 0.0
    %2868 = vmatprep.subr.mxu0 0.0
    %2869 = vmatpush1.msra.mxu0 0.0
    %2870 = vmatprep.subr.mxu0 0.0
    %2871 = vmatpush1.msra.mxu0 0.0
    %2872 = vmatprep.subr.mxu0 0.0
    %2873 = vmatpush1.msra.mxu0 0.0
    %2874 = vmatprep.subr.mxu0 0.0
    %2875 = vmatpush1.msra.mxu0 0.0
    %2876 = vmatprep.subr.mxu0 0.0
    %2877 = vmatpush1.msra.mxu0 0.0
    %2878 = vmatprep.subr.mxu0 0.0
    %2879 = vmatpush1.msra.mxu0 0.0
    %2880 = vmatprep.subr.mxu0 0.0
    %2881 = vmatpush1.msra.mxu0 0.0
    %2882 = vmatprep.subr.mxu0 0.0
    %2883 = vmatpush1.msra.mxu0 0.0
    %2884 = vmatprep.subr.mxu0 0.0
    %2885 = vmatpush1.msra.mxu0 0.0
    %2886 = vmatprep.subr.mxu0 0.0
    %2887 = vmatpush1.msra.mxu0 0.0
    %2888 = vmatprep.subr.mxu0 0.0
    %2889 = vmatpush1.msra.mxu0 0.0
    %2890 = vmatprep.mubr.f32.mxu0 0.0
    %v2891 = vand.u32 %v2550, 4294901760
    %v2892 = vsub.f32 %v2550, %v2891
    %v2893 = vand.u32 %v2892, 4294901760
    %2894 = vmatmul.mubr.f32.gmra.mrb[0].mxu0 %v2893
    %v2895 = vpop.f32.mrb[0].mxu0
    %v2896 = vadd.f32 %v2812, %v2895
    %v2897 = vpop.f32.mrb[0].mxu0
    %v2898 = vadd.f32 %v2814, %v2897
    %2899 = vmatprep.mubr.f32.mxu0 0.0
    %v2900 = vand.u32 %v2553, 4294901760
    %v2901 = vsub.f32 %v2553, %v2900
    %v2902 = vand.u32 %v2901, 4294901760
    %2903 = vmatmul.mubr.f32.gmra.mrb[0].mxu0 %v2902
    %v2904 = vpop.f32.mrb[0].mxu0
    %v2905 = vadd.f32 %v2820, %v2904
    %v2906 = vpop.f32.mrb[0].mxu0
    %v2907 = vadd.f32 %v2822, %v2906
    %2908 = vdwg.mxu0
    %v2909 = vand.u32 %v2559, 4294901760
    %v2910 = vsub.f32 %v2559, %v2909
    %v2911 = vand.u32 %v2910, 4294901760
    %2912 = vmatprep.subr.mxu0 %v2911
    %v2913 = vand.u32 %v2556, 4294901760
    %v2914 = vsub.f32 %v2556, %v2913
    %v2915 = vand.u32 %v2914, 4294901760
    %2916 = vmatpush1.msra.mxu0 %v2915
    %2917 = vmatprep.subr.mxu0 0.0
    %2918 = vmatpush1.msra.mxu0 0.0
    %2919 = vmatprep.subr.mxu0 0.0
    %2920 = vmatpush1.msra.mxu0 0.0
    %2921 = vmatprep.subr.mxu0 0.0
    %2922 = vmatpush1.msra.mxu0 0.0
    %2923 = vmatprep.subr.mxu0 0.0
    %2924 = vmatpush1.msra.mxu0 0.0
    %2925 = vmatprep.subr.mxu0 0.0
    %2926 = vmatpush1.msra.mxu0 0.0
    %2927 = vmatprep.subr.mxu0 0.0
    %2928 = vmatpush1.msra.mxu0 0.0
    %2929 = vmatprep.subr.mxu0 0.0
    %2930 = vmatpush1.msra.mxu0 0.0
    %2931 = vmatprep.subr.mxu0 0.0
    %2932 = vmatpush1.msra.mxu0 0.0
    %2933 = vmatprep.subr.mxu0 0.0
    %2934 = vmatpush1.msra.mxu0 0.0
    %2935 = vmatprep.subr.mxu0 0.0
    %2936 = vmatpush1.msra.mxu0 0.0
    %2937 = vmatprep.subr.mxu0 0.0
    %2938 = vmatpush1.msra.mxu0 0.0
    %2939 = vmatprep.subr.mxu0 0.0
    %2940 = vmatpush1.msra.mxu0 0.0
    %2941 = vmatprep.subr.mxu0 0.0
    %2942 = vmatpush1.msra.mxu0 0.0
    %2943 = vmatprep.subr.mxu0 0.0
    %2944 = vmatpush1.msra.mxu0 0.0
    %2945 = vmatprep.subr.mxu0 0.0
    %2946 = vmatpush1.msra.mxu0 0.0
    %2947 = vmatprep.subr.mxu0 0.0
    %2948 = vmatpush1.msra.mxu0 0.0
    %2949 = vmatprep.subr.mxu0 0.0
    %2950 = vmatpush1.msra.mxu0 0.0
    %2951 = vmatprep.subr.mxu0 0.0
    %2952 = vmatpush1.msra.mxu0 0.0
    %2953 = vmatprep.subr.mxu0 0.0
    %2954 = vmatpush1.msra.mxu0 0.0
    %2955 = vmatprep.subr.mxu0 0.0
    %2956 = vmatpush1.msra.mxu0 0.0
    %2957 = vmatprep.subr.mxu0 0.0
    %2958 = vmatpush1.msra.mxu0 0.0
    %2959 = vmatprep.subr.mxu0 0.0
    %2960 = vmatpush1.msra.mxu0 0.0
    %2961 = vmatprep.subr.mxu0 0.0
    %2962 = vmatpush1.msra.mxu0 0.0
    %2963 = vmatprep.subr.mxu0 0.0
    %2964 = vmatpush1.msra.mxu0 0.0
    %2965 = vmatprep.subr.mxu0 0.0
    %2966 = vmatpush1.msra.mxu0 0.0
    %2967 = vmatprep.subr.mxu0 0.0
    %2968 = vmatpush1.msra.mxu0 0.0
    %2969 = vmatprep.subr.mxu0 0.0
    %2970 = vmatpush1.msra.mxu0 0.0
    %2971 = vmatprep.subr.mxu0 0.0
    %2972 = vmatpush1.msra.mxu0 0.0
    %2973 = vmatprep.subr.mxu0 0.0
    %2974 = vmatpush1.msra.mxu0 0.0
    %2975 = vmatprep.subr.mxu0 0.0
    %2976 = vmatpush1.msra.mxu0 0.0
    %2977 = vmatprep.subr.mxu0 0.0
    %2978 = vmatpush1.msra.mxu0 0.0
    %2979 = vmatprep.mubr.f32.mxu0 0.0
    %v2980 = vand.u32 %v2550, 4294901760
    %2981 = vmatmul.mubr.f32.gmra.mrb[0].mxu0 %v2980
    %v2982 = vpop.f32.mrb[0].mxu0
    %v2983 = vadd.f32 %v2896, %v2982
    %v2984 = vpop.f32.mrb[0].mxu0
    %v2985 = vadd.f32 %v2898, %v2984
    %2986 = vmatprep.mubr.f32.mxu0 0.0
    %v2987 = vand.u32 %v2553, 4294901760
    %2988 = vmatmul.mubr.f32.gmra.mrb[0].mxu0 %v2987
    %v2989 = vpop.f32.mrb[0].mxu0
    %v2990 = vadd.f32 %v2905, %v2989
    %v2991 = vpop.f32.mrb[0].mxu0
    %v2992 = vadd.f32 %v2907, %v2991
    %2993 = vdwg.mxu0
    %v2994 = vand.u32 %v2559, 4294901760
    %2995 = vmatprep.subr.mxu0 %v2994
    %v2996 = vand.u32 %v2556, 4294901760
    %2997 = vmatpush1.msra.mxu0 %v2996
    %2998 = vmatprep.subr.mxu0 0.0
    %2999 = vmatpush1.msra.mxu0 0.0
    %3000 = vmatprep.subr.mxu0 0.0
    %3001 = vmatpush1.msra.mxu0 0.0
    %3002 = vmatprep.subr.mxu0 0.0
    %3003 = vmatpush1.msra.mxu0 0.0
    %3004 = vmatprep.subr.mxu0 0.0
    %3005 = vmatpush1.msra.mxu0 0.0
    %3006 = vmatprep.subr.mxu0 0.0
    %3007 = vmatpush1.msra.mxu0 0.0
    %3008 = vmatprep.subr.mxu0 0.0
    %3009 = vmatpush1.msra.mxu0 0.0
    %3010 = vmatprep.subr.mxu0 0.0
    %3011 = vmatpush1.msra.mxu0 0.0
    %3012 = vmatprep.subr.mxu0 0.0
    %3013 = vmatpush1.msra.mxu0 0.0
    %3014 = vmatprep.subr.mxu0 0.0
    %3015 = vmatpush1.msra.mxu0 0.0
    %3016 = vmatprep.subr.mxu0 0.0
    %3017 = vmatpush1.msra.mxu0 0.0
    %3018 = vmatprep.subr.mxu0 0.0
    %3019 = vmatpush1.msra.mxu0 0.0
    %3020 = vmatprep.subr.mxu0 0.0
    %3021 = vmatpush1.msra.mxu0 0.0
    %3022 = vmatprep.subr.mxu0 0.0
    %3023 = vmatpush1.msra.mxu0 0.0
    %3024 = vmatprep.subr.mxu0 0.0
    %3025 = vmatpush1.msra.mxu0 0.0
    %3026 = vmatprep.subr.mxu0 0.0
    %3027 = vmatpush1.msra.mxu0 0.0
    %3028 = vmatprep.subr.mxu0 0.0
    %3029 = vmatpush1.msra.mxu0 0.0
    %3030 = vmatprep.subr.mxu0 0.0
    %3031 = vmatpush1.msra.mxu0 0.0
    %3032 = vmatprep.subr.mxu0 0.0
    %3033 = vmatpush1.msra.mxu0 0.0
    %3034 = vmatprep.subr.mxu0 0.0
    %3035 = vmatpush1.msra.mxu0 0.0
    %3036 = vmatprep.subr.mxu0 0.0
    %3037 = vmatpush1.msra.mxu0 0.0
    %3038 = vmatprep.subr.mxu0 0.0
    %3039 = vmatpush1.msra.mxu0 0.0
    %3040 = vmatprep.subr.mxu0 0.0
    %3041 = vmatpush1.msra.mxu0 0.0
    %3042 = vmatprep.subr.mxu0 0.0
    %3043 = vmatpush1.msra.mxu0 0.0
    %3044 = vmatprep.subr.mxu0 0.0
    %3045 = vmatpush1.msra.mxu0 0.0
    %3046 = vmatprep.subr.mxu0 0.0
    %3047 = vmatpush1.msra.mxu0 0.0
    %3048 = vmatprep.subr.mxu0 0.0
    %3049 = vmatpush1.msra.mxu0 0.0
    %3050 = vmatprep.subr.mxu0 0.0
    %3051 = vmatpush1.msra.mxu0 0.0
    %3052 = vmatprep.subr.mxu0 0.0
    %3053 = vmatpush1.msra.mxu0 0.0
    %3054 = vmatprep.subr.mxu0 0.0
    %3055 = vmatpush1.msra.mxu0 0.0
    %3056 = vmatprep.subr.mxu0 0.0
    %3057 = vmatpush1.msra.mxu0 0.0
    %3058 = vmatprep.subr.mxu0 0.0
    %3059 = vmatpush1.msra.mxu0 0.0
    %3060 = vmatprep.mubr.f32.mxu0 0.0
    %v3061 = vand.u32 %v2550, 4294901760
    %3062 = vmatmul.mubr.f32.gmra.mrb[0].mxu0 %v3061
    %v3063 = vpop.f32.mrb[0].mxu0
    %v3064 = vadd.f32 %v2983, %v3063
    %v3065 = vpop.f32.mrb[0].mxu0
    %v3066 = vadd.f32 %v2985, %v3065
    %3067 = vmatprep.mubr.f32.mxu0 0.0
    %v3068 = vand.u32 %v2553, 4294901760
    %3069 = vmatmul.mubr.f32.gmra.mrb[0].mxu0 %v3068
    %v3070 = vpop.f32.mrb[0].mxu0
    %v3071 = vadd.f32 %v2990, %v3070
    %v3072 = vpop.f32.mrb[0].mxu0
    %v3073 = vadd.f32 %v2992, %v3072
    %3074 = vdwg.mxu0
    %v3075 = vand.u32 2147483647, %v3064
    %vm3076 = vcmp.le.f32.partialorder %v3075, 0.7853982
    %vm3077 = vcmp.lt.s32.totalorder %v3064, 0
    %v3078 = vand.u32 %v3064, 2139095040
    %v3079 = vshrl.u32 %v3078, 23
    %v3080 = vsub.s32 %v3079, 127
    %v3081 = vand.u32 2147483647, %v3064
    %v3082 = vand.u32 %v3081, 8388607
    %v3083 = vor.u32 %v3082, 8388608
    %v3084 = vsub.s32 0, %v3083
    %v3085 = vadd.s32 %v3080, 1
    %vm3086 = vcmp.gt.s32.totalorder %v3085, 0
    %v3087 = vsel %vm3086, %v3085, 0
    %v3088 = vshrl.u32 %v3087, 5
    %v3089 = vand.u32 %v3087, 31
    %v3090 = vsub.s32 32, %v3089
    %v3091 = vshrl.u32 683565275, %v3090
    %v3092 = vshll.u32 683565275, %v3089
    %v3093 = vshrl.u32 2475754826, %v3090
    %v3094 = vor.u32 %v3092, %v3093
    %v3095 = vshll.u32 2475754826, %v3089
    %v3096 = vshrl.u32 2131351028, %v3090
    %v3097 = vor.u32 %v3095, %v3096
    %v3098 = vshll.u32 2131351028, %v3089
    %v3099 = vshrl.u32 2102212464, %v3090
    %v3100 = vor.u32 %v3098, %v3099
    %v3101 = vshll.u32 2102212464, %v3089
    %v3102 = vshrl.u32 920167782, %v3090
    %v3103 = vor.u32 %v3101, %v3102
    %v3104 = vshll.u32 920167782, %v3089
    %v3105 = vshrl.u32 1326507024, %v3090
    %v3106 = vor.u32 %v3104, %v3105
    %vm3107 = vcmp.lt.s32.totalorder %v3088, 1
    %vm3108 = vcmp.lt.s32.totalorder %v3088, 2
    %vm3109 = vcmp.lt.s32.totalorder %v3088, 3
    %vm3110 = vcmp.lt.s32.totalorder %v3088, 4
    %v3111 = vsel %vm3107, %v3091, %v3094
    %v3112 = vsel %vm3110, %v3100, 2102212464
    %v3113 = vsel %vm3109, %v3097, %v3112
    %v3114 = vsel %vm3108, %v3111, %v3113
    %v3115 = vsel %vm3107, %v3094, %v3097
    %v3116 = vsel %vm3110, %v3103, 920167782
    %v3117 = vsel %vm3109, %v3100, %v3116
    %v3118 = vsel %vm3108, %v3115, %v3117
    %v3119 = vsel %vm3107, %v3097, %v3100
    %v3120 = vsel %vm3110, %v3106, 1326507024
    %v3121 = vsel %vm3109, %v3103, %v3120
    %v3122 = vsel %vm3108, %v3119, %v3121
    %v3123 = vshll.u32 %v3083, 8
    %v3124 = vmul.u32.u64.compose %v3123, %v3122
    %v3125 = vextract.low.u32 %v3124
    %v3126 = vextract.high.u32 %v3124
    %v3127 = vmul.u32.u64.compose %v3123, %v3118
    %v3128 = vextract.low.u32 %v3127
    %v3129 = vextract.high.u32 %v3127
    %v3130 = vmul.u32 %v3123, %v3114
    %v3131 = vadd.s32 %v3126, %v3128
    %vm3132 = vc.u32 %v3126, %v3128
    %v3133 = vadd.s32 %v3129, 1
    %v3134 = vsel %vm3132, %v3133, %v3129
    %v3135 = vadd.s32 %v3130, %v3134
    %v3136 = vadd.s32 %v3135, 536870912
    %v3137 = vshrl.u32 %v3136, 30
    %v3138 = vshll.u32 %v3137, 30
    %v3139 = vsub.s32 %v3135, %v3138
    %vm3140 = vcmp.lt.s32.totalorder %v3139, 0
    %v3141 = vsub.s32 0, %v3139
    %v3142 = vsel %vm3140, %v3141, %v3139
    %v3143 = vclz %v3142
    %v3144 = vsub.s32 %v3143, 2
    %vm3145 = vcmp.gt.s32.totalorder 0, %v3144
    %v3146 = vsel %vm3145, 0, %v3144
    %v3147 = vsub.s32 32, %v3146
    %v3148 = vshll.u32 %v3139, %v3146
    %v3149 = vshrl.u32 %v3131, %v3147
    %v3150 = vor.u32 %v3148, %v3149
    %v3151 = vsub.s32 4294967266, %v3146
    %v3152 = vadd.s32 %v3151, 127
    %v3153 = vshll.u32 %v3152, 23
    %v3154 = vor.u32 4788187, %v3153
    %v3155 = vand.u32 2147483647, %v3154
    %v3157 = vcvt.s32.f32 %v3150
    %v3158 = vmul.f32 %v3157, %v3155
    %v3159 = vxor.u32 %v3158, 2147483648
    %v3160 = vsel %vm3077, %v3159, %v3158
    %v3161 = vsub.s32 4, %v3137
    %v3162 = vsel %vm3077, %v3161, %v3137
    %v3163 = vsel %vm3076, %v3064, %v3160
    %v3164 = vsel %vm3076, 0, %v3162
    %v3165 = vcosq.f32.pop %v3163
    %v3166 = vsinq.f32.pop %v3163
    %vm3167 = vweird.f32 %v3064
    %v3168 = vand.u32 %v3164, 3
    %vm3169 = vcmp.lt.s32.totalorder %v3168, 2
    %vm3170 = vcmp.eq.s32.totalorder %v3168, 0
    %v3171 = vxor.u32 %v3166, 2147483648
    %v3172 = vsel %vm3170, %v3165, %v3171
    %vm3173 = vcmp.eq.s32.totalorder %v3168, 2
    %v3174 = vxor.u32 %v3165, 2147483648
    %v3175 = vsel %vm3173, %v3174, %v3166
    %v3176 = vsel %vm3169, %v3172, %v3175
    %v3177 = vsel %vm3167, nan, %v3176
    %v3178 = vand.u32 2147483647, %v3066
    %vm3179 = vcmp.le.f32.partialorder %v3178, 0.7853982
    %vm3180 = vcmp.lt.s32.totalorder %v3066, 0
    %v3181 = vand.u32 %v3066, 2139095040
    %v3182 = vshrl.u32 %v3181, 23
    %v3183 = vsub.s32 %v3182, 127
    %v3184 = vand.u32 2147483647, %v3066
    %v3185 = vand.u32 %v3184, 8388607
    %v3186 = vor.u32 %v3185, 8388608
    %v3187 = vsub.s32 0, %v3186
    %v3188 = vadd.s32 %v3183, 1
    %vm3189 = vcmp.gt.s32.totalorder %v3188, 0
    %v3190 = vsel %vm3189, %v3188, 0
    %v3191 = vshrl.u32 %v3190, 5
    %v3192 = vand.u32 %v3190, 31
    %v3193 = vsub.s32 32, %v3192
    %v3194 = vshrl.u32 683565275, %v3193
    %v3195 = vshll.u32 683565275, %v3192
    %v3196 = vshrl.u32 2475754826, %v3193
    %v3197 = vor.u32 %v3195, %v3196
    %v3198 = vshll.u32 2475754826, %v3192
    %v3199 = vshrl.u32 2131351028, %v3193
    %v3200 = vor.u32 %v3198, %v3199
    %v3201 = vshll.u32 2131351028, %v3192
    %v3202 = vshrl.u32 2102212464, %v3193
    %v3203 = vor.u32 %v3201, %v3202
    %v3204 = vshll.u32 2102212464, %v3192
    %v3205 = vshrl.u32 920167782, %v3193
    %v3206 = vor.u32 %v3204, %v3205
    %v3207 = vshll.u32 920167782, %v3192
    %v3208 = vshrl.u32 1326507024, %v3193
    %v3209 = vor.u32 %v3207, %v3208
    %vm3210 = vcmp.lt.s32.totalorder %v3191, 1
    %vm3211 = vcmp.lt.s32.totalorder %v3191, 2
    %vm3212 = vcmp.lt.s32.totalorder %v3191, 3
    %vm3213 = vcmp.lt.s32.totalorder %v3191, 4
    %v3214 = vsel %vm3210, %v3194, %v3197
    %v3215 = vsel %vm3213, %v3203, 2102212464
    %v3216 = vsel %vm3212, %v3200, %v3215
    %v3217 = vsel %vm3211, %v3214, %v3216
    %v3218 = vsel %vm3210, %v3197, %v3200
    %v3219 = vsel %vm3213, %v3206, 920167782
    %v3220 = vsel %vm3212, %v3203, %v3219
    %v3221 = vsel %vm3211, %v3218, %v3220
    %v3222 = vsel %vm3210, %v3200, %v3203
    %v3223 = vsel %vm3213, %v3209, 1326507024
    %v3224 = vsel %vm3212, %v3206, %v3223
    %v3225 = vsel %vm3211, %v3222, %v3224
    %v3226 = vshll.u32 %v3186, 8
    %v3227 = vmul.u32.u64.compose %v3226, %v3225
    %v3228 = vextract.low.u32 %v3227
    %v3229 = vextract.high.u32 %v3227
    %v3230 = vmul.u32.u64.compose %v3226, %v3221
    %v3231 = vextract.low.u32 %v3230
    %v3232 = vextract.high.u32 %v3230
    %v3233 = vmul.u32 %v3226, %v3217
    %v3234 = vadd.s32 %v3229, %v3231
    %vm3235 = vc.u32 %v3229, %v3231
    %v3236 = vadd.s32 %v3232, 1
    %v3237 = vsel %vm3235, %v3236, %v3232
    %v3238 = vadd.s32 %v3233, %v3237
    %v3239 = vadd.s32 %v3238, 536870912
    %v3240 = vshrl.u32 %v3239, 30
    %v3241 = vshll.u32 %v3240, 30
    %v3242 = vsub.s32 %v3238, %v3241
    %vm3243 = vcmp.lt.s32.totalorder %v3242, 0
    %v3244 = vsub.s32 0, %v3242
    %v3245 = vsel %vm3243, %v3244, %v3242
    %v3246 = vclz %v3245
    %v3247 = vsub.s32 %v3246, 2
    %vm3248 = vcmp.gt.s32.totalorder 0, %v3247
    %v3249 = vsel %vm3248, 0, %v3247
    %v3250 = vsub.s32 32, %v3249
    %v3251 = vshll.u32 %v3242, %v3249
    %v3252 = vshrl.u32 %v3234, %v3250
    %v3253 = vor.u32 %v3251, %v3252
    %v3254 = vsub.s32 4294967266, %v3249
    %v3255 = vadd.s32 %v3254, 127
    %v3256 = vshll.u32 %v3255, 23
    %v3257 = vor.u32 4788187, %v3256
    %v3258 = vand.u32 2147483647, %v3257
    %v3260 = vcvt.s32.f32 %v3253
    %v3261 = vmul.f32 %v3260, %v3258
    %v3262 = vxor.u32 %v3261, 2147483648
    %v3263 = vsel %vm3180, %v3262, %v3261
    %v3264 = vsub.s32 4, %v3240
    %v3265 = vsel %vm3180, %v3264, %v3240
    %v3266 = vsel %vm3179, %v3066, %v3263
    %v3267 = vsel %vm3179, 0, %v3265
    %v3268 = vcosq.f32.pop %v3266
    %v3269 = vsinq.f32.pop %v3266
    %vm3270 = vweird.f32 %v3066
    %v3271 = vand.u32 %v3267, 3
    %vm3272 = vcmp.lt.s32.totalorder %v3271, 2
    %vm3273 = vcmp.eq.s32.totalorder %v3271, 0
    %v3274 = vxor.u32 %v3269, 2147483648
    %v3275 = vsel %vm3273, %v3268, %v3274
    %vm3276 = vcmp.eq.s32.totalorder %v3271, 2
    %v3277 = vxor.u32 %v3268, 2147483648
    %v3278 = vsel %vm3276, %v3277, %v3269
    %v3279 = vsel %vm3272, %v3275, %v3278
    %v3280 = vsel %vm3270, nan, %v3279
    %v3281 = vand.u32 2147483647, %v3071
    %vm3282 = vcmp.le.f32.partialorder %v3281, 0.7853982
    %vm3283 = vcmp.lt.s32.totalorder %v3071, 0
    %v3284 = vand.u32 %v3071, 2139095040
    %v3285 = vshrl.u32 %v3284, 23
    %v3286 = vsub.s32 %v3285, 127
    %v3287 = vand.u32 2147483647, %v3071
    %v3288 = vand.u32 %v3287, 8388607
    %v3289 = vor.u32 %v3288, 8388608
    %v3290 = vsub.s32 0, %v3289
    %v3291 = vadd.s32 %v3286, 1
    %vm3292 = vcmp.gt.s32.totalorder %v3291, 0
    %v3293 = vsel %vm3292, %v3291, 0
    %v3294 = vshrl.u32 %v3293, 5
    %v3295 = vand.u32 %v3293, 31
    %v3296 = vsub.s32 32, %v3295
    %v3297 = vshrl.u32 683565275, %v3296
    %v3298 = vshll.u32 683565275, %v3295
    %v3299 = vshrl.u32 2475754826, %v3296
    %v3300 = vor.u32 %v3298, %v3299
    %v3301 = vshll.u32 2475754826, %v3295
    %v3302 = vshrl.u32 2131351028, %v3296
    %v3303 = vor.u32 %v3301, %v3302
    %v3304 = vshll.u32 2131351028, %v3295
    %v3305 = vshrl.u32 2102212464, %v3296
    %v3306 = vor.u32 %v3304, %v3305
    %v3307 = vshll.u32 2102212464, %v3295
    %v3308 = vshrl.u32 920167782, %v3296
    %v3309 = vor.u32 %v3307, %v3308
    %v3310 = vshll.u32 920167782, %v3295
    %v3311 = vshrl.u32 1326507024, %v3296
    %v3312 = vor.u32 %v3310, %v3311
    %vm3313 = vcmp.lt.s32.totalorder %v3294, 1
    %vm3314 = vcmp.lt.s32.totalorder %v3294, 2
    %vm3315 = vcmp.lt.s32.totalorder %v3294, 3
    %vm3316 = vcmp.lt.s32.totalorder %v3294, 4
    %v3317 = vsel %vm3313, %v3297, %v3300
    %v3318 = vsel %vm3316, %v3306, 2102212464
    %v3319 = vsel %vm3315, %v3303, %v3318
    %v3320 = vsel %vm3314, %v3317, %v3319
    %v3321 = vsel %vm3313, %v3300, %v3303
    %v3322 = vsel %vm3316, %v3309, 920167782
    %v3323 = vsel %vm3315, %v3306, %v3322
    %v3324 = vsel %vm3314, %v3321, %v3323
    %v3325 = vsel %vm3313, %v3303, %v3306
    %v3326 = vsel %vm3316, %v3312, 1326507024
    %v3327 = vsel %vm3315, %v3309, %v3326
    %v3328 = vsel %vm3314, %v3325, %v3327
    %v3329 = vshll.u32 %v3289, 8
    %v3330 = vmul.u32.u64.compose %v3329, %v3328
    %v3331 = vextract.low.u32 %v3330
    %v3332 = vextract.high.u32 %v3330
    %v3333 = vmul.u32.u64.compose %v3329, %v3324
    %v3334 = vextract.low.u32 %v3333
    %v3335 = vextract.high.u32 %v3333
    %v3336 = vmul.u32 %v3329, %v3320
    %v3337 = vadd.s32 %v3332, %v3334
    %vm3338 = vc.u32 %v3332, %v3334
    %v3339 = vadd.s32 %v3335, 1
    %v3340 = vsel %vm3338, %v3339, %v3335
    %v3341 = vadd.s32 %v3336, %v3340
    %v3342 = vadd.s32 %v3341, 536870912
    %v3343 = vshrl.u32 %v3342, 30
    %v3344 = vshll.u32 %v3343, 30
    %v3345 = vsub.s32 %v3341, %v3344
    %vm3346 = vcmp.lt.s32.totalorder %v3345, 0
    %v3347 = vsub.s32 0, %v3345
    %v3348 = vsel %vm3346, %v3347, %v3345
    %v3349 = vclz %v3348
    %v3350 = vsub.s32 %v3349, 2
    %vm3351 = vcmp.gt.s32.totalorder 0, %v3350
    %v3352 = vsel %vm3351, 0, %v3350
    %v3353 = vsub.s32 32, %v3352
    %v3354 = vshll.u32 %v3345, %v3352
    %v3355 = vshrl.u32 %v3337, %v3353
    %v3356 = vor.u32 %v3354, %v3355
    %v3357 = vsub.s32 4294967266, %v3352
    %v3358 = vadd.s32 %v3357, 127
    %v3359 = vshll.u32 %v3358, 23
    %v3360 = vor.u32 4788187, %v3359
    %v3361 = vand.u32 2147483647, %v3360
    %v3363 = vcvt.s32.f32 %v3356
    %v3364 = vmul.f32 %v3363, %v3361
    %v3365 = vxor.u32 %v3364, 2147483648
    %v3366 = vsel %vm3283, %v3365, %v3364
    %v3367 = vsub.s32 4, %v3343
    %v3368 = vsel %vm3283, %v3367, %v3343
    %v3369 = vsel %vm3282, %v3071, %v3366
    %v3370 = vsel %vm3282, 0, %v3368
    %v3371 = vcosq.f32.pop %v3369
    %v3372 = vsinq.f32.pop %v3369
    %vm3373 = vweird.f32 %v3071
    %v3374 = vand.u32 %v3370, 3
    %vm3375 = vcmp.lt.s32.totalorder %v3374, 2
    %vm3376 = vcmp.eq.s32.totalorder %v3374, 0
    %v3377 = vxor.u32 %v3372, 2147483648
    %v3378 = vsel %vm3376, %v3371, %v3377
    %vm3379 = vcmp.eq.s32.totalorder %v3374, 2
    %v3380 = vxor.u32 %v3371, 2147483648
    %v3381 = vsel %vm3379, %v3380, %v3372
    %v3382 = vsel %vm3375, %v3378, %v3381
    %v3383 = vsel %vm3373, nan, %v3382
    %v3384 = vand.u32 2147483647, %v3073
    %vm3385 = vcmp.le.f32.partialorder %v3384, 0.7853982
    %vm3386 = vcmp.lt.s32.totalorder %v3073, 0
    %v3387 = vand.u32 %v3073, 2139095040
    %v3388 = vshrl.u32 %v3387, 23
    %v3389 = vsub.s32 %v3388, 127
    %v3390 = vand.u32 2147483647, %v3073
    %v3391 = vand.u32 %v3390, 8388607
    %v3392 = vor.u32 %v3391, 8388608
    %v3393 = vsub.s32 0, %v3392
    %v3394 = vadd.s32 %v3389, 1
    %vm3395 = vcmp.gt.s32.totalorder %v3394, 0
    %v3396 = vsel %vm3395, %v3394, 0
    %v3397 = vshrl.u32 %v3396, 5
    %v3398 = vand.u32 %v3396, 31
    %v3399 = vsub.s32 32, %v3398
    %v3400 = vshrl.u32 683565275, %v3399
    %v3401 = vshll.u32 683565275, %v3398
    %v3402 = vshrl.u32 2475754826, %v3399
    %v3403 = vor.u32 %v3401, %v3402
    %v3404 = vshll.u32 2475754826, %v3398
    %v3405 = vshrl.u32 2131351028, %v3399
    %v3406 = vor.u32 %v3404, %v3405
    %v3407 = vshll.u32 2131351028, %v3398
    %v3408 = vshrl.u32 2102212464, %v3399
    %v3409 = vor.u32 %v3407, %v3408
    %v3410 = vshll.u32 2102212464, %v3398
    %v3411 = vshrl.u32 920167782, %v3399
    %v3412 = vor.u32 %v3410, %v3411
    %v3413 = vshll.u32 920167782, %v3398
    %v3414 = vshrl.u32 1326507024, %v3399
    %v3415 = vor.u32 %v3413, %v3414
    %vm3416 = vcmp.lt.s32.totalorder %v3397, 1
    %vm3417 = vcmp.lt.s32.totalorder %v3397, 2
    %vm3418 = vcmp.lt.s32.totalorder %v3397, 3
    %vm3419 = vcmp.lt.s32.totalorder %v3397, 4
    %v3420 = vsel %vm3416, %v3400, %v3403
    %v3421 = vsel %vm3419, %v3409, 2102212464
    %v3422 = vsel %vm3418, %v3406, %v3421
    %v3423 = vsel %vm3417, %v3420, %v3422
    %v3424 = vsel %vm3416, %v3403, %v3406
    %v3425 = vsel %vm3419, %v3412, 920167782
    %v3426 = vsel %vm3418, %v3409, %v3425
    %v3427 = vsel %vm3417, %v3424, %v3426
    %v3428 = vsel %vm3416, %v3406, %v3409
    %v3429 = vsel %vm3419, %v3415, 1326507024
    %v3430 = vsel %vm3418, %v3412, %v3429
    %v3431 = vsel %vm3417, %v3428, %v3430
    %v3432 = vshll.u32 %v3392, 8
    %v3433 = vmul.u32.u64.compose %v3432, %v3431
    %v3434 = vextract.low.u32 %v3433
    %v3435 = vextract.high.u32 %v3433
    %v3436 = vmul.u32.u64.compose %v3432, %v3427
    %v3437 = vextract.low.u32 %v3436
    %v3438 = vextract.high.u32 %v3436
    %v3439 = vmul.u32 %v3432, %v3423
    %v3440 = vadd.s32 %v3435, %v3437
    %vm3441 = vc.u32 %v3435, %v3437
    %v3442 = vadd.s32 %v3438, 1
    %v3443 = vsel %vm3441, %v3442, %v3438
    %v3444 = vadd.s32 %v3439, %v3443
    %v3445 = vadd.s32 %v3444, 536870912
    %v3446 = vshrl.u32 %v3445, 30
    %v3447 = vshll.u32 %v3446, 30
    %v3448 = vsub.s32 %v3444, %v3447
    %vm3449 = vcmp.lt.s32.totalorder %v3448, 0
    %v3450 = vsub.s32 0, %v3448
    %v3451 = vsel %vm3449, %v3450, %v3448
    %v3452 = vclz %v3451
    %v3453 = vsub.s32 %v3452, 2
    %vm3454 = vcmp.gt.s32.totalorder 0, %v3453
    %v3455 = vsel %vm3454, 0, %v3453
    %v3456 = vsub.s32 32, %v3455
    %v3457 = vshll.u32 %v3448, %v3455
    %v3458 = vshrl.u32 %v3440, %v3456
    %v3459 = vor.u32 %v3457, %v3458
    %v3460 = vsub.s32 4294967266, %v3455
    %v3461 = vadd.s32 %v3460, 127
    %v3462 = vshll.u32 %v3461, 23
    %v3463 = vor.u32 4788187, %v3462
    %v3464 = vand.u32 2147483647, %v3463
    %v3466 = vcvt.s32.f32 %v3459
    %v3467 = vmul.f32 %v3466, %v3464
    %v3468 = vxor.u32 %v3467, 2147483648
    %v3469 = vsel %vm3386, %v3468, %v3467
    %v3470 = vsub.s32 4, %v3446
    %v3471 = vsel %vm3386, %v3470, %v3446
    %v3472 = vsel %vm3385, %v3073, %v3469
    %v3473 = vsel %vm3385, 0, %v3471
    %v3474 = vcosq.f32.pop %v3472
    %v3475 = vsinq.f32.pop %v3472
    %vm3476 = vweird.f32 %v3073
    %v3477 = vand.u32 %v3473, 3
    %vm3478 = vcmp.lt.s32.totalorder %v3477, 2
    %vm3479 = vcmp.eq.s32.totalorder %v3477, 0
    %v3480 = vxor.u32 %v3475, 2147483648
    %v3481 = vsel %vm3479, %v3474, %v3480
    %vm3482 = vcmp.eq.s32.totalorder %v3477, 2
    %v3483 = vxor.u32 %v3474, 2147483648
    %v3484 = vsel %vm3482, %v3483, %v3475
    %v3485 = vsel %vm3478, %v3481, %v3484
    %v3486 = vsel %vm3476, nan, %v3485
    %v3487 = vand.u32 2147483647, %v3064
    %vm3488 = vcmp.le.f32.partialorder %v3487, 0.7853982
    %vm3489 = vcmp.lt.s32.totalorder %v3064, 0
    %v3490 = vand.u32 %v3064, 2139095040
    %v3491 = vshrl.u32 %v3490, 23
    %v3492 = vsub.s32 %v3491, 127
    %v3493 = vand.u32 2147483647, %v3064
    %v3494 = vand.u32 %v3493, 8388607
    %v3495 = vor.u32 %v3494, 8388608
    %v3496 = vsub.s32 0, %v3495
    %v3497 = vadd.s32 %v3492, 1
    %vm3498 = vcmp.gt.s32.totalorder %v3497, 0
    %v3499 = vsel %vm3498, %v3497, 0
    %v3500 = vshrl.u32 %v3499, 5
    %v3501 = vand.u32 %v3499, 31
    %v3502 = vsub.s32 32, %v3501
    %v3503 = vshrl.u32 683565275, %v3502
    %v3504 = vshll.u32 683565275, %v3501
    %v3505 = vshrl.u32 2475754826, %v3502
    %v3506 = vor.u32 %v3504, %v3505
    %v3507 = vshll.u32 2475754826, %v3501
    %v3508 = vshrl.u32 2131351028, %v3502
    %v3509 = vor.u32 %v3507, %v3508
    %v3510 = vshll.u32 2131351028, %v3501
    %v3511 = vshrl.u32 2102212464, %v3502
    %v3512 = vor.u32 %v3510, %v3511
    %v3513 = vshll.u32 2102212464, %v3501
    %v3514 = vshrl.u32 920167782, %v3502
    %v3515 = vor.u32 %v3513, %v3514
    %v3516 = vshll.u32 920167782, %v3501
    %v3517 = vshrl.u32 1326507024, %v3502
    %v3518 = vor.u32 %v3516, %v3517
    %vm3519 = vcmp.lt.s32.totalorder %v3500, 1
    %vm3520 = vcmp.lt.s32.totalorder %v3500, 2
    %vm3521 = vcmp.lt.s32.totalorder %v3500, 3
    %vm3522 = vcmp.lt.s32.totalorder %v3500, 4
    %v3523 = vsel %vm3519, %v3503, %v3506
    %v3524 = vsel %vm3522, %v3512, 2102212464
    %v3525 = vsel %vm3521, %v3509, %v3524
    %v3526 = vsel %vm3520, %v3523, %v3525
    %v3527 = vsel %vm3519, %v3506, %v3509
    %v3528 = vsel %vm3522, %v3515, 920167782
    %v3529 = vsel %vm3521, %v3512, %v3528
    %v3530 = vsel %vm3520, %v3527, %v3529
    %v3531 = vsel %vm3519, %v3509, %v3512
    %v3532 = vsel %vm3522, %v3518, 1326507024
    %v3533 = vsel %vm3521, %v3515, %v3532
    %v3534 = vsel %vm3520, %v3531, %v3533
    %v3535 = vshll.u32 %v3495, 8
    %v3536 = vmul.u32.u64.compose %v3535, %v3534
    %v3537 = vextract.low.u32 %v3536
    %v3538 = vextract.high.u32 %v3536
    %v3539 = vmul.u32.u64.compose %v3535, %v3530
    %v3540 = vextract.low.u32 %v3539
    %v3541 = vextract.high.u32 %v3539
    %v3542 = vmul.u32 %v3535, %v3526
    %v3543 = vadd.s32 %v3538, %v3540
    %vm3544 = vc.u32 %v3538, %v3540
    %v3545 = vadd.s32 %v3541, 1
    %v3546 = vsel %vm3544, %v3545, %v3541
    %v3547 = vadd.s32 %v3542, %v3546
    %v3548 = vadd.s32 %v3547, 536870912
    %v3549 = vshrl.u32 %v3548, 30
    %v3550 = vshll.u32 %v3549, 30
    %v3551 = vsub.s32 %v3547, %v3550
    %vm3552 = vcmp.lt.s32.totalorder %v3551, 0
    %v3553 = vsub.s32 0, %v3551
    %v3554 = vsel %vm3552, %v3553, %v3551
    %v3555 = vclz %v3554
    %v3556 = vsub.s32 %v3555, 2
    %vm3557 = vcmp.gt.s32.totalorder 0, %v3556
    %v3558 = vsel %vm3557, 0, %v3556
    %v3559 = vsub.s32 32, %v3558
    %v3560 = vshll.u32 %v3551, %v3558
    %v3561 = vshrl.u32 %v3543, %v3559
    %v3562 = vor.u32 %v3560, %v3561
    %v3563 = vsub.s32 4294967266, %v3558
    %v3564 = vadd.s32 %v3563, 127
    %v3565 = vshll.u32 %v3564, 23
    %v3566 = vor.u32 4788187, %v3565
    %v3567 = vand.u32 2147483647, %v3566
    %v3569 = vcvt.s32.f32 %v3562
    %v3570 = vmul.f32 %v3569, %v3567
    %v3571 = vxor.u32 %v3570, 2147483648
    %v3572 = vsel %vm3489, %v3571, %v3570
    %v3573 = vsub.s32 4, %v3549
    %v3574 = vsel %vm3489, %v3573, %v3549
    %v3575 = vsel %vm3488, %v3064, %v3572
    %v3576 = vsel %vm3488, 0, %v3574
    %v3577 = vcosq.f32.pop %v3575
    %v3578 = vsinq.f32.pop %v3575
    %vm3579 = vweird.f32 %v3064
    %v3580 = vadd.s32 %v3576, 3
    %v3581 = vand.u32 %v3580, 3
    %vm3582 = vcmp.lt.s32.totalorder %v3581, 2
    %vm3583 = vcmp.eq.s32.totalorder %v3581, 0
    %v3584 = vxor.u32 %v3578, 2147483648
    %v3585 = vsel %vm3583, %v3577, %v3584
    %vm3586 = vcmp.eq.s32.totalorder %v3581, 2
    %v3587 = vxor.u32 %v3577, 2147483648
    %v3588 = vsel %vm3586, %v3587, %v3578
    %v3589 = vsel %vm3582, %v3585, %v3588
    %v3590 = vsel %vm3579, nan, %v3589
    %v3591 = vand.u32 2147483647, %v3066
    %vm3592 = vcmp.le.f32.partialorder %v3591, 0.7853982
    %vm3593 = vcmp.lt.s32.totalorder %v3066, 0
    %v3594 = vand.u32 %v3066, 2139095040
    %v3595 = vshrl.u32 %v3594, 23
    %v3596 = vsub.s32 %v3595, 127
    %v3597 = vand.u32 2147483647, %v3066
    %v3598 = vand.u32 %v3597, 8388607
    %v3599 = vor.u32 %v3598, 8388608
    %v3600 = vsub.s32 0, %v3599
    %v3601 = vadd.s32 %v3596, 1
    %vm3602 = vcmp.gt.s32.totalorder %v3601, 0
    %v3603 = vsel %vm3602, %v3601, 0
    %v3604 = vshrl.u32 %v3603, 5
    %v3605 = vand.u32 %v3603, 31
    %v3606 = vsub.s32 32, %v3605
    %v3607 = vshrl.u32 683565275, %v3606
    %v3608 = vshll.u32 683565275, %v3605
    %v3609 = vshrl.u32 2475754826, %v3606
    %v3610 = vor.u32 %v3608, %v3609
    %v3611 = vshll.u32 2475754826, %v3605
    %v3612 = vshrl.u32 2131351028, %v3606
    %v3613 = vor.u32 %v3611, %v3612
    %v3614 = vshll.u32 2131351028, %v3605
    %v3615 = vshrl.u32 2102212464, %v3606
    %v3616 = vor.u32 %v3614, %v3615
    %v3617 = vshll.u32 2102212464, %v3605
    %v3618 = vshrl.u32 920167782, %v3606
    %v3619 = vor.u32 %v3617, %v3618
    %v3620 = vshll.u32 920167782, %v3605
    %v3621 = vshrl.u32 1326507024, %v3606
    %v3622 = vor.u32 %v3620, %v3621
    %vm3623 = vcmp.lt.s32.totalorder %v3604, 1
    %vm3624 = vcmp.lt.s32.totalorder %v3604, 2
    %vm3625 = vcmp.lt.s32.totalorder %v3604, 3
    %vm3626 = vcmp.lt.s32.totalorder %v3604, 4
    %v3627 = vsel %vm3623, %v3607, %v3610
    %v3628 = vsel %vm3626, %v3616, 2102212464
    %v3629 = vsel %vm3625, %v3613, %v3628
    %v3630 = vsel %vm3624, %v3627, %v3629
    %v3631 = vsel %vm3623, %v3610, %v3613
    %v3632 = vsel %vm3626, %v3619, 920167782
    %v3633 = vsel %vm3625, %v3616, %v3632
    %v3634 = vsel %vm3624, %v3631, %v3633
    %v3635 = vsel %vm3623, %v3613, %v3616
    %v3636 = vsel %vm3626, %v3622, 1326507024
    %v3637 = vsel %vm3625, %v3619, %v3636
    %v3638 = vsel %vm3624, %v3635, %v3637
    %v3639 = vshll.u32 %v3599, 8
    %v3640 = vmul.u32.u64.compose %v3639, %v3638
    %v3641 = vextract.low.u32 %v3640
    %v3642 = vextract.high.u32 %v3640
    %v3643 = vmul.u32.u64.compose %v3639, %v3634
    %v3644 = vextract.low.u32 %v3643
    %v3645 = vextract.high.u32 %v3643
    %v3646 = vmul.u32 %v3639, %v3630
    %v3647 = vadd.s32 %v3642, %v3644
    %vm3648 = vc.u32 %v3642, %v3644
    %v3649 = vadd.s32 %v3645, 1
    %v3650 = vsel %vm3648, %v3649, %v3645
    %v3651 = vadd.s32 %v3646, %v3650
    %v3652 = vadd.s32 %v3651, 536870912
    %v3653 = vshrl.u32 %v3652, 30
    %v3654 = vshll.u32 %v3653, 30
    %v3655 = vsub.s32 %v3651, %v3654
    %vm3656 = vcmp.lt.s32.totalorder %v3655, 0
    %v3657 = vsub.s32 0, %v3655
    %v3658 = vsel %vm3656, %v3657, %v3655
    %v3659 = vclz %v3658
    %v3660 = vsub.s32 %v3659, 2
    %vm3661 = vcmp.gt.s32.totalorder 0, %v3660
    %v3662 = vsel %vm3661, 0, %v3660
    %v3663 = vsub.s32 32, %v3662
    %v3664 = vshll.u32 %v3655, %v3662
    %v3665 = vshrl.u32 %v3647, %v3663
    %v3666 = vor.u32 %v3664, %v3665
    %v3667 = vsub.s32 4294967266, %v3662
    %v3668 = vadd.s32 %v3667, 127
    %v3669 = vshll.u32 %v3668, 23
    %v3670 = vor.u32 4788187, %v3669
    %v3671 = vand.u32 2147483647, %v3670
    %v3673 = vcvt.s32.f32 %v3666
    %v3674 = vmul.f32 %v3673, %v3671
    %v3675 = vxor.u32 %v3674, 2147483648
    %v3676 = vsel %vm3593, %v3675, %v3674
    %v3677 = vsub.s32 4, %v3653
    %v3678 = vsel %vm3593, %v3677, %v3653
    %v3679 = vsel %vm3592, %v3066, %v3676
    %v3680 = vsel %vm3592, 0, %v3678
    %v3681 = vcosq.f32.pop %v3679
    %v3682 = vsinq.f32.pop %v3679
    %vm3683 = vweird.f32 %v3066
    %v3684 = vadd.s32 %v3680, 3
    %v3685 = vand.u32 %v3684, 3
    %vm3686 = vcmp.lt.s32.totalorder %v3685, 2
    %vm3687 = vcmp.eq.s32.totalorder %v3685, 0
    %v3688 = vxor.u32 %v3682, 2147483648
    %v3689 = vsel %vm3687, %v3681, %v3688
    %vm3690 = vcmp.eq.s32.totalorder %v3685, 2
    %v3691 = vxor.u32 %v3681, 2147483648
    %v3692 = vsel %vm3690, %v3691, %v3682
    %v3693 = vsel %vm3686, %v3689, %v3692
    %v3694 = vsel %vm3683, nan, %v3693
    %v3695 = vand.u32 2147483647, %v3071
    %vm3696 = vcmp.le.f32.partialorder %v3695, 0.7853982
    %vm3697 = vcmp.lt.s32.totalorder %v3071, 0
    %v3698 = vand.u32 %v3071, 2139095040
    %v3699 = vshrl.u32 %v3698, 23
    %v3700 = vsub.s32 %v3699, 127
    %v3701 = vand.u32 2147483647, %v3071
    %v3702 = vand.u32 %v3701, 8388607
    %v3703 = vor.u32 %v3702, 8388608
    %v3704 = vsub.s32 0, %v3703
    %v3705 = vadd.s32 %v3700, 1
    %vm3706 = vcmp.gt.s32.totalorder %v3705, 0
    %v3707 = vsel %vm3706, %v3705, 0
    %v3708 = vshrl.u32 %v3707, 5
    %v3709 = vand.u32 %v3707, 31
    %v3710 = vsub.s32 32, %v3709
    %v3711 = vshrl.u32 683565275, %v3710
    %v3712 = vshll.u32 683565275, %v3709
    %v3713 = vshrl.u32 2475754826, %v3710
    %v3714 = vor.u32 %v3712, %v3713
    %v3715 = vshll.u32 2475754826, %v3709
    %v3716 = vshrl.u32 2131351028, %v3710
    %v3717 = vor.u32 %v3715, %v3716
    %v3718 = vshll.u32 2131351028, %v3709
    %v3719 = vshrl.u32 2102212464, %v3710
    %v3720 = vor.u32 %v3718, %v3719
    %v3721 = vshll.u32 2102212464, %v3709
    %v3722 = vshrl.u32 920167782, %v3710
    %v3723 = vor.u32 %v3721, %v3722
    %v3724 = vshll.u32 920167782, %v3709
    %v3725 = vshrl.u32 1326507024, %v3710
    %v3726 = vor.u32 %v3724, %v3725
    %vm3727 = vcmp.lt.s32.totalorder %v3708, 1
    %vm3728 = vcmp.lt.s32.totalorder %v3708, 2
    %vm3729 = vcmp.lt.s32.totalorder %v3708, 3
    %vm3730 = vcmp.lt.s32.totalorder %v3708, 4
    %v3731 = vsel %vm3727, %v3711, %v3714
    %v3732 = vsel %vm3730, %v3720, 2102212464
    %v3733 = vsel %vm3729, %v3717, %v3732
    %v3734 = vsel %vm3728, %v3731, %v3733
    %v3735 = vsel %vm3727, %v3714, %v3717
    %v3736 = vsel %vm3730, %v3723, 920167782
    %v3737 = vsel %vm3729, %v3720, %v3736
    %v3738 = vsel %vm3728, %v3735, %v3737
    %v3739 = vsel %vm3727, %v3717, %v3720
    %v3740 = vsel %vm3730, %v3726, 1326507024
    %v3741 = vsel %vm3729, %v3723, %v3740
    %v3742 = vsel %vm3728, %v3739, %v3741
    %v3743 = vshll.u32 %v3703, 8
    %v3744 = vmul.u32.u64.compose %v3743, %v3742
    %v3745 = vextract.low.u32 %v3744
    %v3746 = vextract.high.u32 %v3744
    %v3747 = vmul.u32.u64.compose %v3743, %v3738
    %v3748 = vextract.low.u32 %v3747
    %v3749 = vextract.high.u32 %v3747
    %v3750 = vmul.u32 %v3743, %v3734
    %v3751 = vadd.s32 %v3746, %v3748
    %vm3752 = vc.u32 %v3746, %v3748
    %v3753 = vadd.s32 %v3749, 1
    %v3754 = vsel %vm3752, %v3753, %v3749
    %v3755 = vadd.s32 %v3750, %v3754
    %v3756 = vadd.s32 %v3755, 536870912
    %v3757 = vshrl.u32 %v3756, 30
    %v3758 = vshll.u32 %v3757, 30
    %v3759 = vsub.s32 %v3755, %v3758
    %vm3760 = vcmp.lt.s32.totalorder %v3759, 0
    %v3761 = vsub.s32 0, %v3759
    %v3762 = vsel %vm3760, %v3761, %v3759
    %v3763 = vclz %v3762
    %v3764 = vsub.s32 %v3763, 2
    %vm3765 = vcmp.gt.s32.totalorder 0, %v3764
    %v3766 = vsel %vm3765, 0, %v3764
    %v3767 = vsub.s32 32, %v3766
    %v3768 = vshll.u32 %v3759, %v3766
    %v3769 = vshrl.u32 %v3751, %v3767
    %v3770 = vor.u32 %v3768, %v3769
    %v3771 = vsub.s32 4294967266, %v3766
    %v3772 = vadd.s32 %v3771, 127
    %v3773 = vshll.u32 %v3772, 23
    %v3774 = vor.u32 4788187, %v3773
    %v3775 = vand.u32 2147483647, %v3774
    %v3777 = vcvt.s32.f32 %v3770
    %v3778 = vmul.f32 %v3777, %v3775
    %v3779 = vxor.u32 %v3778, 2147483648
    %v3780 = vsel %vm3697, %v3779, %v3778
    %v3781 = vsub.s32 4, %v3757
    %v3782 = vsel %vm3697, %v3781, %v3757
    %v3783 = vsel %vm3696, %v3071, %v3780
    %v3784 = vsel %vm3696, 0, %v3782
    %v3785 = vcosq.f32.pop %v3783
    %v3786 = vsinq.f32.pop %v3783
    %vm3787 = vweird.f32 %v3071
    %v3788 = vadd.s32 %v3784, 3
    %v3789 = vand.u32 %v3788, 3
    %vm3790 = vcmp.lt.s32.totalorder %v3789, 2
    %vm3791 = vcmp.eq.s32.totalorder %v3789, 0
    %v3792 = vxor.u32 %v3786, 2147483648
    %v3793 = vsel %vm3791, %v3785, %v3792
    %vm3794 = vcmp.eq.s32.totalorder %v3789, 2
    %v3795 = vxor.u32 %v3785, 2147483648
    %v3796 = vsel %vm3794, %v3795, %v3786
    %v3797 = vsel %vm3790, %v3793, %v3796
    %v3798 = vsel %vm3787, nan, %v3797
    %v3799 = vand.u32 2147483647, %v3073
    %vm3800 = vcmp.le.f32.partialorder %v3799, 0.7853982
    %vm3801 = vcmp.lt.s32.totalorder %v3073, 0
    %v3802 = vand.u32 %v3073, 2139095040
    %v3803 = vshrl.u32 %v3802, 23
    %v3804 = vsub.s32 %v3803, 127
    %v3805 = vand.u32 2147483647, %v3073
    %v3806 = vand.u32 %v3805, 8388607
    %v3807 = vor.u32 %v3806, 8388608
    %v3808 = vsub.s32 0, %v3807
    %v3809 = vadd.s32 %v3804, 1
    %vm3810 = vcmp.gt.s32.totalorder %v3809, 0
    %v3811 = vsel %vm3810, %v3809, 0
    %v3812 = vshrl.u32 %v3811, 5
    %v3813 = vand.u32 %v3811, 31
    %v3814 = vsub.s32 32, %v3813
    %v3815 = vshrl.u32 683565275, %v3814
    %v3816 = vshll.u32 683565275, %v3813
    %v3817 = vshrl.u32 2475754826, %v3814
    %v3818 = vor.u32 %v3816, %v3817
    %v3819 = vshll.u32 2475754826, %v3813
    %v3820 = vshrl.u32 2131351028, %v3814
    %v3821 = vor.u32 %v3819, %v3820
    %v3822 = vshll.u32 2131351028, %v3813
    %v3823 = vshrl.u32 2102212464, %v3814
    %v3824 = vor.u32 %v3822, %v3823
    %v3825 = vshll.u32 2102212464, %v3813
    %v3826 = vshrl.u32 920167782, %v3814
    %v3827 = vor.u32 %v3825, %v3826
    %v3828 = vshll.u32 920167782, %v3813
    %v3829 = vshrl.u32 1326507024, %v3814
    %v3830 = vor.u32 %v3828, %v3829
    %vm3831 = vcmp.lt.s32.totalorder %v3812, 1
    %vm3832 = vcmp.lt.s32.totalorder %v3812, 2
    %vm3833 = vcmp.lt.s32.totalorder %v3812, 3
    %vm3834 = vcmp.lt.s32.totalorder %v3812, 4
    %v3835 = vsel %vm3831, %v3815, %v3818
    %v3836 = vsel %vm3834, %v3824, 2102212464
    %v3837 = vsel %vm3833, %v3821, %v3836
    %v3838 = vsel %vm3832, %v3835, %v3837
    %v3839 = vsel %vm3831, %v3818, %v3821
    %v3840 = vsel %vm3834, %v3827, 920167782
    %v3841 = vsel %vm3833, %v3824, %v3840
    %v3842 = vsel %vm3832, %v3839, %v3841
    %v3843 = vsel %vm3831, %v3821, %v3824
    %v3844 = vsel %vm3834, %v3830, 1326507024
    %v3845 = vsel %vm3833, %v3827, %v3844
    %v3846 = vsel %vm3832, %v3843, %v3845
    %v3847 = vshll.u32 %v3807, 8
    %v3848 = vmul.u32.u64.compose %v3847, %v3846
    %v3849 = vextract.low.u32 %v3848
    %v3850 = vextract.high.u32 %v3848
    %v3851 = vmul.u32.u64.compose %v3847, %v3842
    %v3852 = vextract.low.u32 %v3851
    %v3853 = vextract.high.u32 %v3851
    %v3854 = vmul.u32 %v3847, %v3838
    %v3855 = vadd.s32 %v3850, %v3852
    %vm3856 = vc.u32 %v3850, %v3852
    %v3857 = vadd.s32 %v3853, 1
    %v3858 = vsel %vm3856, %v3857, %v3853
    %v3859 = vadd.s32 %v3854, %v3858
    %v3860 = vadd.s32 %v3859, 536870912
    %v3861 = vshrl.u32 %v3860, 30
    %v3862 = vshll.u32 %v3861, 30
    %v3863 = vsub.s32 %v3859, %v3862
    %vm3864 = vcmp.lt.s32.totalorder %v3863, 0
    %v3865 = vsub.s32 0, %v3863
    %v3866 = vsel %vm3864, %v3865, %v3863
    %v3867 = vclz %v3866
    %v3868 = vsub.s32 %v3867, 2
    %vm3869 = vcmp.gt.s32.totalorder 0, %v3868
    %v3870 = vsel %vm3869, 0, %v3868
    %v3871 = vsub.s32 32, %v3870
    %v3872 = vshll.u32 %v3863, %v3870
    %v3873 = vshrl.u32 %v3855, %v3871
    %v3874 = vor.u32 %v3872, %v3873
    %v3875 = vsub.s32 4294967266, %v3870
    %v3876 = vadd.s32 %v3875, 127
    %v3877 = vshll.u32 %v3876, 23
    %v3878 = vor.u32 4788187, %v3877
    %v3879 = vand.u32 2147483647, %v3878
    %v3881 = vcvt.s32.f32 %v3874
    %v3882 = vmul.f32 %v3881, %v3879
    %v3883 = vxor.u32 %v3882, 2147483648
    %v3884 = vsel %vm3801, %v3883, %v3882
    %v3885 = vsub.s32 4, %v3861
    %v3886 = vsel %vm3801, %v3885, %v3861
    %v3887 = vsel %vm3800, %v3073, %v3884
    %v3888 = vsel %vm3800, 0, %v3886
    %v3889 = vcosq.f32.pop %v3887
    %v3890 = vsinq.f32.pop %v3887
    %vm3891 = vweird.f32 %v3073
    %v3892 = vadd.s32 %v3888, 3
    %v3893 = vand.u32 %v3892, 3
    %vm3894 = vcmp.lt.s32.totalorder %v3893, 2
    %vm3895 = vcmp.eq.s32.totalorder %v3893, 0
    %v3896 = vxor.u32 %v3890, 2147483648
    %v3897 = vsel %vm3895, %v3889, %v3896
    %vm3898 = vcmp.eq.s32.totalorder %v3893, 2
    %v3899 = vxor.u32 %v3889, 2147483648
    %v3900 = vsel %vm3898, %v3899, %v3890
    %v3901 = vsel %vm3894, %v3897, %v3900
    %v3902 = vsel %vm3891, nan, %v3901
    %v3903 = vmul.f32 %v3177, 0.25
    %v3904 = vmul.f32 %v3280, 0.25
    %v3905 = vmul.f32 %v3383, 0.25
    %v3906 = vmul.f32 %v3486, 0.25
    %v3907 = vmul.f32 %v3590, 0.25
    %v3908 = vmul.f32 %v3694, 0.25
    %v3909 = vmul.f32 %v3798, 0.25
    %v3910 = vmul.f32 %v3902, 0.25
    %v3911 = vld [vmem:[%s9] sm:$0xff]
    %v3912 = vld [vmem:[%s9 + $0x8] sm:$0xff]
    %vm3913 = vcmask 130048
    %v3915 = vsel %vm3913, %v3911, 0
    %v3918 = vsel %vm3913, %v3912, 0
    %v3920 = vand.u32 %v3904, 4294901760
    %3921 = vmatprep.subr.mxu0 %v3920
    %v3922 = vand.u32 %v3903, 4294901760
    %3923 = vmatpush1.msra.mxu0 %v3922
    %v3924 = vand.u32 %v3906, 4294901760
    %3925 = vmatprep.subr.mxu0 %v3924
    %v3926 = vand.u32 %v3905, 4294901760
    %3927 = vmatpush1.msra.mxu0 %v3926
    %3928 = vmatprep.subr.mxu0 0.0
    %3929 = vmatpush1.msra.mxu0 0.0
    %3930 = vmatprep.subr.mxu0 0.0
    %3931 = vmatpush1.msra.mxu0 0.0
    %3932 = vmatprep.subr.mxu0 0.0
    %3933 = vmatpush1.msra.mxu0 0.0
    %3934 = vmatprep.subr.mxu0 0.0
    %3935 = vmatpush1.msra.mxu0 0.0
    %3936 = vmatprep.subr.mxu0 0.0
    %3937 = vmatpush1.msra.mxu0 0.0
    %3938 = vmatprep.subr.mxu0 0.0
    %3939 = vmatpush1.msra.mxu0 0.0
    %3940 = vmatprep.subr.mxu0 0.0
    %3941 = vmatpush1.msra.mxu0 0.0
    %3942 = vmatprep.subr.mxu0 0.0
    %3943 = vmatpush1.msra.mxu0 0.0
    %3944 = vmatprep.subr.mxu0 0.0
    %3945 = vmatpush1.msra.mxu0 0.0
    %3946 = vmatprep.subr.mxu0 0.0
    %3947 = vmatpush1.msra.mxu0 0.0
    %3948 = vmatprep.subr.mxu0 0.0
    %3949 = vmatpush1.msra.mxu0 0.0
    %3950 = vmatprep.subr.mxu0 0.0
    %3951 = vmatpush1.msra.mxu0 0.0
    %3952 = vmatprep.subr.mxu0 0.0
    %3953 = vmatpush1.msra.mxu0 0.0
    %3954 = vmatprep.subr.mxu0 0.0
    %3955 = vmatpush1.msra.mxu0 0.0
    %3956 = vmatprep.subr.mxu0 0.0
    %3957 = vmatpush1.msra.mxu0 0.0
    %3958 = vmatprep.subr.mxu0 0.0
    %3959 = vmatpush1.msra.mxu0 0.0
    %3960 = vmatprep.subr.mxu0 0.0
    %3961 = vmatpush1.msra.mxu0 0.0
    %3962 = vmatprep.subr.mxu0 0.0
    %3963 = vmatpush1.msra.mxu0 0.0
    %3964 = vmatprep.subr.mxu0 0.0
    %3965 = vmatpush1.msra.mxu0 0.0
    %3966 = vmatprep.subr.mxu0 0.0
    %3967 = vmatpush1.msra.mxu0 0.0
    %3968 = vmatprep.subr.mxu0 0.0
    %3969 = vmatpush1.msra.mxu0 0.0
    %3970 = vmatprep.subr.mxu0 0.0
    %3971 = vmatpush1.msra.mxu0 0.0
    %3972 = vmatprep.subr.mxu0 0.0
    %3973 = vmatpush1.msra.mxu0 0.0
    %3974 = vmatprep.subr.mxu0 0.0
    %3975 = vmatpush1.msra.mxu0 0.0
    %3976 = vmatprep.subr.mxu0 0.0
    %3977 = vmatpush1.msra.mxu0 0.0
    %3978 = vmatprep.subr.mxu0 0.0
    %3979 = vmatpush1.msra.mxu0 0.0
    %3980 = vmatprep.subr.mxu0 0.0
    %3981 = vmatpush1.msra.mxu0 0.0
    %3982 = vmatprep.subr.mxu0 0.0
    %3983 = vmatpush1.msra.mxu0 0.0
    %3984 = vmatprep.subr.mxu0 0.0
    %3985 = vmatpush1.msra.mxu0 0.0
    %3986 = vmatprep.subr.mxu0 0.0
    %3987 = vmatpush1.msra.mxu0 0.0
    %3988 = vmatprep.mubr.f32.mxu0 0.0
    %v3989 = vand.u32 %v3915, 4294901760
    %v3990 = vsub.f32 %v3915, %v3989
    %v3991 = vand.u32 %v3990, 4294901760
    %v3992 = vsub.f32 %v3990, %v3991
    %v3993 = vand.u32 %v3992, 4294901760
    %3994 = vmatmul.mubr.f32.gmra.mrb[0].mxu0 %v3993
    %v3995 = vpop.f32.mrb[0].mxu0
    %v3996 = vadd.f32 0.0, %v3995
    %v3997 = vpop.f32.mrb[0].mxu0
    %v3998 = vadd.f32 0.0, %v3997
    %3999 = vmatprep.mubr.f32.mxu0 0.0
    %v4000 = vand.u32 %v3918, 4294901760
    %v4001 = vsub.f32 %v3918, %v4000
    %v4002 = vand.u32 %v4001, 4294901760
    %v4003 = vsub.f32 %v4001, %v4002
    %v4004 = vand.u32 %v4003, 4294901760
    %4005 = vmatmul.mubr.f32.gmra.mrb[0].mxu0 %v4004
    %v4006 = vpop.f32.mrb[0].mxu0
    %v4007 = vadd.f32 0.0, %v4006
    %v4008 = vpop.f32.mrb[0].mxu0
    %v4009 = vadd.f32 0.0, %v4008
    %4010 = vdwg.mxu0
    %v4011 = vand.u32 %v3904, 4294901760
    %v4012 = vsub.f32 %v3904, %v4011
    %v4013 = vand.u32 %v4012, 4294901760
    %v4014 = vsub.f32 %v4012, %v4013
    %v4015 = vand.u32 %v4014, 4294901760
    %4016 = vmatprep.subr.mxu0 %v4015
    %v4017 = vand.u32 %v3903, 4294901760
    %v4018 = vsub.f32 %v3903, %v4017
    %v4019 = vand.u32 %v4018, 4294901760
    %v4020 = vsub.f32 %v4018, %v4019
    %v4021 = vand.u32 %v4020, 4294901760
    %4022 = vmatpush1.msra.mxu0 %v4021
    %v4023 = vand.u32 %v3906, 4294901760
    %v4024 = vsub.f32 %v3906, %v4023
    %v4025 = vand.u32 %v4024, 4294901760
    %v4026 = vsub.f32 %v4024, %v4025
    %v4027 = vand.u32 %v4026, 4294901760
    %4028 = vmatprep.subr.mxu0 %v4027
    %v4029 = vand.u32 %v3905, 4294901760
    %v4030 = vsub.f32 %v3905, %v4029
    %v4031 = vand.u32 %v4030, 4294901760
    %v4032 = vsub.f32 %v4030, %v4031
    %v4033 = vand.u32 %v4032, 4294901760
    %4034 = vmatpush1.msra.mxu0 %v4033
    %4035 = vmatprep.subr.mxu0 0.0
    %4036 = vmatpush1.msra.mxu0 0.0
    %4037 = vmatprep.subr.mxu0 0.0
    %4038 = vmatpush1.msra.mxu0 0.0
    %4039 = vmatprep.subr.mxu0 0.0
    %4040 = vmatpush1.msra.mxu0 0.0
    %4041 = vmatprep.subr.mxu0 0.0
    %4042 = vmatpush1.msra.mxu0 0.0
    %4043 = vmatprep.subr.mxu0 0.0
    %4044 = vmatpush1.msra.mxu0 0.0
    %4045 = vmatprep.subr.mxu0 0.0
    %4046 = vmatpush1.msra.mxu0 0.0
    %4047 = vmatprep.subr.mxu0 0.0
    %4048 = vmatpush1.msra.mxu0 0.0
    %4049 = vmatprep.subr.mxu0 0.0
    %4050 = vmatpush1.msra.mxu0 0.0
    %4051 = vmatprep.subr.mxu0 0.0
    %4052 = vmatpush1.msra.mxu0 0.0
    %4053 = vmatprep.subr.mxu0 0.0
    %4054 = vmatpush1.msra.mxu0 0.0
    %4055 = vmatprep.subr.mxu0 0.0
    %4056 = vmatpush1.msra.mxu0 0.0
    %4057 = vmatprep.subr.mxu0 0.0
    %4058 = vmatpush1.msra.mxu0 0.0
    %4059 = vmatprep.subr.mxu0 0.0
    %4060 = vmatpush1.msra.mxu0 0.0
    %4061 = vmatprep.subr.mxu0 0.0
    %4062 = vmatpush1.msra.mxu0 0.0
    %4063 = vmatprep.subr.mxu0 0.0
    %4064 = vmatpush1.msra.mxu0 0.0
    %4065 = vmatprep.subr.mxu0 0.0
    %4066 = vmatpush1.msra.mxu0 0.0
    %4067 = vmatprep.subr.mxu0 0.0
    %4068 = vmatpush1.msra.mxu0 0.0
    %4069 = vmatprep.subr.mxu0 0.0
    %4070 = vmatpush1.msra.mxu0 0.0
    %4071 = vmatprep.subr.mxu0 0.0
    %4072 = vmatpush1.msra.mxu0 0.0
    %4073 = vmatprep.subr.mxu0 0.0
    %4074 = vmatpush1.msra.mxu0 0.0
    %4075 = vmatprep.subr.mxu0 0.0
    %4076 = vmatpush1.msra.mxu0 0.0
    %4077 = vmatprep.subr.mxu0 0.0
    %4078 = vmatpush1.msra.mxu0 0.0
    %4079 = vmatprep.subr.mxu0 0.0
    %4080 = vmatpush1.msra.mxu0 0.0
    %4081 = vmatprep.subr.mxu0 0.0
    %4082 = vmatpush1.msra.mxu0 0.0
    %4083 = vmatprep.subr.mxu0 0.0
    %4084 = vmatpush1.msra.mxu0 0.0
    %4085 = vmatprep.subr.mxu0 0.0
    %4086 = vmatpush1.msra.mxu0 0.0
    %4087 = vmatprep.subr.mxu0 0.0
    %4088 = vmatpush1.msra.mxu0 0.0
    %4089 = vmatprep.subr.mxu0 0.0
    %4090 = vmatpush1.msra.mxu0 0.0
    %4091 = vmatprep.subr.mxu0 0.0
    %4092 = vmatpush1.msra.mxu0 0.0
    %4093 = vmatprep.subr.mxu0 0.0
    %4094 = vmatpush1.msra.mxu0 0.0
    %4095 = vmatprep.mubr.f32.mxu0 0.0
    %v4096 = vand.u32 %v3915, 4294901760
    %4097 = vmatmul.mubr.f32.gmra.mrb[0].mxu0 %v4096
    %v4098 = vpop.f32.mrb[0].mxu0
    %v4099 = vadd.f32 %v3996, %v4098
    %v4100 = vpop.f32.mrb[0].mxu0
    %v4101 = vadd.f32 %v3998, %v4100
    %4102 = vmatprep.mubr.f32.mxu0 0.0
    %v4103 = vand.u32 %v3918, 4294901760
    %4104 = vmatmul.mubr.f32.gmra.mrb[0].mxu0 %v4103
    %v4105 = vpop.f32.mrb[0].mxu0
    %v4106 = vadd.f32 %v4007, %v4105
    %v4107 = vpop.f32.mrb[0].mxu0
    %v4108 = vadd.f32 %v4009, %v4107
    %4109 = vdwg.mxu0
    %v4110 = vand.u32 %v3904, 4294901760
    %v4111 = vsub.f32 %v3904, %v4110
    %4112 = vmatprep.subr.mxu0 %v4111
    %v4113 = vand.u32 %v3903, 4294901760
    %v4114 = vsub.f32 %v3903, %v4113
    %4115 = vmatpush1.msra.mxu0 %v4114
    %v4116 = vand.u32 %v3906, 4294901760
    %v4117 = vsub.f32 %v3906, %v4116
    %4118 = vmatprep.subr.mxu0 %v4117
    %v4119 = vand.u32 %v3905, 4294901760
    %v4120 = vsub.f32 %v3905, %v4119
    %4121 = vmatpush1.msra.mxu0 %v4120
    %4122 = vmatprep.subr.mxu0 0.0
    %4123 = vmatpush1.msra.mxu0 0.0
    %4124 = vmatprep.subr.mxu0 0.0
    %4125 = vmatpush1.msra.mxu0 0.0
    %4126 = vmatprep.subr.mxu0 0.0
    %4127 = vmatpush1.msra.mxu0 0.0
    %4128 = vmatprep.subr.mxu0 0.0
    %4129 = vmatpush1.msra.mxu0 0.0
    %4130 = vmatprep.subr.mxu0 0.0
    %4131 = vmatpush1.msra.mxu0 0.0
    %4132 = vmatprep.subr.mxu0 0.0
    %4133 = vmatpush1.msra.mxu0 0.0
    %4134 = vmatprep.subr.mxu0 0.0
    %4135 = vmatpush1.msra.mxu0 0.0
    %4136 = vmatprep.subr.mxu0 0.0
    %4137 = vmatpush1.msra.mxu0 0.0
    %4138 = vmatprep.subr.mxu0 0.0
    %4139 = vmatpush1.msra.mxu0 0.0
    %4140 = vmatprep.subr.mxu0 0.0
    %4141 = vmatpush1.msra.mxu0 0.0
    %4142 = vmatprep.subr.mxu0 0.0
    %4143 = vmatpush1.msra.mxu0 0.0
    %4144 = vmatprep.subr.mxu0 0.0
    %4145 = vmatpush1.msra.mxu0 0.0
    %4146 = vmatprep.subr.mxu0 0.0
    %4147 = vmatpush1.msra.mxu0 0.0
    %4148 = vmatprep.subr.mxu0 0.0
    %4149 = vmatpush1.msra.mxu0 0.0
    %4150 = vmatprep.subr.mxu0 0.0
    %4151 = vmatpush1.msra.mxu0 0.0
    %4152 = vmatprep.subr.mxu0 0.0
    %4153 = vmatpush1.msra.mxu0 0.0
    %4154 = vmatprep.subr.mxu0 0.0
    %4155 = vmatpush1.msra.mxu0 0.0
    %4156 = vmatprep.subr.mxu0 0.0
    %4157 = vmatpush1.msra.mxu0 0.0
    %4158 = vmatprep.subr.mxu0 0.0
    %4159 = vmatpush1.msra.mxu0 0.0
    %4160 = vmatprep.subr.mxu0 0.0
    %4161 = vmatpush1.msra.mxu0 0.0
    %4162 = vmatprep.subr.mxu0 0.0
    %4163 = vmatpush1.msra.mxu0 0.0
    %4164 = vmatprep.subr.mxu0 0.0
    %4165 = vmatpush1.msra.mxu0 0.0
    %4166 = vmatprep.subr.mxu0 0.0
    %4167 = vmatpush1.msra.mxu0 0.0
    %4168 = vmatprep.subr.mxu0 0.0
    %4169 = vmatpush1.msra.mxu0 0.0
    %4170 = vmatprep.subr.mxu0 0.0
    %4171 = vmatpush1.msra.mxu0 0.0
    %4172 = vmatprep.subr.mxu0 0.0
    %4173 = vmatpush1.msra.mxu0 0.0
    %4174 = vmatprep.subr.mxu0 0.0
    %4175 = vmatpush1.msra.mxu0 0.0
    %4176 = vmatprep.subr.mxu0 0.0
    %4177 = vmatpush1.msra.mxu0 0.0
    %4178 = vmatprep.subr.mxu0 0.0
    %4179 = vmatpush1.msra.mxu0 0.0
    %4180 = vmatprep.subr.mxu0 0.0
    %4181 = vmatpush1.msra.mxu0 0.0
    %4182 = vmatprep.mubr.f32.mxu0 0.0
    %v4183 = vand.u32 %v3915, 4294901760
    %v4184 = vsub.f32 %v3915, %v4183
    %4185 = vmatmul.mubr.f32.gmra.mrb[0].mxu0 %v4184
    %v4186 = vpop.f32.mrb[0].mxu0
    %v4187 = vadd.f32 %v4099, %v4186
    %v4188 = vpop.f32.mrb[0].mxu0
    %v4189 = vadd.f32 %v4101, %v4188
    %4190 = vmatprep.mubr.f32.mxu0 0.0
    %v4191 = vand.u32 %v3918, 4294901760
    %v4192 = vsub.f32 %v3918, %v4191
    %4193 = vmatmul.mubr.f32.gmra.mrb[0].mxu0 %v4192
    %v4194 = vpop.f32.mrb[0].mxu0
    %v4195 = vadd.f32 %v4106, %v4194
    %v4196 = vpop.f32.mrb[0].mxu0
    %v4197 = vadd.f32 %v4108, %v4196
    %4198 = vdwg.mxu0
    %v4199 = vand.u32 %v3904, 4294901760
    %4200 = vmatprep.subr.mxu0 %v4199
    %v4201 = vand.u32 %v3903, 4294901760
    %4202 = vmatpush1.msra.mxu0 %v4201
    %v4203 = vand.u32 %v3906, 4294901760
    %4204 = vmatprep.subr.mxu0 %v4203
    %v4205 = vand.u32 %v3905, 4294901760
    %4206 = vmatpush1.msra.mxu0 %v4205
    %4207 = vmatprep.subr.mxu0 0.0
    %4208 = vmatpush1.msra.mxu0 0.0
    %4209 = vmatprep.subr.mxu0 0.0
    %4210 = vmatpush1.msra.mxu0 0.0
    %4211 = vmatprep.subr.mxu0 0.0
    %4212 = vmatpush1.msra.mxu0 0.0
    %4213 = vmatprep.subr.mxu0 0.0
    %4214 = vmatpush1.msra.mxu0 0.0
    %4215 = vmatprep.subr.mxu0 0.0
    %4216 = vmatpush1.msra.mxu0 0.0
    %4217 = vmatprep.subr.mxu0 0.0
    %4218 = vmatpush1.msra.mxu0 0.0
    %4219 = vmatprep.subr.mxu0 0.0
    %4220 = vmatpush1.msra.mxu0 0.0
    %4221 = vmatprep.subr.mxu0 0.0
    %4222 = vmatpush1.msra.mxu0 0.0
    %4223 = vmatprep.subr.mxu0 0.0
    %4224 = vmatpush1.msra.mxu0 0.0
    %4225 = vmatprep.subr.mxu0 0.0
    %4226 = vmatpush1.msra.mxu0 0.0
    %4227 = vmatprep.subr.mxu0 0.0
    %4228 = vmatpush1.msra.mxu0 0.0
    %4229 = vmatprep.subr.mxu0 0.0
    %4230 = vmatpush1.msra.mxu0 0.0
    %4231 = vmatprep.subr.mxu0 0.0
    %4232 = vmatpush1.msra.mxu0 0.0
    %4233 = vmatprep.subr.mxu0 0.0
    %4234 = vmatpush1.msra.mxu0 0.0
    %4235 = vmatprep.subr.mxu0 0.0
    %4236 = vmatpush1.msra.mxu0 0.0
    %4237 = vmatprep.subr.mxu0 0.0
    %4238 = vmatpush1.msra.mxu0 0.0
    %4239 = vmatprep.subr.mxu0 0.0
    %4240 = vmatpush1.msra.mxu0 0.0
    %4241 = vmatprep.subr.mxu0 0.0
    %4242 = vmatpush1.msra.mxu0 0.0
    %4243 = vmatprep.subr.mxu0 0.0
    %4244 = vmatpush1.msra.mxu0 0.0
    %4245 = vmatprep.subr.mxu0 0.0
    %4246 = vmatpush1.msra.mxu0 0.0
    %4247 = vmatprep.subr.mxu0 0.0
    %4248 = vmatpush1.msra.mxu0 0.0
    %4249 = vmatprep.subr.mxu0 0.0
    %4250 = vmatpush1.msra.mxu0 0.0
    %4251 = vmatprep.subr.mxu0 0.0
    %4252 = vmatpush1.msra.mxu0 0.0
    %4253 = vmatprep.subr.mxu0 0.0
    %4254 = vmatpush1.msra.mxu0 0.0
    %4255 = vmatprep.subr.mxu0 0.0
    %4256 = vmatpush1.msra.mxu0 0.0
    %4257 = vmatprep.subr.mxu0 0.0
    %4258 = vmatpush1.msra.mxu0 0.0
    %4259 = vmatprep.subr.mxu0 0.0
    %4260 = vmatpush1.msra.mxu0 0.0
    %4261 = vmatprep.subr.mxu0 0.0
    %4262 = vmatpush1.msra.mxu0 0.0
    %4263 = vmatprep.subr.mxu0 0.0
    %4264 = vmatpush1.msra.mxu0 0.0
    %4265 = vmatprep.subr.mxu0 0.0
    %4266 = vmatpush1.msra.mxu0 0.0
    %4267 = vmatprep.mubr.f32.mxu0 0.0
    %v4268 = vand.u32 %v3915, 4294901760
    %v4269 = vsub.f32 %v3915, %v4268
    %v4270 = vand.u32 %v4269, 4294901760
    %4271 = vmatmul.mubr.f32.gmra.mrb[0].mxu0 %v4270
    %v4272 = vpop.f32.mrb[0].mxu0
    %v4273 = vadd.f32 %v4187, %v4272
    %v4274 = vpop.f32.mrb[0].mxu0
    %v4275 = vadd.f32 %v4189, %v4274
    %4276 = vmatprep.mubr.f32.mxu0 0.0
    %v4277 = vand.u32 %v3918, 4294901760
    %v4278 = vsub.f32 %v3918, %v4277
    %v4279 = vand.u32 %v4278, 4294901760
    %4280 = vmatmul.mubr.f32.gmra.mrb[0].mxu0 %v4279
    %v4281 = vpop.f32.mrb[0].mxu0
    %v4282 = vadd.f32 %v4195, %v4281
    %v4283 = vpop.f32.mrb[0].mxu0
    %v4284 = vadd.f32 %v4197, %v4283
    %4285 = vdwg.mxu0
    %v4286 = vand.u32 %v3904, 4294901760
    %v4287 = vsub.f32 %v3904, %v4286
    %v4288 = vand.u32 %v4287, 4294901760
    %4289 = vmatprep.subr.mxu0 %v4288
    %v4290 = vand.u32 %v3903, 4294901760
    %v4291 = vsub.f32 %v3903, %v4290
    %v4292 = vand.u32 %v4291, 4294901760
    %4293 = vmatpush1.msra.mxu0 %v4292
    %v4294 = vand.u32 %v3906, 4294901760
    %v4295 = vsub.f32 %v3906, %v4294
    %v4296 = vand.u32 %v4295, 4294901760
    %4297 = vmatprep.subr.mxu0 %v4296
    %v4298 = vand.u32 %v3905, 4294901760
    %v4299 = vsub.f32 %v3905, %v4298
    %v4300 = vand.u32 %v4299, 4294901760
    %4301 = vmatpush1.msra.mxu0 %v4300
    %4302 = vmatprep.subr.mxu0 0.0
    %4303 = vmatpush1.msra.mxu0 0.0
    %4304 = vmatprep.subr.mxu0 0.0
    %4305 = vmatpush1.msra.mxu0 0.0
    %4306 = vmatprep.subr.mxu0 0.0
    %4307 = vmatpush1.msra.mxu0 0.0
    %4308 = vmatprep.subr.mxu0 0.0
    %4309 = vmatpush1.msra.mxu0 0.0
    %4310 = vmatprep.subr.mxu0 0.0
    %4311 = vmatpush1.msra.mxu0 0.0
    %4312 = vmatprep.subr.mxu0 0.0
    %4313 = vmatpush1.msra.mxu0 0.0
    %4314 = vmatprep.subr.mxu0 0.0
    %4315 = vmatpush1.msra.mxu0 0.0
    %4316 = vmatprep.subr.mxu0 0.0
    %4317 = vmatpush1.msra.mxu0 0.0
    %4318 = vmatprep.subr.mxu0 0.0
    %4319 = vmatpush1.msra.mxu0 0.0
    %4320 = vmatprep.subr.mxu0 0.0
    %4321 = vmatpush1.msra.mxu0 0.0
    %4322 = vmatprep.subr.mxu0 0.0
    %4323 = vmatpush1.msra.mxu0 0.0
    %4324 = vmatprep.subr.mxu0 0.0
    %4325 = vmatpush1.msra.mxu0 0.0
    %4326 = vmatprep.subr.mxu0 0.0
    %4327 = vmatpush1.msra.mxu0 0.0
    %4328 = vmatprep.subr.mxu0 0.0
    %4329 = vmatpush1.msra.mxu0 0.0
    %4330 = vmatprep.subr.mxu0 0.0
    %4331 = vmatpush1.msra.mxu0 0.0
    %4332 = vmatprep.subr.mxu0 0.0
    %4333 = vmatpush1.msra.mxu0 0.0
    %4334 = vmatprep.subr.mxu0 0.0
    %4335 = vmatpush1.msra.mxu0 0.0
    %4336 = vmatprep.subr.mxu0 0.0
    %4337 = vmatpush1.msra.mxu0 0.0
    %4338 = vmatprep.subr.mxu0 0.0
    %4339 = vmatpush1.msra.mxu0 0.0
    %4340 = vmatprep.subr.mxu0 0.0
    %4341 = vmatpush1.msra.mxu0 0.0
    %4342 = vmatprep.subr.mxu0 0.0
    %4343 = vmatpush1.msra.mxu0 0.0
    %4344 = vmatprep.subr.mxu0 0.0
    %4345 = vmatpush1.msra.mxu0 0.0
    %4346 = vmatprep.subr.mxu0 0.0
    %4347 = vmatpush1.msra.mxu0 0.0
    %4348 = vmatprep.subr.mxu0 0.0
    %4349 = vmatpush1.msra.mxu0 0.0
    %4350 = vmatprep.subr.mxu0 0.0
    %4351 = vmatpush1.msra.mxu0 0.0
    %4352 = vmatprep.subr.mxu0 0.0
    %4353 = vmatpush1.msra.mxu0 0.0
    %4354 = vmatprep.subr.mxu0 0.0
    %4355 = vmatpush1.msra.mxu0 0.0
    %4356 = vmatprep.subr.mxu0 0.0
    %4357 = vmatpush1.msra.mxu0 0.0
    %4358 = vmatprep.subr.mxu0 0.0
    %4359 = vmatpush1.msra.mxu0 0.0
    %4360 = vmatprep.subr.mxu0 0.0
    %4361 = vmatpush1.msra.mxu0 0.0
    %4362 = vmatprep.mubr.f32.mxu0 0.0
    %v4363 = vand.u32 %v3915, 4294901760
    %4364 = vmatmul.mubr.f32.gmra.mrb[0].mxu0 %v4363
    %v4365 = vpop.f32.mrb[0].mxu0
    %v4366 = vadd.f32 %v4273, %v4365
    %v4367 = vpop.f32.mrb[0].mxu0
    %v4368 = vadd.f32 %v4275, %v4367
    %4369 = vmatprep.mubr.f32.mxu0 0.0
    %v4370 = vand.u32 %v3918, 4294901760
    %4371 = vmatmul.mubr.f32.gmra.mrb[0].mxu0 %v4370
    %v4372 = vpop.f32.mrb[0].mxu0
    %v4373 = vadd.f32 %v4282, %v4372
    %v4374 = vpop.f32.mrb[0].mxu0
    %v4375 = vadd.f32 %v4284, %v4374
    %4376 = vdwg.mxu0
    %v4377 = vand.u32 %v3904, 4294901760
    %4378 = vmatprep.subr.mxu0 %v4377
    %v4379 = vand.u32 %v3903, 4294901760
    %4380 = vmatpush1.msra.mxu0 %v4379
    %v4381 = vand.u32 %v3906, 4294901760
    %4382 = vmatprep.subr.mxu0 %v4381
    %v4383 = vand.u32 %v3905, 4294901760
    %4384 = vmatpush1.msra.mxu0 %v4383
    %4385 = vmatprep.subr.mxu0 0.0
    %4386 = vmatpush1.msra.mxu0 0.0
    %4387 = vmatprep.subr.mxu0 0.0
    %4388 = vmatpush1.msra.mxu0 0.0
    %4389 = vmatprep.subr.mxu0 0.0
    %4390 = vmatpush1.msra.mxu0 0.0
    %4391 = vmatprep.subr.mxu0 0.0
    %4392 = vmatpush1.msra.mxu0 0.0
    %4393 = vmatprep.subr.mxu0 0.0
    %4394 = vmatpush1.msra.mxu0 0.0
    %4395 = vmatprep.subr.mxu0 0.0
    %4396 = vmatpush1.msra.mxu0 0.0
    %4397 = vmatprep.subr.mxu0 0.0
    %4398 = vmatpush1.msra.mxu0 0.0
    %4399 = vmatprep.subr.mxu0 0.0
    %4400 = vmatpush1.msra.mxu0 0.0
    %4401 = vmatprep.subr.mxu0 0.0
    %4402 = vmatpush1.msra.mxu0 0.0
    %4403 = vmatprep.subr.mxu0 0.0
    %4404 = vmatpush1.msra.mxu0 0.0
    %4405 = vmatprep.subr.mxu0 0.0
    %4406 = vmatpush1.msra.mxu0 0.0
    %4407 = vmatprep.subr.mxu0 0.0
    %4408 = vmatpush1.msra.mxu0 0.0
    %4409 = vmatprep.subr.mxu0 0.0
    %4410 = vmatpush1.msra.mxu0 0.0
    %4411 = vmatprep.subr.mxu0 0.0
    %4412 = vmatpush1.msra.mxu0 0.0
    %4413 = vmatprep.subr.mxu0 0.0
    %4414 = vmatpush1.msra.mxu0 0.0
    %4415 = vmatprep.subr.mxu0 0.0
    %4416 = vmatpush1.msra.mxu0 0.0
    %4417 = vmatprep.subr.mxu0 0.0
    %4418 = vmatpush1.msra.mxu0 0.0
    %4419 = vmatprep.subr.mxu0 0.0
    %4420 = vmatpush1.msra.mxu0 0.0
    %4421 = vmatprep.subr.mxu0 0.0
    %4422 = vmatpush1.msra.mxu0 0.0
    %4423 = vmatprep.subr.mxu0 0.0
    %4424 = vmatpush1.msra.mxu0 0.0
    %4425 = vmatprep.subr.mxu0 0.0
    %4426 = vmatpush1.msra.mxu0 0.0
    %4427 = vmatprep.subr.mxu0 0.0
    %4428 = vmatpush1.msra.mxu0 0.0
    %4429 = vmatprep.subr.mxu0 0.0
    %4430 = vmatpush1.msra.mxu0 0.0
    %4431 = vmatprep.subr.mxu0 0.0
    %4432 = vmatpush1.msra.mxu0 0.0
    %4433 = vmatprep.subr.mxu0 0.0
    %4434 = vmatpush1.msra.mxu0 0.0
    %4435 = vmatprep.subr.mxu0 0.0
    %4436 = vmatpush1.msra.mxu0 0.0
    %4437 = vmatprep.subr.mxu0 0.0
    %4438 = vmatpush1.msra.mxu0 0.0
    %4439 = vmatprep.subr.mxu0 0.0
    %4440 = vmatpush1.msra.mxu0 0.0
    %4441 = vmatprep.subr.mxu0 0.0
    %4442 = vmatpush1.msra.mxu0 0.0
    %4443 = vmatprep.subr.mxu0 0.0
    %4444 = vmatpush1.msra.mxu0 0.0
    %4445 = vmatprep.mubr.f32.mxu0 0.0
    %v4446 = vand.u32 %v3915, 4294901760
    %4447 = vmatmul.mubr.f32.gmra.mrb[0].mxu0 %v4446
    %v4448 = vpop.f32.mrb[0].mxu0
    %v4449 = vadd.f32 %v4366, %v4448
    %v4450 = vpop.f32.mrb[0].mxu0
    %v4451 = vadd.f32 %v4368, %v4450
    %4452 = vmatprep.mubr.f32.mxu0 0.0
    %v4453 = vand.u32 %v3918, 4294901760
    %4454 = vmatmul.mubr.f32.gmra.mrb[0].mxu0 %v4453
    %v4455 = vpop.f32.mrb[0].mxu0
    %v4456 = vadd.f32 %v4373, %v4455
    %v4457 = vpop.f32.mrb[0].mxu0
    %v4458 = vadd.f32 %v4375, %v4457
    %4459 = vdwg.mxu0
    %v4460 = vand.u32 %v3908, 4294901760
    %4461 = vmatprep.subr.mxu0 %v4460
    %v4462 = vand.u32 %v3907, 4294901760
    %4463 = vmatpush1.msra.mxu0 %v4462
    %v4464 = vand.u32 %v3910, 4294901760
    %4465 = vmatprep.subr.mxu0 %v4464
    %v4466 = vand.u32 %v3909, 4294901760
    %4467 = vmatpush1.msra.mxu0 %v4466
    %4468 = vmatprep.subr.mxu0 0.0
    %4469 = vmatpush1.msra.mxu0 0.0
    %4470 = vmatprep.subr.mxu0 0.0
    %4471 = vmatpush1.msra.mxu0 0.0
    %4472 = vmatprep.subr.mxu0 0.0
    %4473 = vmatpush1.msra.mxu0 0.0
    %4474 = vmatprep.subr.mxu0 0.0
    %4475 = vmatpush1.msra.mxu0 0.0
    %4476 = vmatprep.subr.mxu0 0.0
    %4477 = vmatpush1.msra.mxu0 0.0
    %4478 = vmatprep.subr.mxu0 0.0
    %4479 = vmatpush1.msra.mxu0 0.0
    %4480 = vmatprep.subr.mxu0 0.0
    %4481 = vmatpush1.msra.mxu0 0.0
    %4482 = vmatprep.subr.mxu0 0.0
    %4483 = vmatpush1.msra.mxu0 0.0
    %4484 = vmatprep.subr.mxu0 0.0
    %4485 = vmatpush1.msra.mxu0 0.0
    %4486 = vmatprep.subr.mxu0 0.0
    %4487 = vmatpush1.msra.mxu0 0.0
    %4488 = vmatprep.subr.mxu0 0.0
    %4489 = vmatpush1.msra.mxu0 0.0
    %4490 = vmatprep.subr.mxu0 0.0
    %4491 = vmatpush1.msra.mxu0 0.0
    %4492 = vmatprep.subr.mxu0 0.0
    %4493 = vmatpush1.msra.mxu0 0.0
    %4494 = vmatprep.subr.mxu0 0.0
    %4495 = vmatpush1.msra.mxu0 0.0
    %4496 = vmatprep.subr.mxu0 0.0
    %4497 = vmatpush1.msra.mxu0 0.0
    %4498 = vmatprep.subr.mxu0 0.0
    %4499 = vmatpush1.msra.mxu0 0.0
    %4500 = vmatprep.subr.mxu0 0.0
    %4501 = vmatpush1.msra.mxu0 0.0
    %4502 = vmatprep.subr.mxu0 0.0
    %4503 = vmatpush1.msra.mxu0 0.0
    %4504 = vmatprep.subr.mxu0 0.0
    %4505 = vmatpush1.msra.mxu0 0.0
    %4506 = vmatprep.subr.mxu0 0.0
    %4507 = vmatpush1.msra.mxu0 0.0
    %4508 = vmatprep.subr.mxu0 0.0
    %4509 = vmatpush1.msra.mxu0 0.0
    %4510 = vmatprep.subr.mxu0 0.0
    %4511 = vmatpush1.msra.mxu0 0.0
    %4512 = vmatprep.subr.mxu0 0.0
    %4513 = vmatpush1.msra.mxu0 0.0
    %4514 = vmatprep.subr.mxu0 0.0
    %4515 = vmatpush1.msra.mxu0 0.0
    %4516 = vmatprep.subr.mxu0 0.0
    %4517 = vmatpush1.msra.mxu0 0.0
    %4518 = vmatprep.subr.mxu0 0.0
    %4519 = vmatpush1.msra.mxu0 0.0
    %4520 = vmatprep.subr.mxu0 0.0
    %4521 = vmatpush1.msra.mxu0 0.0
    %4522 = vmatprep.subr.mxu0 0.0
    %4523 = vmatpush1.msra.mxu0 0.0
    %4524 = vmatprep.subr.mxu0 0.0
    %4525 = vmatpush1.msra.mxu0 0.0
    %4526 = vmatprep.subr.mxu0 0.0
    %4527 = vmatpush1.msra.mxu0 0.0
    %4528 = vmatprep.mubr.f32.mxu0 0.0
    %v4529 = vand.u32 %v3915, 4294901760
    %v4530 = vsub.f32 %v3915, %v4529
    %v4531 = vand.u32 %v4530, 4294901760
    %v4532 = vsub.f32 %v4530, %v4531
    %v4533 = vand.u32 %v4532, 4294901760
    %4534 = vmatmul.mubr.f32.gmra.mrb[0].mxu0 %v4533
    %v4535 = vpop.f32.mrb[0].mxu0
    %v4536 = vadd.f32 0.0, %v4535
    %v4537 = vpop.f32.mrb[0].mxu0
    %v4538 = vadd.f32 0.0, %v4537
    %4539 = vmatprep.mubr.f32.mxu0 0.0
    %v4540 = vand.u32 %v3918, 4294901760
    %v4541 = vsub.f32 %v3918, %v4540
    %v4542 = vand.u32 %v4541, 4294901760
    %v4543 = vsub.f32 %v4541, %v4542
    %v4544 = vand.u32 %v4543, 4294901760
    %4545 = vmatmul.mubr.f32.gmra.mrb[0].mxu0 %v4544
    %v4546 = vpop.f32.mrb[0].mxu0
    %v4547 = vadd.f32 0.0, %v4546
    %v4548 = vpop.f32.mrb[0].mxu0
    %v4549 = vadd.f32 0.0, %v4548
    %4550 = vdwg.mxu0
    %v4551 = vand.u32 %v3908, 4294901760
    %v4552 = vsub.f32 %v3908, %v4551
    %v4553 = vand.u32 %v4552, 4294901760
    %v4554 = vsub.f32 %v4552, %v4553
    %v4555 = vand.u32 %v4554, 4294901760
    %4556 = vmatprep.subr.mxu0 %v4555
    %v4557 = vand.u32 %v3907, 4294901760
    %v4558 = vsub.f32 %v3907, %v4557
    %v4559 = vand.u32 %v4558, 4294901760
    %v4560 = vsub.f32 %v4558, %v4559
    %v4561 = vand.u32 %v4560, 4294901760
    %4562 = vmatpush1.msra.mxu0 %v4561
    %v4563 = vand.u32 %v3910, 4294901760
    %v4564 = vsub.f32 %v3910, %v4563
    %v4565 = vand.u32 %v4564, 4294901760
    %v4566 = vsub.f32 %v4564, %v4565
    %v4567 = vand.u32 %v4566, 4294901760
    %4568 = vmatprep.subr.mxu0 %v4567
    %v4569 = vand.u32 %v3909, 4294901760
    %v4570 = vsub.f32 %v3909, %v4569
    %v4571 = vand.u32 %v4570, 4294901760
    %v4572 = vsub.f32 %v4570, %v4571
    %v4573 = vand.u32 %v4572, 4294901760
    %4574 = vmatpush1.msra.mxu0 %v4573
    %4575 = vmatprep.subr.mxu0 0.0
    %4576 = vmatpush1.msra.mxu0 0.0
    %4577 = vmatprep.subr.mxu0 0.0
    %4578 = vmatpush1.msra.mxu0 0.0
    %4579 = vmatprep.subr.mxu0 0.0
    %4580 = vmatpush1.msra.mxu0 0.0
    %4581 = vmatprep.subr.mxu0 0.0
    %4582 = vmatpush1.msra.mxu0 0.0
    %4583 = vmatprep.subr.mxu0 0.0
    %4584 = vmatpush1.msra.mxu0 0.0
    %4585 = vmatprep.subr.mxu0 0.0
    %4586 = vmatpush1.msra.mxu0 0.0
    %4587 = vmatprep.subr.mxu0 0.0
    %4588 = vmatpush1.msra.mxu0 0.0
    %4589 = vmatprep.subr.mxu0 0.0
    %4590 = vmatpush1.msra.mxu0 0.0
    %4591 = vmatprep.subr.mxu0 0.0
    %4592 = vmatpush1.msra.mxu0 0.0
    %4593 = vmatprep.subr.mxu0 0.0
    %4594 = vmatpush1.msra.mxu0 0.0
    %4595 = vmatprep.subr.mxu0 0.0
    %4596 = vmatpush1.msra.mxu0 0.0
    %4597 = vmatprep.subr.mxu0 0.0
    %4598 = vmatpush1.msra.mxu0 0.0
    %4599 = vmatprep.subr.mxu0 0.0
    %4600 = vmatpush1.msra.mxu0 0.0
    %4601 = vmatprep.subr.mxu0 0.0
    %4602 = vmatpush1.msra.mxu0 0.0
    %4603 = vmatprep.subr.mxu0 0.0
    %4604 = vmatpush1.msra.mxu0 0.0
    %4605 = vmatprep.subr.mxu0 0.0
    %4606 = vmatpush1.msra.mxu0 0.0
    %4607 = vmatprep.subr.mxu0 0.0
    %4608 = vmatpush1.msra.mxu0 0.0
    %4609 = vmatprep.subr.mxu0 0.0
    %4610 = vmatpush1.msra.mxu0 0.0
    %4611 = vmatprep.subr.mxu0 0.0
    %4612 = vmatpush1.msra.mxu0 0.0
    %4613 = vmatprep.subr.mxu0 0.0
    %4614 = vmatpush1.msra.mxu0 0.0
    %4615 = vmatprep.subr.mxu0 0.0
    %4616 = vmatpush1.msra.mxu0 0.0
    %4617 = vmatprep.subr.mxu0 0.0
    %4618 = vmatpush1.msra.mxu0 0.0
    %4619 = vmatprep.subr.mxu0 0.0
    %4620 = vmatpush1.msra.mxu0 0.0
    %4621 = vmatprep.subr.mxu0 0.0
    %4622 = vmatpush1.msra.mxu0 0.0
    %4623 = vmatprep.subr.mxu0 0.0
    %4624 = vmatpush1.msra.mxu0 0.0
    %4625 = vmatprep.subr.mxu0 0.0
    %4626 = vmatpush1.msra.mxu0 0.0
    %4627 = vmatprep.subr.mxu0 0.0
    %4628 = vmatpush1.msra.mxu0 0.0
    %4629 = vmatprep.subr.mxu0 0.0
    %4630 = vmatpush1.msra.mxu0 0.0
    %4631 = vmatprep.subr.mxu0 0.0
    %4632 = vmatpush1.msra.mxu0 0.0
    %4633 = vmatprep.subr.mxu0 0.0
    %4634 = vmatpush1.msra.mxu0 0.0
    %4635 = vmatprep.mubr.f32.mxu0 0.0
    %v4636 = vand.u32 %v3915, 4294901760
    %4637 = vmatmul.mubr.f32.gmra.mrb[0].mxu0 %v4636
    %v4638 = vpop.f32.mrb[0].mxu0
    %v4639 = vadd.f32 %v4536, %v4638
    %v4640 = vpop.f32.mrb[0].mxu0
    %v4641 = vadd.f32 %v4538, %v4640
    %4642 = vmatprep.mubr.f32.mxu0 0.0
    %v4643 = vand.u32 %v3918, 4294901760
    %4644 = vmatmul.mubr.f32.gmra.mrb[0].mxu0 %v4643
    %v4645 = vpop.f32.mrb[0].mxu0
    %v4646 = vadd.f32 %v4547, %v4645
    %v4647 = vpop.f32.mrb[0].mxu0
    %v4648 = vadd.f32 %v4549, %v4647
    %4649 = vdwg.mxu0
    %v4650 = vand.u32 %v3908, 4294901760
    %v4651 = vsub.f32 %v3908, %v4650
    %4652 = vmatprep.subr.mxu0 %v4651
    %v4653 = vand.u32 %v3907, 4294901760
    %v4654 = vsub.f32 %v3907, %v4653
    %4655 = vmatpush1.msra.mxu0 %v4654
    %v4656 = vand.u32 %v3910, 4294901760
    %v4657 = vsub.f32 %v3910, %v4656
    %4658 = vmatprep.subr.mxu0 %v4657
    %v4659 = vand.u32 %v3909, 4294901760
    %v4660 = vsub.f32 %v3909, %v4659
    %4661 = vmatpush1.msra.mxu0 %v4660
    %4662 = vmatprep.subr.mxu0 0.0
    %4663 = vmatpush1.msra.mxu0 0.0
    %4664 = vmatprep.subr.mxu0 0.0
    %4665 = vmatpush1.msra.mxu0 0.0
    %4666 = vmatprep.subr.mxu0 0.0
    %4667 = vmatpush1.msra.mxu0 0.0
    %4668 = vmatprep.subr.mxu0 0.0
    %4669 = vmatpush1.msra.mxu0 0.0
    %4670 = vmatprep.subr.mxu0 0.0
    %4671 = vmatpush1.msra.mxu0 0.0
    %4672 = vmatprep.subr.mxu0 0.0
    %4673 = vmatpush1.msra.mxu0 0.0
    %4674 = vmatprep.subr.mxu0 0.0
    %4675 = vmatpush1.msra.mxu0 0.0
    %4676 = vmatprep.subr.mxu0 0.0
    %4677 = vmatpush1.msra.mxu0 0.0
    %4678 = vmatprep.subr.mxu0 0.0
    %4679 = vmatpush1.msra.mxu0 0.0
    %4680 = vmatprep.subr.mxu0 0.0
    %4681 = vmatpush1.msra.mxu0 0.0
    %4682 = vmatprep.subr.mxu0 0.0
    %4683 = vmatpush1.msra.mxu0 0.0
    %4684 = vmatprep.subr.mxu0 0.0
    %4685 = vmatpush1.msra.mxu0 0.0
    %4686 = vmatprep.subr.mxu0 0.0
    %4687 = vmatpush1.msra.mxu0 0.0
    %4688 = vmatprep.subr.mxu0 0.0
    %4689 = vmatpush1.msra.mxu0 0.0
    %4690 = vmatprep.subr.mxu0 0.0
    %4691 = vmatpush1.msra.mxu0 0.0
    %4692 = vmatprep.subr.mxu0 0.0
    %4693 = vmatpush1.msra.mxu0 0.0
    %4694 = vmatprep.subr.mxu0 0.0
    %4695 = vmatpush1.msra.mxu0 0.0
    %4696 = vmatprep.subr.mxu0 0.0
    %4697 = vmatpush1.msra.mxu0 0.0
    %4698 = vmatprep.subr.mxu0 0.0
    %4699 = vmatpush1.msra.mxu0 0.0
    %4700 = vmatprep.subr.mxu0 0.0
    %4701 = vmatpush1.msra.mxu0 0.0
    %4702 = vmatprep.subr.mxu0 0.0
    %4703 = vmatpush1.msra.mxu0 0.0
    %4704 = vmatprep.subr.mxu0 0.0
    %4705 = vmatpush1.msra.mxu0 0.0
    %4706 = vmatprep.subr.mxu0 0.0
    %4707 = vmatpush1.msra.mxu0 0.0
    %4708 = vmatprep.subr.mxu0 0.0
    %4709 = vmatpush1.msra.mxu0 0.0
    %4710 = vmatprep.subr.mxu0 0.0
    %4711 = vmatpush1.msra.mxu0 0.0
    %4712 = vmatprep.subr.mxu0 0.0
    %4713 = vmatpush1.msra.mxu0 0.0
    %4714 = vmatprep.subr.mxu0 0.0
    %4715 = vmatpush1.msra.mxu0 0.0
    %4716 = vmatprep.subr.mxu0 0.0
    %4717 = vmatpush1.msra.mxu0 0.0
    %4718 = vmatprep.subr.mxu0 0.0
    %4719 = vmatpush1.msra.mxu0 0.0
    %4720 = vmatprep.subr.mxu0 0.0
    %4721 = vmatpush1.msra.mxu0 0.0
    %4722 = vmatprep.mubr.f32.mxu0 0.0
    %v4723 = vand.u32 %v3915, 4294901760
    %v4724 = vsub.f32 %v3915, %v4723
    %4725 = vmatmul.mubr.f32.gmra.mrb[0].mxu0 %v4724
    %v4726 = vpop.f32.mrb[0].mxu0
    %v4727 = vadd.f32 %v4639, %v4726
    %v4728 = vpop.f32.mrb[0].mxu0
    %v4729 = vadd.f32 %v4641, %v4728
    %4730 = vmatprep.mubr.f32.mxu0 0.0
    %v4731 = vand.u32 %v3918, 4294901760
    %v4732 = vsub.f32 %v3918, %v4731
    %4733 = vmatmul.mubr.f32.gmra.mrb[0].mxu0 %v4732
    %v4734 = vpop.f32.mrb[0].mxu0
    %v4735 = vadd.f32 %v4646, %v4734
    %v4736 = vpop.f32.mrb[0].mxu0
    %v4737 = vadd.f32 %v4648, %v4736
    %4738 = vdwg.mxu0
    %v4739 = vand.u32 %v3908, 4294901760
    %4740 = vmatprep.subr.mxu0 %v4739
    %v4741 = vand.u32 %v3907, 4294901760
    %4742 = vmatpush1.msra.mxu0 %v4741
    %v4743 = vand.u32 %v3910, 4294901760
    %4744 = vmatprep.subr.mxu0 %v4743
    %v4745 = vand.u32 %v3909, 4294901760
    %4746 = vmatpush1.msra.mxu0 %v4745
    %4747 = vmatprep.subr.mxu0 0.0
    %4748 = vmatpush1.msra.mxu0 0.0
    %4749 = vmatprep.subr.mxu0 0.0
    %4750 = vmatpush1.msra.mxu0 0.0
    %4751 = vmatprep.subr.mxu0 0.0
    %4752 = vmatpush1.msra.mxu0 0.0
    %4753 = vmatprep.subr.mxu0 0.0
    %4754 = vmatpush1.msra.mxu0 0.0
    %4755 = vmatprep.subr.mxu0 0.0
    %4756 = vmatpush1.msra.mxu0 0.0
    %4757 = vmatprep.subr.mxu0 0.0
    %4758 = vmatpush1.msra.mxu0 0.0
    %4759 = vmatprep.subr.mxu0 0.0
    %4760 = vmatpush1.msra.mxu0 0.0
    %4761 = vmatprep.subr.mxu0 0.0
    %4762 = vmatpush1.msra.mxu0 0.0
    %4763 = vmatprep.subr.mxu0 0.0
    %4764 = vmatpush1.msra.mxu0 0.0
    %4765 = vmatprep.subr.mxu0 0.0
    %4766 = vmatpush1.msra.mxu0 0.0
    %4767 = vmatprep.subr.mxu0 0.0
    %4768 = vmatpush1.msra.mxu0 0.0
    %4769 = vmatprep.subr.mxu0 0.0
    %4770 = vmatpush1.msra.mxu0 0.0
    %4771 = vmatprep.subr.mxu0 0.0
    %4772 = vmatpush1.msra.mxu0 0.0
    %4773 = vmatprep.subr.mxu0 0.0
    %4774 = vmatpush1.msra.mxu0 0.0
    %4775 = vmatprep.subr.mxu0 0.0
    %4776 = vmatpush1.msra.mxu0 0.0
    %4777 = vmatprep.subr.mxu0 0.0
    %4778 = vmatpush1.msra.mxu0 0.0
    %4779 = vmatprep.subr.mxu0 0.0
    %4780 = vmatpush1.msra.mxu0 0.0
    %4781 = vmatprep.subr.mxu0 0.0
    %4782 = vmatpush1.msra.mxu0 0.0
    %4783 = vmatprep.subr.mxu0 0.0
    %4784 = vmatpush1.msra.mxu0 0.0
    %4785 = vmatprep.subr.mxu0 0.0
    %4786 = vmatpush1.msra.mxu0 0.0
    %4787 = vmatprep.subr.mxu0 0.0
    %4788 = vmatpush1.msra.mxu0 0.0
    %4789 = vmatprep.subr.mxu0 0.0
    %4790 = vmatpush1.msra.mxu0 0.0
    %4791 = vmatprep.subr.mxu0 0.0
    %4792 = vmatpush1.msra.mxu0 0.0
    %4793 = vmatprep.subr.mxu0 0.0
    %4794 = vmatpush1.msra.mxu0 0.0
    %4795 = vmatprep.subr.mxu0 0.0
    %4796 = vmatpush1.msra.mxu0 0.0
    %4797 = vmatprep.subr.mxu0 0.0
    %4798 = vmatpush1.msra.mxu0 0.0
    %4799 = vmatprep.subr.mxu0 0.0
    %4800 = vmatpush1.msra.mxu0 0.0
    %4801 = vmatprep.subr.mxu0 0.0
    %4802 = vmatpush1.msra.mxu0 0.0
    %4803 = vmatprep.subr.mxu0 0.0
    %4804 = vmatpush1.msra.mxu0 0.0
    %4805 = vmatprep.subr.mxu0 0.0
    %4806 = vmatpush1.msra.mxu0 0.0
    %4807 = vmatprep.mubr.f32.mxu0 0.0
    %v4808 = vand.u32 %v3915, 4294901760
    %v4809 = vsub.f32 %v3915, %v4808
    %v4810 = vand.u32 %v4809, 4294901760
    %4811 = vmatmul.mubr.f32.gmra.mrb[0].mxu0 %v4810
    %v4812 = vpop.f32.mrb[0].mxu0
    %v4813 = vadd.f32 %v4727, %v4812
    %v4814 = vpop.f32.mrb[0].mxu0
    %v4815 = vadd.f32 %v4729, %v4814
    %4816 = vmatprep.mubr.f32.mxu0 0.0
    %v4817 = vand.u32 %v3918, 4294901760
    %v4818 = vsub.f32 %v3918, %v4817
    %v4819 = vand.u32 %v4818, 4294901760
    %4820 = vmatmul.mubr.f32.gmra.mrb[0].mxu0 %v4819
    %v4821 = vpop.f32.mrb[0].mxu0
    %v4822 = vadd.f32 %v4735, %v4821
    %v4823 = vpop.f32.mrb[0].mxu0
    %v4824 = vadd.f32 %v4737, %v4823
    %4825 = vdwg.mxu0
    %v4826 = vand.u32 %v3908, 4294901760
    %v4827 = vsub.f32 %v3908, %v4826
    %v4828 = vand.u32 %v4827, 4294901760
    %4829 = vmatprep.subr.mxu0 %v4828
    %v4830 = vand.u32 %v3907, 4294901760
    %v4831 = vsub.f32 %v3907, %v4830
    %v4832 = vand.u32 %v4831, 4294901760
    %4833 = vmatpush1.msra.mxu0 %v4832
    %v4834 = vand.u32 %v3910, 4294901760
    %v4835 = vsub.f32 %v3910, %v4834
    %v4836 = vand.u32 %v4835, 4294901760
    %4837 = vmatprep.subr.mxu0 %v4836
    %v4838 = vand.u32 %v3909, 4294901760
    %v4839 = vsub.f32 %v3909, %v4838
    %v4840 = vand.u32 %v4839, 4294901760
    %4841 = vmatpush1.msra.mxu0 %v4840
    %4842 = vmatprep.subr.mxu0 0.0
    %4843 = vmatpush1.msra.mxu0 0.0
    %4844 = vmatprep.subr.mxu0 0.0
    %4845 = vmatpush1.msra.mxu0 0.0
    %4846 = vmatprep.subr.mxu0 0.0
    %4847 = vmatpush1.msra.mxu0 0.0
    %4848 = vmatprep.subr.mxu0 0.0
    %4849 = vmatpush1.msra.mxu0 0.0
    %4850 = vmatprep.subr.mxu0 0.0
    %4851 = vmatpush1.msra.mxu0 0.0
    %4852 = vmatprep.subr.mxu0 0.0
    %4853 = vmatpush1.msra.mxu0 0.0
    %4854 = vmatprep.subr.mxu0 0.0
    %4855 = vmatpush1.msra.mxu0 0.0
    %4856 = vmatprep.subr.mxu0 0.0
    %4857 = vmatpush1.msra.mxu0 0.0
    %4858 = vmatprep.subr.mxu0 0.0
    %4859 = vmatpush1.msra.mxu0 0.0
    %4860 = vmatprep.subr.mxu0 0.0
    %4861 = vmatpush1.msra.mxu0 0.0
    %4862 = vmatprep.subr.mxu0 0.0
    %4863 = vmatpush1.msra.mxu0 0.0
    %4864 = vmatprep.subr.mxu0 0.0
    %4865 = vmatpush1.msra.mxu0 0.0
    %4866 = vmatprep.subr.mxu0 0.0
    %4867 = vmatpush1.msra.mxu0 0.0
    %4868 = vmatprep.subr.mxu0 0.0
    %4869 = vmatpush1.msra.mxu0 0.0
    %4870 = vmatprep.subr.mxu0 0.0
    %4871 = vmatpush1.msra.mxu0 0.0
    %4872 = vmatprep.subr.mxu0 0.0
    %4873 = vmatpush1.msra.mxu0 0.0
    %4874 = vmatprep.subr.mxu0 0.0
    %4875 = vmatpush1.msra.mxu0 0.0
    %4876 = vmatprep.subr.mxu0 0.0
    %4877 = vmatpush1.msra.mxu0 0.0
    %4878 = vmatprep.subr.mxu0 0.0
    %4879 = vmatpush1.msra.mxu0 0.0
    %4880 = vmatprep.subr.mxu0 0.0
    %4881 = vmatpush1.msra.mxu0 0.0
    %4882 = vmatprep.subr.mxu0 0.0
    %4883 = vmatpush1.msra.mxu0 0.0
    %4884 = vmatprep.subr.mxu0 0.0
    %4885 = vmatpush1.msra.mxu0 0.0
    %4886 = vmatprep.subr.mxu0 0.0
    %4887 = vmatpush1.msra.mxu0 0.0
    %4888 = vmatprep.subr.mxu0 0.0
    %4889 = vmatpush1.msra.mxu0 0.0
    %4890 = vmatprep.subr.mxu0 0.0
    %4891 = vmatpush1.msra.mxu0 0.0
    %4892 = vmatprep.subr.mxu0 0.0
    %4893 = vmatpush1.msra.mxu0 0.0
    %4894 = vmatprep.subr.mxu0 0.0
    %4895 = vmatpush1.msra.mxu0 0.0
    %4896 = vmatprep.subr.mxu0 0.0
    %4897 = vmatpush1.msra.mxu0 0.0
    %4898 = vmatprep.subr.mxu0 0.0
    %4899 = vmatpush1.msra.mxu0 0.0
    %4900 = vmatprep.subr.mxu0 0.0
    %4901 = vmatpush1.msra.mxu0 0.0
    %4902 = vmatprep.mubr.f32.mxu0 0.0
    %v4903 = vand.u32 %v3915, 4294901760
    %4904 = vmatmul.mubr.f32.gmra.mrb[0].mxu0 %v4903
    %v4905 = vpop.f32.mrb[0].mxu0
    %v4906 = vadd.f32 %v4813, %v4905
    %v4907 = vpop.f32.mrb[0].mxu0
    %v4908 = vadd.f32 %v4815, %v4907
    %4909 = vmatprep.mubr.f32.mxu0 0.0
    %v4910 = vand.u32 %v3918, 4294901760
    %4911 = vmatmul.mubr.f32.gmra.mrb[0].mxu0 %v4910
    %v4912 = vpop.f32.mrb[0].mxu0
    %v4913 = vadd.f32 %v4822, %v4912
    %v4914 = vpop.f32.mrb[0].mxu0
    %v4915 = vadd.f32 %v4824, %v4914
    %4916 = vdwg.mxu0
    %v4917 = vand.u32 %v3908, 4294901760
    %4918 = vmatprep.subr.mxu0 %v4917
    %v4919 = vand.u32 %v3907, 4294901760
    %4920 = vmatpush1.msra.mxu0 %v4919
    %v4921 = vand.u32 %v3910, 4294901760
    %4922 = vmatprep.subr.mxu0 %v4921
    %v4923 = vand.u32 %v3909, 4294901760
    %4924 = vmatpush1.msra.mxu0 %v4923
    %4925 = vmatprep.subr.mxu0 0.0
    %4926 = vmatpush1.msra.mxu0 0.0
    %4927 = vmatprep.subr.mxu0 0.0
    %4928 = vmatpush1.msra.mxu0 0.0
    %4929 = vmatprep.subr.mxu0 0.0
    %4930 = vmatpush1.msra.mxu0 0.0
    %4931 = vmatprep.subr.mxu0 0.0
    %4932 = vmatpush1.msra.mxu0 0.0
    %4933 = vmatprep.subr.mxu0 0.0
    %4934 = vmatpush1.msra.mxu0 0.0
    %4935 = vmatprep.subr.mxu0 0.0
    %4936 = vmatpush1.msra.mxu0 0.0
    %4937 = vmatprep.subr.mxu0 0.0
    %4938 = vmatpush1.msra.mxu0 0.0
    %4939 = vmatprep.subr.mxu0 0.0
    %4940 = vmatpush1.msra.mxu0 0.0
    %4941 = vmatprep.subr.mxu0 0.0
    %4942 = vmatpush1.msra.mxu0 0.0
    %4943 = vmatprep.subr.mxu0 0.0
    %4944 = vmatpush1.msra.mxu0 0.0
    %4945 = vmatprep.subr.mxu0 0.0
    %4946 = vmatpush1.msra.mxu0 0.0
    %4947 = vmatprep.subr.mxu0 0.0
    %4948 = vmatpush1.msra.mxu0 0.0
    %4949 = vmatprep.subr.mxu0 0.0
    %4950 = vmatpush1.msra.mxu0 0.0
    %4951 = vmatprep.subr.mxu0 0.0
    %4952 = vmatpush1.msra.mxu0 0.0
    %4953 = vmatprep.subr.mxu0 0.0
    %4954 = vmatpush1.msra.mxu0 0.0
    %4955 = vmatprep.subr.mxu0 0.0
    %4956 = vmatpush1.msra.mxu0 0.0
    %4957 = vmatprep.subr.mxu0 0.0
    %4958 = vmatpush1.msra.mxu0 0.0
    %4959 = vmatprep.subr.mxu0 0.0
    %4960 = vmatpush1.msra.mxu0 0.0
    %4961 = vmatprep.subr.mxu0 0.0
    %4962 = vmatpush1.msra.mxu0 0.0
    %4963 = vmatprep.subr.mxu0 0.0
    %4964 = vmatpush1.msra.mxu0 0.0
    %4965 = vmatprep.subr.mxu0 0.0
    %4966 = vmatpush1.msra.mxu0 0.0
    %4967 = vmatprep.subr.mxu0 0.0
    %4968 = vmatpush1.msra.mxu0 0.0
    %4969 = vmatprep.subr.mxu0 0.0
    %4970 = vmatpush1.msra.mxu0 0.0
    %4971 = vmatprep.subr.mxu0 0.0
    %4972 = vmatpush1.msra.mxu0 0.0
    %4973 = vmatprep.subr.mxu0 0.0
    %4974 = vmatpush1.msra.mxu0 0.0
    %4975 = vmatprep.subr.mxu0 0.0
    %4976 = vmatpush1.msra.mxu0 0.0
    %4977 = vmatprep.subr.mxu0 0.0
    %4978 = vmatpush1.msra.mxu0 0.0
    %4979 = vmatprep.subr.mxu0 0.0
    %4980 = vmatpush1.msra.mxu0 0.0
    %4981 = vmatprep.subr.mxu0 0.0
    %4982 = vmatpush1.msra.mxu0 0.0
    %4983 = vmatprep.subr.mxu0 0.0
    %4984 = vmatpush1.msra.mxu0 0.0
    %4985 = vmatprep.mubr.f32.mxu0 0.0
    %v4986 = vand.u32 %v3915, 4294901760
    %4987 = vmatmul.mubr.f32.gmra.mrb[0].mxu0 %v4986
    %v4988 = vpop.f32.mrb[0].mxu0
    %v4989 = vadd.f32 %v4906, %v4988
    %v4990 = vpop.f32.mrb[0].mxu0
    %v4991 = vadd.f32 %v4908, %v4990
    %4992 = vmatprep.mubr.f32.mxu0 0.0
    %v4993 = vand.u32 %v3918, 4294901760
    %4994 = vmatmul.mubr.f32.gmra.mrb[0].mxu0 %v4993
    %v4995 = vpop.f32.mrb[0].mxu0
    %v4996 = vadd.f32 %v4913, %v4995
    %v4997 = vpop.f32.mrb[0].mxu0
    %v4998 = vadd.f32 %v4915, %v4997
    %4999 = vdwg.mxu0
    %v5000 = vmul.f32 %v4449, %v3177
    %v5001 = vmul.f32 %v4451, %v3280
    %v5002 = vmul.f32 %v4456, %v3383
    %v5003 = vmul.f32 %v4458, %v3486
    %v5004 = vmul.f32 %v4989, %v3590
    %v5005 = vmul.f32 %v4991, %v3694
    %v5006 = vmul.f32 %v4996, %v3798
    %v5007 = vmul.f32 %v4998, %v3902
    %v5008 = vsub.f32 %v5000, %v5004
    %v5009 = vsub.f32 %v5001, %v5005
    %v5010 = vsub.f32 %v5002, %v5006
    %v5011 = vsub.f32 %v5003, %v5007
    %v5012 = vmul.f32 %v4449, %v3590
    %v5013 = vmul.f32 %v4451, %v3694
    %v5014 = vmul.f32 %v4456, %v3798
    %v5015 = vmul.f32 %v4458, %v3902
    %v5016 = vmul.f32 %v4989, %v3177
    %v5017 = vmul.f32 %v4991, %v3280
    %v5018 = vmul.f32 %v4996, %v3383
    %v5019 = vmul.f32 %v4998, %v3486
    %v5020 = vadd.f32 %v5012, %v5016
    %v5021 = vadd.f32 %v5013, %v5017
    %v5022 = vadd.f32 %v5014, %v5018
    %v5023 = vadd.f32 %v5015, %v5019
    %v5024 = vmul.f32 %v5009, %v5008
    %v5025 = vmul.f32 %v5011, %v5010
    %v5026 = vmul.f32 %v5021, %v5020
    %v5027 = vmul.f32 %v5023, %v5022
    %v5028 = vadd.f32 %v5024, %v5026
    %v5029 = vadd.f32 %v5025, %v5027
    %v5030 = vadd.f32 %v5028, %v5029
    %v5031 = vrot.slane %v5030, 4
    %v5032 = vadd.f32 %v5030, %v5031
    %v5033 = vrot.slane %v5032, 2
    %v5034 = vadd.f32 %v5032, %v5033
    %v5035 = vrot.slane %v5034, 1
    %v5036 = vadd.f32 %v5034, %v5035
    %v5037 = vmul.f32 %v5009, %v5020
    %v5038 = vmul.f32 %v5011, %v5022
    %v5039 = vmul.f32 %v5021, %v5008
    %v5040 = vmul.f32 %v5023, %v5010
    %v5041 = vsub.f32 %v5037, %v5039
    %v5042 = vsub.f32 %v5038, %v5040
    %v5043 = vadd.f32 %v5041, %v5042
    %v5044 = vrot.slane %v5043, 4
    %v5045 = vadd.f32 %v5043, %v5044
    %v5046 = vrot.slane %v5045, 2
    %v5047 = vadd.f32 %v5045, %v5046
    %v5048 = vrot.slane %v5047, 1
    %v5049 = vadd.f32 %v5047, %v5048
    %v5050 = vmul.f32 %v5036, %v5036
    %v5051 = vmul.f32 %v5049, %v5049
    %v5052 = vadd.f32 %v5050, %v5051
    %5053 = vst [vmem:[%s12] sm:$0x1] %v5052
    // Predicated region
    $region70: #{_lambda_.1} parent=1 // pred_check
      _
    $region71: #{_lambda_.1} parent=1 // pred_check_branch
      %5055 = sbr.rel (0) target = $region73
    $region72: #{_lambda_.1} parent=1 // pred_region
      _
    $region73: #{_lambda_.1} parent=1 // pred_fallthru
      _
    // Predicated region
    $region74: #{_lambda_.1} parent=1 // pred_check
      _
    $region75: #{_lambda_.1} parent=1 // pred_check_branch
      %5057 = sbr.rel (0) target = $region77
    $region76: #{_lambda_.1} parent=1 // pred_region
      _
    $region77: #{_lambda_.1} parent=1 // pred_fallthru
      _
    %5058 = vsyncpa [#allocation3], 1
    %5059 = vsyncpa [#allocation5], 1
    %5060 = vsyncpa [#allocation8], 1

</llo_original>
